<compile_context>
chip_gen: v6e
topology: v6e:2x2x1
jax: 0.10.0
libtpu: 0.0.40
codegen_flags: <defaults>
</compile_context>

<pallas_src>
import math

import jax
import jax.numpy as jnp
from jax.experimental import pallas as pl
from jax.experimental.pallas import tpu as pltpu

# ---- config (mirrors the `setting` object of the PyTorch module) ----
NUM_RNK = 3            # setting.num_rnk
HID_DIM = 32           # setting.one3_hid_dim
N_HEAD = 4             # setting.one3_attn_n_head
HEAD_DIM = HID_DIM // N_HEAD
DIM_FF = 64            # setting.one3_dim_feedforward
N_LAYER = 2            # setting.one3_tf_n_layer
USE_LAYERNORM = True   # setting.one3_coordi_sum_layernorm
LN_EPS = 1e-5

BATCH = 2
TURN_LEN = 8
SEQ_LEN = TURN_LEN + 2           # start + dlgs + end
SEQ_PAD = 16                     # padded to a sublane multiple
ROWS = BATCH * SEQ_PAD           # 32 flattened rows
LANES = 128

# 128-lane-aligned packed weight slab layout: [Wqkv | Wo | W1], each padded to 128 lanes
WQKV_OFF, WO_OFF, W1_OFF, W32_COLS = 0, 128, 256, 384
assert 3 * HID_DIM <= 128 and HID_DIM <= 128 and DIM_FF <= 128

# rows inside the packed per-layer / global vector slabs
VR_BQKV, VR_BO, VR_B1, VR_B2, VR_LN1G, VR_LN1B, VR_LN2G, VR_LN2B = range(8)
GR_LNG, GR_LNB, GR_POOLB = range(3)


# ------------------------------------------------------------------ kernel

def _layer_norm(x, g, b):
    mu = jnp.mean(x, axis=-1, keepdims=True)
    var = jnp.mean(jnp.square(x - mu), axis=-1, keepdims=True)
    return (x - mu) * jax.lax.rsqrt(var + LN_EPS) * g + b


def _mm(a, w_bf16):
    # activation cast to bf16 at the MXU boundary; weights are already bf16; f32 accumulation.
    return jnp.dot(a.astype(jnp.bfloat16), w_bf16, preferred_element_type=jnp.float32)


def fused_forward_kernel(x_ref, mask_ref, w32_ref, w2_ref, vec_ref, gvec_ref,
                         pw_ref, ox_ref, op_ref):
    H, FF, S, DH = HID_DIM, DIM_FF, SEQ_PAD, HEAD_DIM
    x = x_ref[...]                       # (ROWS, H) f32, batch-flattened sequences
    gv = gvec_ref[...]                   # (8, 128) f32: input-LN g/b, pooler bias
    mask = mask_ref[...]                 # (N_HEAD*BATCH, S, S) additive mask, pre-broadcast

    if USE_LAYERNORM:
        x = _layer_norm(x, gv[GR_LNG:GR_LNG + 1, :H], gv[GR_LNB:GR_LNB + 1, :H])
    # dropout: eval-mode identity

    for l in range(N_LAYER):             # static layer loop; everything VMEM-resident
        w32 = w32_ref[l]                 # (H, 384) bf16, 128-lane-aligned sub-blocks
        wqkv = w32[:, WQKV_OFF:WQKV_OFF + 3 * H]
        wo = w32[:, WO_OFF:WO_OFF + H]
        w1 = w32[:, W1_OFF:W1_OFF + FF]
        w2 = w2_ref[l]                   # (FF, H) bf16
        vec = vec_ref[l]                 # (8, 128) f32 packed biases / LN params
        b_qkv = vec[VR_BQKV:VR_BQKV + 1, :3 * H]
        bo = vec[VR_BO:VR_BO + 1, :H]
        b1 = vec[VR_B1:VR_B1 + 1, :FF]
        b2 = vec[VR_B2:VR_B2 + 1, :H]
        g1 = vec[VR_LN1G:VR_LN1G + 1, :H]
        be1 = vec[VR_LN1B:VR_LN1B + 1, :H]
        g2 = vec[VR_LN2G:VR_LN2G + 1, :H]
        be2 = vec[VR_LN2B:VR_LN2B + 1, :H]

        # fused QKV projection over all rows at once (1/sqrt(dh) folded into Wq/bq at pack time)
        qkv = _mm(x, wqkv) + b_qkv                       # (ROWS, 3H) f32
        qkv3 = qkv.reshape(BATCH, S, 3 * H)

        # merge heads into the batch dim: (N_HEAD*BATCH, S, DH), index = h*BATCH + b
        def split_heads(off):
            return jnp.concatenate(
                [qkv3[:, :, off + h * DH: off + (h + 1) * DH] for h in range(N_HEAD)],
                axis=0)
        qh = split_heads(0)
        kh = split_heads(H)
        vh = split_heads(2 * H)

        # ONE scores einsum + ONE softmax pipeline + ONE PV einsum per layer
        s = jnp.einsum('bqd,bkd->bqk',
                       qh.astype(jnp.bfloat16), kh.astype(jnp.bfloat16),
                       preferred_element_type=jnp.float32)          # (NH*B, S, S) f32
        s = s + mask                                                # f32 mask add before exp
        s = s - jnp.max(s, axis=-1, keepdims=True)
        p = jnp.exp(s)
        p = p * pl.reciprocal(jnp.sum(p, axis=-1, keepdims=True), approx=True)
        head = jnp.einsum('bqk,bkd->bqd',
                          p.astype(jnp.bfloat16), vh.astype(jnp.bfloat16),
                          preferred_element_type=jnp.float32)       # (NH*B, S, DH)

        # merge heads back along lanes and apply the full Wo with one matmul
        attn_in = jnp.concatenate(
            [head[h * BATCH:(h + 1) * BATCH].reshape(ROWS, DH) for h in range(N_HEAD)],
            axis=-1)                                                # (ROWS, H)
        attn = _mm(attn_in, wo) + bo

        # post-norm residual blocks (nn.TransformerEncoderLayer default, dropout = identity)
        y = _layer_norm(x + attn, g1, be1)
        f = jnp.maximum(_mm(y, w1) + b1, 0.0)
        f = _mm(f, w2) + b2
        x = _layer_norm(y + f, g2, be2)

    # sequence output: tiny (4 KiB) -> store the slab directly, slice padding in the wrapper
    ox_ref[...] = x

    # BERT-style tanh pooler applied to ALL rows (same single MXU pass); wrapper picks the
    # start-token rows. Extra tanh rows are negligible EUP filler.
    op_ref[...] = jnp.tanh(_mm(x, pw_ref[...]) + gv[GR_POOLB:GR_POOLB + 1, :H])


# ------------------------------------------------------------------ wrappers

def fused_forward(x_flat, mask_merged, w32_all, w2_all, vec_all, gvec, pooler_w):
    vmem = pl.BlockSpec(memory_space=pltpu.MemorySpace.VMEM)
    call = pl.pallas_call(
        fused_forward_kernel,
        out_shape=(jax.ShapeDtypeStruct((ROWS, HID_DIM), jnp.float32),
                   jax.ShapeDtypeStruct((ROWS, HID_DIM), jnp.float32)),
        in_specs=[vmem] * 7,
        out_specs=(vmem, vmem),
    )
    return call(x_flat, mask_merged, w32_all, w2_all, vec_all, gvec, pooler_w)


def sinusoidal_pe(max_len, dim):
    pos = jnp.arange(max_len, dtype=jnp.float32)[:, None]
    div = jnp.exp(jnp.arange(0, dim, 2, dtype=jnp.float32) * (-math.log(10000.0) / dim))
    pe = jnp.zeros((max_len, dim), jnp.float32)
    pe = pe.at[:, 0::2].set(jnp.sin(pos * div))
    pe = pe.at[:, 1::2].set(jnp.cos(pos * div))
    return pe


def pack_params(p):
    """Pack the small per-layer tensors into a few contiguous slabs (done once)."""
    scale = jnp.float32(1.0 / math.sqrt(HEAD_DIM))

    def pad128_row(v):
        v = v.reshape(1, -1)
        return jnp.pad(v, ((0, 0), (0, LANES - v.shape[1])))

    def pad_cols(w, cols):
        return jnp.pad(w, ((0, 0), (0, cols - w.shape[1])))

    w32, w2, vec = [], [], []
    for lp in p["layers"]:
        # 128-lane-aligned slab: [Wq*scale|Wk|Wv pad->128 | Wo pad->128 | W1 pad->128]
        wqkv = jnp.concatenate([lp["wq"] * scale, lp["wk"], lp["wv"]], axis=1)   # (H, 3H)
        w32.append(jnp.concatenate(
            [pad_cols(wqkv, 128), pad_cols(lp["wo"], 128), pad_cols(lp["w1"], 128)],
            axis=1))                                                             # (H, 384)
        w2.append(lp["w2"])                                                      # (FF, H)
        vec.append(jnp.concatenate([
            pad128_row(jnp.concatenate([lp["bq"] * scale, lp["bk"], lp["bv"]], axis=1)),
            pad128_row(lp["bo"]), pad128_row(lp["b1"]), pad128_row(lp["b2"]),
            pad128_row(lp["ln1_g"]), pad128_row(lp["ln1_b"]),
            pad128_row(lp["ln2_g"]), pad128_row(lp["ln2_b"])], axis=0))          # (8, 128) f32
    gvec = jnp.concatenate(
        [pad128_row(p["ln_in_g"]), pad128_row(p["ln_in_b"]), pad128_row(p["pooler_b"]),
         jnp.zeros((5, LANES), jnp.float32)], axis=0)                            # (8, 128) f32
    return {
        "w32_all": jnp.stack(w32).astype(jnp.bfloat16),   # pre-cast weights to bf16 once
        "w2_all": jnp.stack(w2).astype(jnp.bfloat16),
        "vec_all": jnp.stack(vec),                        # biases / LN params stay f32
        "gvec": gvec,
        "pooler_w": p["pooler_w"].astype(jnp.bfloat16),
        "start_end_emb": p["start_end_emb"],
    }


def coordi_summarizer_forward(packed, dlgs, dlgs_turn_mask):
    batch, turn, hid = dlgs.shape

    # make_inputs: PE -> [start] + dlgs + [end], padded to SEQ_PAD rows
    pe = sinusoidal_pe(512, hid)[:turn]
    dlgs = dlgs + pe[None, :, :]
    start = jnp.broadcast_to(packed["start_end_emb"][0][None, None, :], (batch, 1, hid))
    end = jnp.broadcast_to(packed["start_end_emb"][1][None, None, :], (batch, 1, hid))
    seq = jnp.concatenate([start, dlgs, end], axis=1)                    # (batch, SEQ_LEN, H)
    pad = jnp.zeros((batch, SEQ_PAD - SEQ_LEN, hid), jnp.float32)
    x_flat = jnp.concatenate([seq, pad], axis=1).reshape(batch * SEQ_PAD, hid)

    # make_mask: additive key-padding mask; pad rows are also masked out.  Pre-broadcast to
    # the merged-head score shape (N_HEAD*BATCH, S, S) so the kernel does no broadcasting.
    key_pad = jnp.concatenate(
        [jnp.zeros((batch, 1), jnp.float32),
         dlgs_turn_mask.astype(jnp.float32),
         jnp.zeros((batch, 1), jnp.float32),
         jnp.ones((batch, SEQ_PAD - SEQ_LEN), jnp.float32)], axis=1)     # (batch, SEQ_PAD)
    mask_add = key_pad * jnp.float32(-1e9)
    mask_full = jnp.broadcast_to(mask_add[:, None, :], (batch, SEQ_PAD, SEQ_PAD))
    mask_merged = jnp.tile(mask_full, (N_HEAD, 1, 1))                    # (NH*B, S, S)

    out_seq, pooled_all = fused_forward(
        x_flat, mask_merged, packed["w32_all"], packed["w2_all"],
        packed["vec_all"], packed["gvec"], packed["pooler_w"])

    # undo the sequence padding; pick the start-token row for the pooler output
    x = out_seq.reshape(batch, SEQ_PAD, hid)[:, :SEQ_LEN, :]
    pooled = pooled_all.reshape(batch, SEQ_PAD, hid)[:, 0, :]

    # In the reference module, inputs and masks are identical for every rank copy
    # (repeat over num_rnk), so all rank outputs are identical: compute once, broadcast.
    output = jnp.broadcast_to(x[:, None], (batch, NUM_RNK, SEQ_LEN, hid))
    pooler_output = jnp.broadcast_to(pooled[:, None], (batch, NUM_RNK, hid))
    return output, pooler_output


def init_params(key):
    ks = jax.random.split(key, 2 + N_LAYER)

    def nrm(k, shape, scale=0.02):
        return (scale * jax.random.normal(k, shape)).astype(jnp.float32)

    params = {
        "start_end_emb": nrm(ks[0], (2, HID_DIM)),
        "ln_in_g": jnp.ones((1, HID_DIM), jnp.float32),
        "ln_in_b": jnp.zeros((1, HID_DIM), jnp.float32),
        "pooler_w": nrm(ks[1], (HID_DIM, HID_DIM)),
        "pooler_b": jnp.zeros((1, HID_DIM), jnp.float32),
        "layers": [],
    }
    for l in range(N_LAYER):
        lk = jax.random.split(ks[2 + l], 6)
        params["layers"].append({
            "wq": nrm(lk[0], (HID_DIM, HID_DIM)),
            "wk": nrm(lk[1], (HID_DIM, HID_DIM)),
            "wv": nrm(lk[2], (HID_DIM, HID_DIM)),
            "bq": jnp.zeros((1, HID_DIM), jnp.float32),
            "bk": jnp.zeros((1, HID_DIM), jnp.float32),
            "bv": jnp.zeros((1, HID_DIM), jnp.float32),
            "wo": nrm(lk[3], (HID_DIM, HID_DIM)),
            "bo": jnp.zeros((1, HID_DIM), jnp.float32),
            "w1": nrm(lk[4], (HID_DIM, DIM_FF)),
            "b1": jnp.zeros((1, DIM_FF), jnp.float32),
            "w2": nrm(lk[5], (DIM_FF, HID_DIM)),
            "b2": jnp.zeros((1, HID_DIM), jnp.float32),
            "ln1_g": jnp.ones((1, HID_DIM), jnp.float32),
            "ln1_b": jnp.zeros((1, HID_DIM), jnp.float32),
            "ln2_g": jnp.ones((1, HID_DIM), jnp.float32),
            "ln2_b": jnp.zeros((1, HID_DIM), jnp.float32),
        })
    return params


if __name__ == "__main__":
    key = jax.random.PRNGKey(0)
    k_data, k_param = jax.random.split(key)
    dlgs = jax.random.normal(k_data, (BATCH, TURN_LEN, HID_DIM), jnp.float32)
    # padding mask: 1.0 = padded turn (ignored as attention key)
    dlgs_turn_mask = jnp.zeros((BATCH, TURN_LEN), jnp.float32).at[1, 6:].set(1.0)

    params = init_params(k_param)
    packed = pack_params(params)

    fwd = jax.jit(coordi_summarizer_forward)
    output, pooler_output = fwd(packed, dlgs, dlgs_turn_mask)
    jax.block_until_ready((output, pooler_output))

    assert output.shape == (BATCH, NUM_RNK, SEQ_LEN, HID_DIM)
    assert pooler_output.shape == (BATCH, NUM_RNK, HID_DIM)
    assert bool(jnp.all(jnp.isfinite(output))) and bool(jnp.all(jnp.isfinite(pooler_output)))
    print("KERNEL_OK")
</pallas_src>

<mosaic_0001>
module attributes {stable_mosaic.version = 11 : i64} {
  func.func @fused_forward_kernel(%arg0: memref<32x32xf32, #tpu.memory_space<vmem>>, %arg1: memref<8x16x16xf32, #tpu.memory_space<vmem>>, %arg2: memref<2x32x384xbf16, #tpu.memory_space<vmem>>, %arg3: memref<2x64x32xbf16, #tpu.memory_space<vmem>>, %arg4: memref<2x8x128xf32, #tpu.memory_space<vmem>>, %arg5: memref<8x128xf32, #tpu.memory_space<vmem>>, %arg6: memref<32x32xbf16, #tpu.memory_space<vmem>>, %arg7: memref<32x32xf32, #tpu.memory_space<vmem>>, %arg8: memref<32x32xf32, #tpu.memory_space<vmem>>) attributes {dimension_semantics = [], scalar_prefetch = 0 : i64, scratch_operands = 0 : i64, tpu.core_type = #tpu.core_type<tc>} {
    %c0 = arith.constant 0 : index
    %c0_0 = arith.constant 0 : index
    %0 = vector.load %arg0[%c0, %c0_0] : memref<32x32xf32, #tpu.memory_space<vmem>>, vector<32x32xf32>
    %c0_1 = arith.constant 0 : index
    %c0_2 = arith.constant 0 : index
    %1 = vector.load %arg5[%c0_1, %c0_2] : memref<8x128xf32, #tpu.memory_space<vmem>>, vector<8x128xf32>
    %c0_3 = arith.constant 0 : index
    %c0_4 = arith.constant 0 : index
    %c0_5 = arith.constant 0 : index
    %2 = vector.load %arg1[%c0_3, %c0_4, %c0_5] : memref<8x16x16xf32, #tpu.memory_space<vmem>>, vector<8x16x16xf32>
    %3 = vector.extract_strided_slice %1 {offsets = [0, 0], sizes = [1, 32], strides = [1, 1]} : vector<8x128xf32> to vector<1x32xf32>
    %4 = vector.extract_strided_slice %1 {offsets = [1, 0], sizes = [1, 32], strides = [1, 1]} : vector<8x128xf32> to vector<1x32xf32>
    %cst = arith.constant dense<0.000000e+00> : vector<32xf32>
    %5 = vector.multi_reduction <add>, %0, %cst [1] : vector<32x32xf32> to vector<32xf32>
    %6 = vector.shape_cast %5 : vector<32xf32> to vector<32x1xf32>
    %cst_6 = arith.constant 3.200000e+01 : f32
    %7 = vector.broadcast %cst_6 : f32 to vector<32x1xf32>
    %8 = arith.divf %6, %7 : vector<32x1xf32>
    %9 = vector.broadcast %8 : vector<32x1xf32> to vector<32x32xf32>
    %10 = arith.subf %0, %9 : vector<32x32xf32>
    %11 = arith.mulf %10, %10 : vector<32x32xf32>
    %cst_7 = arith.constant dense<0.000000e+00> : vector<32xf32>
    %12 = vector.multi_reduction <add>, %11, %cst_7 [1] : vector<32x32xf32> to vector<32xf32>
    %13 = vector.shape_cast %12 : vector<32xf32> to vector<32x1xf32>
    %cst_8 = arith.constant 3.200000e+01 : f32
    %14 = vector.broadcast %cst_8 : f32 to vector<32x1xf32>
    %15 = arith.divf %13, %14 : vector<32x1xf32>
    %16 = vector.broadcast %8 : vector<32x1xf32> to vector<32x32xf32>
    %17 = arith.subf %0, %16 : vector<32x32xf32>
    %cst_9 = arith.constant 9.99999974E-6 : f32
    %18 = vector.broadcast %cst_9 : f32 to vector<32x1xf32>
    %19 = arith.addf %15, %18 : vector<32x1xf32>
    %20 = math.rsqrt %19 : vector<32x1xf32>
    %21 = vector.broadcast %20 : vector<32x1xf32> to vector<32x32xf32>
    %22 = arith.mulf %17, %21 : vector<32x32xf32>
    %23 = vector.broadcast %3 : vector<1x32xf32> to vector<32x32xf32>
    %24 = arith.mulf %22, %23 : vector<32x32xf32>
    %25 = vector.broadcast %4 : vector<1x32xf32> to vector<32x32xf32>
    %26 = arith.addf %24, %25 : vector<32x32xf32>
    %c0_10 = arith.constant 0 : index
    %c0_11 = arith.constant 0 : index
    %c0_12 = arith.constant 0 : index
    %27 = vector.load %arg2[%c0_10, %c0_11, %c0_12] : memref<2x32x384xbf16, #tpu.memory_space<vmem>>, vector<1x32x384xbf16>
    %28 = vector.shape_cast %27 : vector<1x32x384xbf16> to vector<32x384xbf16>
    %29 = vector.extract_strided_slice %28 {offsets = [0, 0], sizes = [32, 96], strides = [1, 1]} : vector<32x384xbf16> to vector<32x96xbf16>
    %30 = vector.extract_strided_slice %28 {offsets = [0, 128], sizes = [32, 32], strides = [1, 1]} : vector<32x384xbf16> to vector<32x32xbf16>
    %31 = vector.extract_strided_slice %28 {offsets = [0, 256], sizes = [32, 64], strides = [1, 1]} : vector<32x384xbf16> to vector<32x64xbf16>
    %c0_13 = arith.constant 0 : index
    %c0_14 = arith.constant 0 : index
    %c0_15 = arith.constant 0 : index
    %32 = vector.load %arg3[%c0_13, %c0_14, %c0_15] : memref<2x64x32xbf16, #tpu.memory_space<vmem>>, vector<1x64x32xbf16>
    %33 = vector.shape_cast %32 : vector<1x64x32xbf16> to vector<64x32xbf16>
    %c0_16 = arith.constant 0 : index
    %c0_17 = arith.constant 0 : index
    %c0_18 = arith.constant 0 : index
    %34 = vector.load %arg4[%c0_16, %c0_17, %c0_18] : memref<2x8x128xf32, #tpu.memory_space<vmem>>, vector<1x8x128xf32>
    %35 = vector.shape_cast %34 : vector<1x8x128xf32> to vector<8x128xf32>
    %36 = vector.extract_strided_slice %35 {offsets = [0, 0], sizes = [1, 96], strides = [1, 1]} : vector<8x128xf32> to vector<1x96xf32>
    %37 = vector.extract_strided_slice %35 {offsets = [1, 0], sizes = [1, 32], strides = [1, 1]} : vector<8x128xf32> to vector<1x32xf32>
    %38 = vector.extract_strided_slice %35 {offsets = [2, 0], sizes = [1, 64], strides = [1, 1]} : vector<8x128xf32> to vector<1x64xf32>
    %39 = vector.extract_strided_slice %35 {offsets = [3, 0], sizes = [1, 32], strides = [1, 1]} : vector<8x128xf32> to vector<1x32xf32>
    %40 = vector.extract_strided_slice %35 {offsets = [4, 0], sizes = [1, 32], strides = [1, 1]} : vector<8x128xf32> to vector<1x32xf32>
    %41 = vector.extract_strided_slice %35 {offsets = [5, 0], sizes = [1, 32], strides = [1, 1]} : vector<8x128xf32> to vector<1x32xf32>
    %42 = vector.extract_strided_slice %35 {offsets = [6, 0], sizes = [1, 32], strides = [1, 1]} : vector<8x128xf32> to vector<1x32xf32>
    %43 = vector.extract_strided_slice %35 {offsets = [7, 0], sizes = [1, 32], strides = [1, 1]} : vector<8x128xf32> to vector<1x32xf32>
    %44 = arith.truncf %26 : vector<32x32xf32> to vector<32x32xbf16>
    %cst_19 = arith.constant dense<0.000000e+00> : vector<32x96xf32>
    %45 = tpu.matmul %44, %29, %cst_19 {dimension_numbers = #tpu.dot_dimension_numbers<[1], [0], [0], [1], [0, 0, 1, 1], [], []>} : vector<32x32xbf16>, vector<32x96xbf16>, vector<32x96xf32> -> vector<32x96xf32>
    %46 = vector.broadcast %36 : vector<1x96xf32> to vector<32x96xf32>
    %47 = arith.addf %45, %46 : vector<32x96xf32>
    %48 = vector.shape_cast %47 : vector<32x96xf32> to vector<2x16x96xf32>
    %49 = vector.extract_strided_slice %48 {offsets = [0, 0, 0], sizes = [2, 16, 8], strides = [1, 1, 1]} : vector<2x16x96xf32> to vector<2x16x8xf32>
    %50 = vector.extract_strided_slice %48 {offsets = [0, 0, 8], sizes = [2, 16, 8], strides = [1, 1, 1]} : vector<2x16x96xf32> to vector<2x16x8xf32>
    %51 = vector.extract_strided_slice %48 {offsets = [0, 0, 16], sizes = [2, 16, 8], strides = [1, 1, 1]} : vector<2x16x96xf32> to vector<2x16x8xf32>
    %52 = vector.extract_strided_slice %48 {offsets = [0, 0, 24], sizes = [2, 16, 8], strides = [1, 1, 1]} : vector<2x16x96xf32> to vector<2x16x8xf32>
    %53 = tpu.concatenate %49, %50, %51, %52 in 0 : vector<2x16x8xf32>, vector<2x16x8xf32>, vector<2x16x8xf32>, vector<2x16x8xf32> -> vector<8x16x8xf32>
    %54 = vector.extract_strided_slice %48 {offsets = [0, 0, 32], sizes = [2, 16, 8], strides = [1, 1, 1]} : vector<2x16x96xf32> to vector<2x16x8xf32>
    %55 = vector.extract_strided_slice %48 {offsets = [0, 0, 40], sizes = [2, 16, 8], strides = [1, 1, 1]} : vector<2x16x96xf32> to vector<2x16x8xf32>
    %56 = vector.extract_strided_slice %48 {offsets = [0, 0, 48], sizes = [2, 16, 8], strides = [1, 1, 1]} : vector<2x16x96xf32> to vector<2x16x8xf32>
    %57 = vector.extract_strided_slice %48 {offsets = [0, 0, 56], sizes = [2, 16, 8], strides = [1, 1, 1]} : vector<2x16x96xf32> to vector<2x16x8xf32>
    %58 = tpu.concatenate %54, %55, %56, %57 in 0 : vector<2x16x8xf32>, vector<2x16x8xf32>, vector<2x16x8xf32>, vector<2x16x8xf32> -> vector<8x16x8xf32>
    %59 = vector.extract_strided_slice %48 {offsets = [0, 0, 64], sizes = [2, 16, 8], strides = [1, 1, 1]} : vector<2x16x96xf32> to vector<2x16x8xf32>
    %60 = vector.extract_strided_slice %48 {offsets = [0, 0, 72], sizes = [2, 16, 8], strides = [1, 1, 1]} : vector<2x16x96xf32> to vector<2x16x8xf32>
    %61 = vector.extract_strided_slice %48 {offsets = [0, 0, 80], sizes = [2, 16, 8], strides = [1, 1, 1]} : vector<2x16x96xf32> to vector<2x16x8xf32>
    %62 = vector.extract_strided_slice %48 {offsets = [0, 0, 88], sizes = [2, 16, 8], strides = [1, 1, 1]} : vector<2x16x96xf32> to vector<2x16x8xf32>
    %63 = tpu.concatenate %59, %60, %61, %62 in 0 : vector<2x16x8xf32>, vector<2x16x8xf32>, vector<2x16x8xf32>, vector<2x16x8xf32> -> vector<8x16x8xf32>
    %64 = arith.truncf %53 : vector<8x16x8xf32> to vector<8x16x8xbf16>
    %65 = arith.truncf %58 : vector<8x16x8xf32> to vector<8x16x8xbf16>
    "tpu.trace_start"() <{level = 10 : i32, message = "bqd,bkd->bqk"}> : () -> ()
    %cst_20 = arith.constant dense<0.000000e+00> : vector<8x16x16xf32>
    %66 = tpu.matmul %64, %65, %cst_20 {dimension_numbers = #tpu.dot_dimension_numbers<[2], [2], [1], [1], [0, 0, 0, 1, 1, 1], [0], [0]>} : vector<8x16x8xbf16>, vector<8x16x8xbf16>, vector<8x16x16xf32> -> vector<8x16x16xf32>
    "tpu.trace_stop"() : () -> ()
    %67 = arith.addf %66, %2 : vector<8x16x16xf32>
    %cst_21 = arith.constant dense<0xFF800000> : vector<8x16xf32>
    %68 = vector.multi_reduction <maximumf>, %67, %cst_21 [2] : vector<8x16x16xf32> to vector<8x16xf32>
    %69 = vector.shape_cast %68 : vector<8x16xf32> to vector<8x16x1xf32>
    %70 = vector.broadcast %69 : vector<8x16x1xf32> to vector<8x16x16xf32>
    %71 = arith.subf %67, %70 : vector<8x16x16xf32>
    %72 = math.exp %71 : vector<8x16x16xf32>
    %cst_22 = arith.constant dense<0.000000e+00> : vector<8x16xf32>
    %73 = vector.multi_reduction <add>, %72, %cst_22 [2] : vector<8x16x16xf32> to vector<8x16xf32>
    %74 = vector.shape_cast %73 : vector<8x16xf32> to vector<8x16x1xf32>
    %75 = tpu.reciprocal %74 {approx = true} : vector<8x16x1xf32> -> vector<8x16x1xf32>
    %76 = vector.broadcast %75 : vector<8x16x1xf32> to vector<8x16x16xf32>
    %77 = arith.mulf %72, %76 : vector<8x16x16xf32>
    %78 = arith.truncf %77 : vector<8x16x16xf32> to vector<8x16x16xbf16>
    %79 = arith.truncf %63 : vector<8x16x8xf32> to vector<8x16x8xbf16>
    "tpu.trace_start"() <{level = 10 : i32, message = "bqk,bkd->bqd"}> : () -> ()
    %cst_23 = arith.constant dense<0.000000e+00> : vector<8x16x8xf32>
    %80 = tpu.matmul %78, %79, %cst_23 {dimension_numbers = #tpu.dot_dimension_numbers<[2], [1], [1], [2], [0, 0, 0, 1, 1, 2], [0], [0]>} : vector<8x16x16xbf16>, vector<8x16x8xbf16>, vector<8x16x8xf32> -> vector<8x16x8xf32>
    "tpu.trace_stop"() : () -> ()
    %81 = vector.extract_strided_slice %80 {offsets = [0, 0, 0], sizes = [2, 16, 8], strides = [1, 1, 1]} : vector<8x16x8xf32> to vector<2x16x8xf32>
    %82 = vector.shape_cast %81 : vector<2x16x8xf32> to vector<32x8xf32>
    %83 = vector.extract_strided_slice %80 {offsets = [2, 0, 0], sizes = [2, 16, 8], strides = [1, 1, 1]} : vector<8x16x8xf32> to vector<2x16x8xf32>
    %84 = vector.shape_cast %83 : vector<2x16x8xf32> to vector<32x8xf32>
    %85 = vector.extract_strided_slice %80 {offsets = [4, 0, 0], sizes = [2, 16, 8], strides = [1, 1, 1]} : vector<8x16x8xf32> to vector<2x16x8xf32>
    %86 = vector.shape_cast %85 : vector<2x16x8xf32> to vector<32x8xf32>
    %87 = vector.extract_strided_slice %80 {offsets = [6, 0, 0], sizes = [2, 16, 8], strides = [1, 1, 1]} : vector<8x16x8xf32> to vector<2x16x8xf32>
    %88 = vector.shape_cast %87 : vector<2x16x8xf32> to vector<32x8xf32>
    %89 = tpu.concatenate %82, %84, %86, %88 in 1 : vector<32x8xf32>, vector<32x8xf32>, vector<32x8xf32>, vector<32x8xf32> -> vector<32x32xf32>
    %90 = arith.truncf %89 : vector<32x32xf32> to vector<32x32xbf16>
    %cst_24 = arith.constant dense<0.000000e+00> : vector<32x32xf32>
    %91 = tpu.matmul %90, %30, %cst_24 {dimension_numbers = #tpu.dot_dimension_numbers<[1], [0], [0], [1], [0, 0, 1, 1], [], []>} : vector<32x32xbf16>, vector<32x32xbf16>, vector<32x32xf32> -> vector<32x32xf32>
    %92 = vector.broadcast %37 : vector<1x32xf32> to vector<32x32xf32>
    %93 = arith.addf %91, %92 : vector<32x32xf32>
    %94 = arith.addf %26, %93 : vector<32x32xf32>
    %cst_25 = arith.constant dense<0.000000e+00> : vector<32xf32>
    %95 = vector.multi_reduction <add>, %94, %cst_25 [1] : vector<32x32xf32> to vector<32xf32>
    %96 = vector.shape_cast %95 : vector<32xf32> to vector<32x1xf32>
    %cst_26 = arith.constant 3.200000e+01 : f32
    %97 = vector.broadcast %cst_26 : f32 to vector<32x1xf32>
    %98 = arith.divf %96, %97 : vector<32x1xf32>
    %99 = vector.broadcast %98 : vector<32x1xf32> to vector<32x32xf32>
    %100 = arith.subf %94, %99 : vector<32x32xf32>
    %101 = arith.mulf %100, %100 : vector<32x32xf32>
    %cst_27 = arith.constant dense<0.000000e+00> : vector<32xf32>
    %102 = vector.multi_reduction <add>, %101, %cst_27 [1] : vector<32x32xf32> to vector<32xf32>
    %103 = vector.shape_cast %102 : vector<32xf32> to vector<32x1xf32>
    %cst_28 = arith.constant 3.200000e+01 : f32
    %104 = vector.broadcast %cst_28 : f32 to vector<32x1xf32>
    %105 = arith.divf %103, %104 : vector<32x1xf32>
    %106 = vector.broadcast %98 : vector<32x1xf32> to vector<32x32xf32>
    %107 = arith.subf %94, %106 : vector<32x32xf32>
    %cst_29 = arith.constant 9.99999974E-6 : f32
    %108 = vector.broadcast %cst_29 : f32 to vector<32x1xf32>
    %109 = arith.addf %105, %108 : vector<32x1xf32>
    %110 = math.rsqrt %109 : vector<32x1xf32>
    %111 = vector.broadcast %110 : vector<32x1xf32> to vector<32x32xf32>
    %112 = arith.mulf %107, %111 : vector<32x32xf32>
    %113 = vector.broadcast %40 : vector<1x32xf32> to vector<32x32xf32>
    %114 = arith.mulf %112, %113 : vector<32x32xf32>
    %115 = vector.broadcast %41 : vector<1x32xf32> to vector<32x32xf32>
    %116 = arith.addf %114, %115 : vector<32x32xf32>
    %117 = arith.truncf %116 : vector<32x32xf32> to vector<32x32xbf16>
    %cst_30 = arith.constant dense<0.000000e+00> : vector<32x64xf32>
    %118 = tpu.matmul %117, %31, %cst_30 {dimension_numbers = #tpu.dot_dimension_numbers<[1], [0], [0], [1], [0, 0, 1, 1], [], []>} : vector<32x32xbf16>, vector<32x64xbf16>, vector<32x64xf32> -> vector<32x64xf32>
    %119 = vector.broadcast %38 : vector<1x64xf32> to vector<32x64xf32>
    %120 = arith.addf %118, %119 : vector<32x64xf32>
    %cst_31 = arith.constant 0.000000e+00 : f32
    %121 = vector.broadcast %cst_31 : f32 to vector<32x64xf32>
    %122 = arith.maximumf %120, %121 : vector<32x64xf32>
    %123 = arith.truncf %122 : vector<32x64xf32> to vector<32x64xbf16>
    %cst_32 = arith.constant dense<0.000000e+00> : vector<32x32xf32>
    %124 = tpu.matmul %123, %33, %cst_32 {dimension_numbers = #tpu.dot_dimension_numbers<[1], [0], [0], [1], [0, 0, 1, 1], [], []>} : vector<32x64xbf16>, vector<64x32xbf16>, vector<32x32xf32> -> vector<32x32xf32>
    %125 = vector.broadcast %39 : vector<1x32xf32> to vector<32x32xf32>
    %126 = arith.addf %124, %125 : vector<32x32xf32>
    %127 = arith.addf %116, %126 : vector<32x32xf32>
    %cst_33 = arith.constant dense<0.000000e+00> : vector<32xf32>
    %128 = vector.multi_reduction <add>, %127, %cst_33 [1] : vector<32x32xf32> to vector<32xf32>
    %129 = vector.shape_cast %128 : vector<32xf32> to vector<32x1xf32>
    %cst_34 = arith.constant 3.200000e+01 : f32
    %130 = vector.broadcast %cst_34 : f32 to vector<32x1xf32>
    %131 = arith.divf %129, %130 : vector<32x1xf32>
    %132 = vector.broadcast %131 : vector<32x1xf32> to vector<32x32xf32>
    %133 = arith.subf %127, %132 : vector<32x32xf32>
    %134 = arith.mulf %133, %133 : vector<32x32xf32>
    %cst_35 = arith.constant dense<0.000000e+00> : vector<32xf32>
    %135 = vector.multi_reduction <add>, %134, %cst_35 [1] : vector<32x32xf32> to vector<32xf32>
    %136 = vector.shape_cast %135 : vector<32xf32> to vector<32x1xf32>
    %cst_36 = arith.constant 3.200000e+01 : f32
    %137 = vector.broadcast %cst_36 : f32 to vector<32x1xf32>
    %138 = arith.divf %136, %137 : vector<32x1xf32>
    %139 = vector.broadcast %131 : vector<32x1xf32> to vector<32x32xf32>
    %140 = arith.subf %127, %139 : vector<32x32xf32>
    %cst_37 = arith.constant 9.99999974E-6 : f32
    %141 = vector.broadcast %cst_37 : f32 to vector<32x1xf32>
    %142 = arith.addf %138, %141 : vector<32x1xf32>
    %143 = math.rsqrt %142 : vector<32x1xf32>
    %144 = vector.broadcast %143 : vector<32x1xf32> to vector<32x32xf32>
    %145 = arith.mulf %140, %144 : vector<32x32xf32>
    %146 = vector.broadcast %42 : vector<1x32xf32> to vector<32x32xf32>
    %147 = arith.mulf %145, %146 : vector<32x32xf32>
    %148 = vector.broadcast %43 : vector<1x32xf32> to vector<32x32xf32>
    %149 = arith.addf %147, %148 : vector<32x32xf32>
    %c1 = arith.constant 1 : index
    %c0_38 = arith.constant 0 : index
    %c0_39 = arith.constant 0 : index
    %150 = vector.load %arg2[%c1, %c0_38, %c0_39] : memref<2x32x384xbf16, #tpu.memory_space<vmem>>, vector<1x32x384xbf16>
    %151 = vector.shape_cast %150 : vector<1x32x384xbf16> to vector<32x384xbf16>
    %152 = vector.extract_strided_slice %151 {offsets = [0, 0], sizes = [32, 96], strides = [1, 1]} : vector<32x384xbf16> to vector<32x96xbf16>
    %153 = vector.extract_strided_slice %151 {offsets = [0, 128], sizes = [32, 32], strides = [1, 1]} : vector<32x384xbf16> to vector<32x32xbf16>
    %154 = vector.extract_strided_slice %151 {offsets = [0, 256], sizes = [32, 64], strides = [1, 1]} : vector<32x384xbf16> to vector<32x64xbf16>
    %c1_40 = arith.constant 1 : index
    %c0_41 = arith.constant 0 : index
    %c0_42 = arith.constant 0 : index
    %155 = vector.load %arg3[%c1_40, %c0_41, %c0_42] : memref<2x64x32xbf16, #tpu.memory_space<vmem>>, vector<1x64x32xbf16>
    %156 = vector.shape_cast %155 : vector<1x64x32xbf16> to vector<64x32xbf16>
    %c1_43 = arith.constant 1 : index
    %c0_44 = arith.constant 0 : index
    %c0_45 = arith.constant 0 : index
    %157 = vector.load %arg4[%c1_43, %c0_44, %c0_45] : memref<2x8x128xf32, #tpu.memory_space<vmem>>, vector<1x8x128xf32>
    %158 = vector.shape_cast %157 : vector<1x8x128xf32> to vector<8x128xf32>
    %159 = vector.extract_strided_slice %158 {offsets = [0, 0], sizes = [1, 96], strides = [1, 1]} : vector<8x128xf32> to vector<1x96xf32>
    %160 = vector.extract_strided_slice %158 {offsets = [1, 0], sizes = [1, 32], strides = [1, 1]} : vector<8x128xf32> to vector<1x32xf32>
    %161 = vector.extract_strided_slice %158 {offsets = [2, 0], sizes = [1, 64], strides = [1, 1]} : vector<8x128xf32> to vector<1x64xf32>
    %162 = vector.extract_strided_slice %158 {offsets = [3, 0], sizes = [1, 32], strides = [1, 1]} : vector<8x128xf32> to vector<1x32xf32>
    %163 = vector.extract_strided_slice %158 {offsets = [4, 0], sizes = [1, 32], strides = [1, 1]} : vector<8x128xf32> to vector<1x32xf32>
    %164 = vector.extract_strided_slice %158 {offsets = [5, 0], sizes = [1, 32], strides = [1, 1]} : vector<8x128xf32> to vector<1x32xf32>
    %165 = vector.extract_strided_slice %158 {offsets = [6, 0], sizes = [1, 32], strides = [1, 1]} : vector<8x128xf32> to vector<1x32xf32>
    %166 = vector.extract_strided_slice %158 {offsets = [7, 0], sizes = [1, 32], strides = [1, 1]} : vector<8x128xf32> to vector<1x32xf32>
    %167 = arith.truncf %149 : vector<32x32xf32> to vector<32x32xbf16>
    %cst_46 = arith.constant dense<0.000000e+00> : vector<32x96xf32>
    %168 = tpu.matmul %167, %152, %cst_46 {dimension_numbers = #tpu.dot_dimension_numbers<[1], [0], [0], [1], [0, 0, 1, 1], [], []>} : vector<32x32xbf16>, vector<32x96xbf16>, vector<32x96xf32> -> vector<32x96xf32>
    %169 = vector.broadcast %159 : vector<1x96xf32> to vector<32x96xf32>
    %170 = arith.addf %168, %169 : vector<32x96xf32>
    %171 = vector.shape_cast %170 : vector<32x96xf32> to vector<2x16x96xf32>
    %172 = vector.extract_strided_slice %171 {offsets = [0, 0, 0], sizes = [2, 16, 8], strides = [1, 1, 1]} : vector<2x16x96xf32> to vector<2x16x8xf32>
    %173 = vector.extract_strided_slice %171 {offsets = [0, 0, 8], sizes = [2, 16, 8], strides = [1, 1, 1]} : vector<2x16x96xf32> to vector<2x16x8xf32>
    %174 = vector.extract_strided_slice %171 {offsets = [0, 0, 16], sizes = [2, 16, 8], strides = [1, 1, 1]} : vector<2x16x96xf32> to vector<2x16x8xf32>
    %175 = vector.extract_strided_slice %171 {offsets = [0, 0, 24], sizes = [2, 16, 8], strides = [1, 1, 1]} : vector<2x16x96xf32> to vector<2x16x8xf32>
    %176 = tpu.concatenate %172, %173, %174, %175 in 0 : vector<2x16x8xf32>, vector<2x16x8xf32>, vector<2x16x8xf32>, vector<2x16x8xf32> -> vector<8x16x8xf32>
    %177 = vector.extract_strided_slice %171 {offsets = [0, 0, 32], sizes = [2, 16, 8], strides = [1, 1, 1]} : vector<2x16x96xf32> to vector<2x16x8xf32>
    %178 = vector.extract_strided_slice %171 {offsets = [0, 0, 40], sizes = [2, 16, 8], strides = [1, 1, 1]} : vector<2x16x96xf32> to vector<2x16x8xf32>
    %179 = vector.extract_strided_slice %171 {offsets = [0, 0, 48], sizes = [2, 16, 8], strides = [1, 1, 1]} : vector<2x16x96xf32> to vector<2x16x8xf32>
    %180 = vector.extract_strided_slice %171 {offsets = [0, 0, 56], sizes = [2, 16, 8], strides = [1, 1, 1]} : vector<2x16x96xf32> to vector<2x16x8xf32>
    %181 = tpu.concatenate %177, %178, %179, %180 in 0 : vector<2x16x8xf32>, vector<2x16x8xf32>, vector<2x16x8xf32>, vector<2x16x8xf32> -> vector<8x16x8xf32>
    %182 = vector.extract_strided_slice %171 {offsets = [0, 0, 64], sizes = [2, 16, 8], strides = [1, 1, 1]} : vector<2x16x96xf32> to vector<2x16x8xf32>
    %183 = vector.extract_strided_slice %171 {offsets = [0, 0, 72], sizes = [2, 16, 8], strides = [1, 1, 1]} : vector<2x16x96xf32> to vector<2x16x8xf32>
    %184 = vector.extract_strided_slice %171 {offsets = [0, 0, 80], sizes = [2, 16, 8], strides = [1, 1, 1]} : vector<2x16x96xf32> to vector<2x16x8xf32>
    %185 = vector.extract_strided_slice %171 {offsets = [0, 0, 88], sizes = [2, 16, 8], strides = [1, 1, 1]} : vector<2x16x96xf32> to vector<2x16x8xf32>
    %186 = tpu.concatenate %182, %183, %184, %185 in 0 : vector<2x16x8xf32>, vector<2x16x8xf32>, vector<2x16x8xf32>, vector<2x16x8xf32> -> vector<8x16x8xf32>
    %187 = arith.truncf %176 : vector<8x16x8xf32> to vector<8x16x8xbf16>
    %188 = arith.truncf %181 : vector<8x16x8xf32> to vector<8x16x8xbf16>
    "tpu.trace_start"() <{level = 10 : i32, message = "bqd,bkd->bqk"}> : () -> ()
    %cst_47 = arith.constant dense<0.000000e+00> : vector<8x16x16xf32>
    %189 = tpu.matmul %187, %188, %cst_47 {dimension_numbers = #tpu.dot_dimension_numbers<[2], [2], [1], [1], [0, 0, 0, 1, 1, 1], [0], [0]>} : vector<8x16x8xbf16>, vector<8x16x8xbf16>, vector<8x16x16xf32> -> vector<8x16x16xf32>
    "tpu.trace_stop"() : () -> ()
    %190 = arith.addf %189, %2 : vector<8x16x16xf32>
    %cst_48 = arith.constant dense<0xFF800000> : vector<8x16xf32>
    %191 = vector.multi_reduction <maximumf>, %190, %cst_48 [2] : vector<8x16x16xf32> to vector<8x16xf32>
    %192 = vector.shape_cast %191 : vector<8x16xf32> to vector<8x16x1xf32>
    %193 = vector.broadcast %192 : vector<8x16x1xf32> to vector<8x16x16xf32>
    %194 = arith.subf %190, %193 : vector<8x16x16xf32>
    %195 = math.exp %194 : vector<8x16x16xf32>
    %cst_49 = arith.constant dense<0.000000e+00> : vector<8x16xf32>
    %196 = vector.multi_reduction <add>, %195, %cst_49 [2] : vector<8x16x16xf32> to vector<8x16xf32>
    %197 = vector.shape_cast %196 : vector<8x16xf32> to vector<8x16x1xf32>
    %198 = tpu.reciprocal %197 {approx = true} : vector<8x16x1xf32> -> vector<8x16x1xf32>
    %199 = vector.broadcast %198 : vector<8x16x1xf32> to vector<8x16x16xf32>
    %200 = arith.mulf %195, %199 : vector<8x16x16xf32>
    %201 = arith.truncf %200 : vector<8x16x16xf32> to vector<8x16x16xbf16>
    %202 = arith.truncf %186 : vector<8x16x8xf32> to vector<8x16x8xbf16>
    "tpu.trace_start"() <{level = 10 : i32, message = "bqk,bkd->bqd"}> : () -> ()
    %cst_50 = arith.constant dense<0.000000e+00> : vector<8x16x8xf32>
    %203 = tpu.matmul %201, %202, %cst_50 {dimension_numbers = #tpu.dot_dimension_numbers<[2], [1], [1], [2], [0, 0, 0, 1, 1, 2], [0], [0]>} : vector<8x16x16xbf16>, vector<8x16x8xbf16>, vector<8x16x8xf32> -> vector<8x16x8xf32>
    "tpu.trace_stop"() : () -> ()
    %204 = vector.extract_strided_slice %203 {offsets = [0, 0, 0], sizes = [2, 16, 8], strides = [1, 1, 1]} : vector<8x16x8xf32> to vector<2x16x8xf32>
    %205 = vector.shape_cast %204 : vector<2x16x8xf32> to vector<32x8xf32>
    %206 = vector.extract_strided_slice %203 {offsets = [2, 0, 0], sizes = [2, 16, 8], strides = [1, 1, 1]} : vector<8x16x8xf32> to vector<2x16x8xf32>
    %207 = vector.shape_cast %206 : vector<2x16x8xf32> to vector<32x8xf32>
    %208 = vector.extract_strided_slice %203 {offsets = [4, 0, 0], sizes = [2, 16, 8], strides = [1, 1, 1]} : vector<8x16x8xf32> to vector<2x16x8xf32>
    %209 = vector.shape_cast %208 : vector<2x16x8xf32> to vector<32x8xf32>
    %210 = vector.extract_strided_slice %203 {offsets = [6, 0, 0], sizes = [2, 16, 8], strides = [1, 1, 1]} : vector<8x16x8xf32> to vector<2x16x8xf32>
    %211 = vector.shape_cast %210 : vector<2x16x8xf32> to vector<32x8xf32>
    %212 = tpu.concatenate %205, %207, %209, %211 in 1 : vector<32x8xf32>, vector<32x8xf32>, vector<32x8xf32>, vector<32x8xf32> -> vector<32x32xf32>
    %213 = arith.truncf %212 : vector<32x32xf32> to vector<32x32xbf16>
    %cst_51 = arith.constant dense<0.000000e+00> : vector<32x32xf32>
    %214 = tpu.matmul %213, %153, %cst_51 {dimension_numbers = #tpu.dot_dimension_numbers<[1], [0], [0], [1], [0, 0, 1, 1], [], []>} : vector<32x32xbf16>, vector<32x32xbf16>, vector<32x32xf32> -> vector<32x32xf32>
    %215 = vector.broadcast %160 : vector<1x32xf32> to vector<32x32xf32>
    %216 = arith.addf %214, %215 : vector<32x32xf32>
    %217 = arith.addf %149, %216 : vector<32x32xf32>
    %cst_52 = arith.constant dense<0.000000e+00> : vector<32xf32>
    %218 = vector.multi_reduction <add>, %217, %cst_52 [1] : vector<32x32xf32> to vector<32xf32>
    %219 = vector.shape_cast %218 : vector<32xf32> to vector<32x1xf32>
    %cst_53 = arith.constant 3.200000e+01 : f32
    %220 = vector.broadcast %cst_53 : f32 to vector<32x1xf32>
    %221 = arith.divf %219, %220 : vector<32x1xf32>
    %222 = vector.broadcast %221 : vector<32x1xf32> to vector<32x32xf32>
    %223 = arith.subf %217, %222 : vector<32x32xf32>
    %224 = arith.mulf %223, %223 : vector<32x32xf32>
    %cst_54 = arith.constant dense<0.000000e+00> : vector<32xf32>
    %225 = vector.multi_reduction <add>, %224, %cst_54 [1] : vector<32x32xf32> to vector<32xf32>
    %226 = vector.shape_cast %225 : vector<32xf32> to vector<32x1xf32>
    %cst_55 = arith.constant 3.200000e+01 : f32
    %227 = vector.broadcast %cst_55 : f32 to vector<32x1xf32>
    %228 = arith.divf %226, %227 : vector<32x1xf32>
    %229 = vector.broadcast %221 : vector<32x1xf32> to vector<32x32xf32>
    %230 = arith.subf %217, %229 : vector<32x32xf32>
    %cst_56 = arith.constant 9.99999974E-6 : f32
    %231 = vector.broadcast %cst_56 : f32 to vector<32x1xf32>
    %232 = arith.addf %228, %231 : vector<32x1xf32>
    %233 = math.rsqrt %232 : vector<32x1xf32>
    %234 = vector.broadcast %233 : vector<32x1xf32> to vector<32x32xf32>
    %235 = arith.mulf %230, %234 : vector<32x32xf32>
    %236 = vector.broadcast %163 : vector<1x32xf32> to vector<32x32xf32>
    %237 = arith.mulf %235, %236 : vector<32x32xf32>
    %238 = vector.broadcast %164 : vector<1x32xf32> to vector<32x32xf32>
    %239 = arith.addf %237, %238 : vector<32x32xf32>
    %240 = arith.truncf %239 : vector<32x32xf32> to vector<32x32xbf16>
    %cst_57 = arith.constant dense<0.000000e+00> : vector<32x64xf32>
    %241 = tpu.matmul %240, %154, %cst_57 {dimension_numbers = #tpu.dot_dimension_numbers<[1], [0], [0], [1], [0, 0, 1, 1], [], []>} : vector<32x32xbf16>, vector<32x64xbf16>, vector<32x64xf32> -> vector<32x64xf32>
    %242 = vector.broadcast %161 : vector<1x64xf32> to vector<32x64xf32>
    %243 = arith.addf %241, %242 : vector<32x64xf32>
    %cst_58 = arith.constant 0.000000e+00 : f32
    %244 = vector.broadcast %cst_58 : f32 to vector<32x64xf32>
    %245 = arith.maximumf %243, %244 : vector<32x64xf32>
    %246 = arith.truncf %245 : vector<32x64xf32> to vector<32x64xbf16>
    %cst_59 = arith.constant dense<0.000000e+00> : vector<32x32xf32>
    %247 = tpu.matmul %246, %156, %cst_59 {dimension_numbers = #tpu.dot_dimension_numbers<[1], [0], [0], [1], [0, 0, 1, 1], [], []>} : vector<32x64xbf16>, vector<64x32xbf16>, vector<32x32xf32> -> vector<32x32xf32>
    %248 = vector.broadcast %162 : vector<1x32xf32> to vector<32x32xf32>
    %249 = arith.addf %247, %248 : vector<32x32xf32>
    %250 = arith.addf %239, %249 : vector<32x32xf32>
    %cst_60 = arith.constant dense<0.000000e+00> : vector<32xf32>
    %251 = vector.multi_reduction <add>, %250, %cst_60 [1] : vector<32x32xf32> to vector<32xf32>
    %252 = vector.shape_cast %251 : vector<32xf32> to vector<32x1xf32>
    %cst_61 = arith.constant 3.200000e+01 : f32
    %253 = vector.broadcast %cst_61 : f32 to vector<32x1xf32>
    %254 = arith.divf %252, %253 : vector<32x1xf32>
    %255 = vector.broadcast %254 : vector<32x1xf32> to vector<32x32xf32>
    %256 = arith.subf %250, %255 : vector<32x32xf32>
    %257 = arith.mulf %256, %256 : vector<32x32xf32>
    %cst_62 = arith.constant dense<0.000000e+00> : vector<32xf32>
    %258 = vector.multi_reduction <add>, %257, %cst_62 [1] : vector<32x32xf32> to vector<32xf32>
    %259 = vector.shape_cast %258 : vector<32xf32> to vector<32x1xf32>
    %cst_63 = arith.constant 3.200000e+01 : f32
    %260 = vector.broadcast %cst_63 : f32 to vector<32x1xf32>
    %261 = arith.divf %259, %260 : vector<32x1xf32>
    %262 = vector.broadcast %254 : vector<32x1xf32> to vector<32x32xf32>
    %263 = arith.subf %250, %262 : vector<32x32xf32>
    %cst_64 = arith.constant 9.99999974E-6 : f32
    %264 = vector.broadcast %cst_64 : f32 to vector<32x1xf32>
    %265 = arith.addf %261, %264 : vector<32x1xf32>
    %266 = math.rsqrt %265 : vector<32x1xf32>
    %267 = vector.broadcast %266 : vector<32x1xf32> to vector<32x32xf32>
    %268 = arith.mulf %263, %267 : vector<32x32xf32>
    %269 = vector.broadcast %165 : vector<1x32xf32> to vector<32x32xf32>
    %270 = arith.mulf %268, %269 : vector<32x32xf32>
    %271 = vector.broadcast %166 : vector<1x32xf32> to vector<32x32xf32>
    %272 = arith.addf %270, %271 : vector<32x32xf32>
    %c0_65 = arith.constant 0 : index
    %c0_66 = arith.constant 0 : index
    %273 = vector.load %arg7[%c0_65, %c0_66] : memref<32x32xf32, #tpu.memory_space<vmem>>, vector<32x32xf32>
    tpu.vector_store %arg7[%c0_65, %c0_66], %272 {strides = array<i32>} : memref<32x32xf32, #tpu.memory_space<vmem>>, vector<32x32xf32>,
    %c0_67 = arith.constant 0 : index
    %c0_68 = arith.constant 0 : index
    %274 = vector.load %arg6[%c0_67, %c0_68] : memref<32x32xbf16, #tpu.memory_space<vmem>>, vector<32x32xbf16>
    %275 = arith.truncf %272 : vector<32x32xf32> to vector<32x32xbf16>
    %cst_69 = arith.constant dense<0.000000e+00> : vector<32x32xf32>
    %276 = tpu.matmul %275, %274, %cst_69 {dimension_numbers = #tpu.dot_dimension_numbers<[1], [0], [0], [1], [0, 0, 1, 1], [], []>} : vector<32x32xbf16>, vector<32x32xbf16>, vector<32x32xf32> -> vector<32x32xf32>
    %277 = vector.extract_strided_slice %1 {offsets = [2, 0], sizes = [1, 32], strides = [1, 1]} : vector<8x128xf32> to vector<1x32xf32>
    %278 = vector.broadcast %277 : vector<1x32xf32> to vector<32x32xf32>
    %279 = arith.addf %276, %278 : vector<32x32xf32>
    %280 = math.tanh %279 : vector<32x32xf32>
    %c0_70 = arith.constant 0 : index
    %c0_71 = arith.constant 0 : index
    %281 = vector.load %arg8[%c0_70, %c0_71] : memref<32x32xf32, #tpu.memory_space<vmem>>, vector<32x32xf32>
    tpu.vector_store %arg8[%c0_70, %c0_71], %280 {strides = array<i32>} : memref<32x32xf32, #tpu.memory_space<vmem>>, vector<32x32xf32>,
    return
  }
}

</mosaic_0001>

<llo_original>
// kernel: coordi_summarizer_forward.1
$region0: #{coordi_summarizer_forward.1}
  #allocation0 [shape = 'u32[]', space=smem, size = 0x4, offset = 0x4, fixed_abs, tag = 'smem constant byte address 0x4 - core index']
  #allocation1 [shape = 'u32[144,128]{1,0:T(1,128)}', space=vmem, size = 0x12000, scoped, tag = 'internal scratch']
  %s0 = inlined_call_operand.vmem [shape: f32[32,32], index: 0, kind: input, shape index: {}]
  %s1 = inlined_call_operand.vmem [shape: f32[8,16,16], index: 1, kind: input, shape index: {}]
  %s2 = inlined_call_operand.vmem [shape: bf16[2,32,384], index: 2, kind: input, shape index: {}]
  %s3 = inlined_call_operand.vmem [shape: bf16[2,64,32], index: 3, kind: input, shape index: {}]
  %s4 = inlined_call_operand.vmem [shape: f32[2,8,128], index: 4, kind: input, shape index: {}]
  %s5 = inlined_call_operand.vmem [shape: f32[8,128], index: 5, kind: input, shape index: {}]
  %s6 = inlined_call_operand.vmem [shape: bf16[32,32], index: 6, kind: input, shape index: {}]
  %s7 = inlined_call_operand.vmem [shape: f32[32,32], index: 7, kind: output, shape index: {0}]
  %s8 = inlined_call_operand.vmem [shape: f32[32,32], index: 8, kind: output, shape index: {1}]
  %9 = xla_tuple %s7, %s8
  %s10 = sld [smem:[#allocation0]]
  $region46: #{coordi_summarizer_forward.1} parent=0
    _
  %s12 = ssub.s32 1, %s10
  %s13 = scalar_select 0, %s12, %s10
  // Predicated region
  $region2: #{coordi_summarizer_forward.1} parent=0 // pred_check
    _
  $region3: #{coordi_summarizer_forward.1} parent=0 // pred_check_branch
    %15 = sbr.rel (0) target = $region5
  $region4: #{coordi_summarizer_forward.1} parent=0 // pred_region
    _
  $region5: #{coordi_summarizer_forward.1} parent=0 // pred_fallthru
    _
  // Predicated region
  $region6: #{coordi_summarizer_forward.1} parent=0 // pred_check
    _
  $region7: #{coordi_summarizer_forward.1} parent=0 // pred_check_branch
    %17 = sbr.rel (0) target = $region9
  $region8: #{coordi_summarizer_forward.1} parent=0 // pred_region
    _
  $region9: #{coordi_summarizer_forward.1} parent=0 // pred_fallthru
    _
  // Predicated region
  $region10: #{coordi_summarizer_forward.1} parent=0 // pred_check
    _
  $region11: #{coordi_summarizer_forward.1} parent=0 // pred_check_branch
    %19 = sbr.rel (0) target = $region13
  $region12: #{coordi_summarizer_forward.1} parent=0 // pred_region
    _
  $region13: #{coordi_summarizer_forward.1} parent=0 // pred_fallthru
    _
  // Predicated region
  $region14: #{coordi_summarizer_forward.1} parent=0 // pred_check
    _
  $region15: #{coordi_summarizer_forward.1} parent=0 // pred_check_branch
    %21 = sbr.rel (0) target = $region17
  $region16: #{coordi_summarizer_forward.1} parent=0 // pred_region
    _
  $region17: #{coordi_summarizer_forward.1} parent=0 // pred_fallthru
    _
  // Predicated region
  $region18: #{coordi_summarizer_forward.1} parent=0 // pred_check
    _
  $region19: #{coordi_summarizer_forward.1} parent=0 // pred_check_branch
    %23 = sbr.rel (0) target = $region21
  $region20: #{coordi_summarizer_forward.1} parent=0 // pred_region
    _
  $region21: #{coordi_summarizer_forward.1} parent=0 // pred_fallthru
    _
  // Predicated region
  $region22: #{coordi_summarizer_forward.1} parent=0 // pred_check
    _
  $region23: #{coordi_summarizer_forward.1} parent=0 // pred_check_branch
    %25 = sbr.rel (0) target = $region25
  $region24: #{coordi_summarizer_forward.1} parent=0 // pred_region
    _
  $region25: #{coordi_summarizer_forward.1} parent=0 // pred_fallthru
    _
  // Predicated region
  $region26: #{coordi_summarizer_forward.1} parent=0 // pred_check
    _
  $region27: #{coordi_summarizer_forward.1} parent=0 // pred_check_branch
    %27 = sbr.rel (0) target = $region29
  $region28: #{coordi_summarizer_forward.1} parent=0 // pred_region
    _
  $region29: #{coordi_summarizer_forward.1} parent=0 // pred_fallthru
    _
  %v29 = vld [vmem:[%s0] sm:$0xff]
  %v30 = vld [vmem:[%s0 + $0x8] sm:$0xff]
  %v31 = vld [vmem:[%s0 + $0x10] sm:$0xff]
  %v32 = vld [vmem:[%s0 + $0x18] sm:$0xff]
  %v33 = vld [vmem:[%s5] sm:$0xff]
  %v34 = vld [vmem:[%s1] sm:$0xff]
  %v35 = vld [vmem:[%s1 + $0x8] sm:$0xff]
  %v36 = vld [vmem:[%s1 + $0x10] sm:$0xff]
  %v37 = vld [vmem:[%s1 + $0x18] sm:$0xff]
  %v38 = vld [vmem:[%s1 + $0x20] sm:$0xff]
  %v39 = vld [vmem:[%s1 + $0x28] sm:$0xff]
  %v40 = vld [vmem:[%s1 + $0x30] sm:$0xff]
  %v41 = vld [vmem:[%s1 + $0x38] sm:$0xff]
  %v42 = vld [vmem:[%s1 + $0x40] sm:$0xff]
  %v43 = vld [vmem:[%s1 + $0x48] sm:$0xff]
  %v44 = vld [vmem:[%s1 + $0x50] sm:$0xff]
  %v45 = vld [vmem:[%s1 + $0x58] sm:$0xff]
  %v46 = vld [vmem:[%s1 + $0x60] sm:$0xff]
  %v47 = vld [vmem:[%s1 + $0x68] sm:$0xff]
  %v48 = vld [vmem:[%s1 + $0x70] sm:$0xff]
  %v49 = vld [vmem:[%s1 + $0x78] sm:$0xff]
  %vm50 = vcmask 261120
  %v51 = vsel %vm50, %v29, 0.0
  %52 = vadd.xlane.f32.xlu0 %v51
  %v53 = vpop.xlane.xlu0 %52
  %v54 = vsel %vm50, %v30, 0.0
  %55 = vadd.xlane.f32.xlu0 %v54
  %v56 = vpop.xlane.xlu0 %55
  %v57 = vsel %vm50, %v31, 0.0
  %58 = vadd.xlane.f32.xlu0 %v57
  %v59 = vpop.xlane.xlu0 %58
  %v60 = vsel %vm50, %v32, 0.0
  %61 = vadd.xlane.f32.xlu0 %v60
  %v62 = vpop.xlane.xlu0 %61
  %v63 = vrcp.pop 32.0
  %v64 = vmul.f32 %v53, %v63
  %v65 = vmul.f32 %v56, %v63
  %v66 = vmul.f32 %v59, %v63
  %v67 = vmul.f32 %v62, %v63
  %v68 = vsub.f32 %v29, %v64
  %v69 = vsub.f32 %v30, %v65
  %v70 = vsub.f32 %v31, %v66
  %v71 = vsub.f32 %v32, %v67
  %v72 = vmul.f32 %v68, %v68
  %v73 = vmul.f32 %v69, %v69
  %v74 = vmul.f32 %v70, %v70
  %v75 = vmul.f32 %v71, %v71
  %v76 = vsel %vm50, %v72, 0.0
  %77 = vadd.xlane.f32.xlu0 %v76
  %v78 = vpop.xlane.xlu0 %77
  %v79 = vsel %vm50, %v73, 0.0
  %80 = vadd.xlane.f32.xlu0 %v79
  %v81 = vpop.xlane.xlu0 %80
  %v82 = vsel %vm50, %v74, 0.0
  %83 = vadd.xlane.f32.xlu0 %v82
  %v84 = vpop.xlane.xlu0 %83
  %v85 = vsel %vm50, %v75, 0.0
  %86 = vadd.xlane.f32.xlu0 %v85
  %v87 = vpop.xlane.xlu0 %86
  %v88 = vmul.f32 %v78, %v63
  %v89 = vmul.f32 %v81, %v63
  %v90 = vmul.f32 %v84, %v63
  %v91 = vmul.f32 %v87, %v63
  %v92 = vadd.f32 %v88, 1e-05
  %v93 = vadd.f32 %v89, 1e-05
  %v94 = vadd.f32 %v90, 1e-05
  %v95 = vadd.f32 %v91, 1e-05
  %v96 = vrsqrt.pop %v92
  %v97 = vrsqrt.pop %v93
  %v98 = vrsqrt.pop %v94
  %v99 = vrsqrt.pop %v95
  %v100 = vmul.f32 %v68, %v96
  %v101 = vmul.f32 %v69, %v97
  %v102 = vmul.f32 %v70, %v98
  %v103 = vmul.f32 %v71, %v99
  %v104 = vlaneseq
  %v105 = vshrl.u32 %v104, 7
  %v106 = vsub.s32 0, %v105
  %v107 = vrot.slane %v33, %v106
  %v108 = vmul.f32 %v100, %v107
  %v109 = vmul.f32 %v101, %v107
  %v110 = vmul.f32 %v102, %v107
  %v111 = vmul.f32 %v103, %v107
  %v112 = vlaneseq
  %v113 = vshrl.u32 %v112, 7
  %v114 = vsub.s32 1, %v113
  %v115 = vrot.slane %v33, %v114
  %v116 = vadd.f32 %v108, %v115
  %v117 = vadd.f32 %v109, %v115
  %v118 = vadd.f32 %v110, %v115
  %v119 = vadd.f32 %v111, %v115
  %v120 = vld [vmem:[%s2] sm:$0xff]
  %v121 = vld [vmem:[%s2 + $0x8] sm:$0xf]
  %v122 = vld [vmem:[%s2 + $0xc] sm:$0xff]
  %v123 = vld [vmem:[%s2 + $0x14] sm:$0xf]
  %v124 = vld [vmem:[%s2 + $0x18] sm:$0xff]
  %v125 = vld [vmem:[%s2 + $0x20] sm:$0xf]
  %v126 = vld [vmem:[%s2 + $0x24] sm:$0xff]
  %v127 = vld [vmem:[%s2 + $0x2c] sm:$0xf]
  %v128 = vld [vmem:[%s3] sm:$0xf]
  %v129 = vld [vmem:[%s3 + $0x4] sm:$0xf]
  %v130 = vld [vmem:[%s3 + $0x8] sm:$0xf]
  %v131 = vld [vmem:[%s3 + $0xc] sm:$0xf]
  %v132 = vld [vmem:[%s3 + $0x10] sm:$0xf]
  %v133 = vld [vmem:[%s3 + $0x14] sm:$0xf]
  %v134 = vld [vmem:[%s3 + $0x18] sm:$0xf]
  %v135 = vld [vmem:[%s3 + $0x1c] sm:$0xf]
  %v136 = vld [vmem:[%s4] sm:$0xff]
  %v137 = vpack.c.bf16 %v117, %v116
  %v138 = vpack.c.bf16 %v119, %v118
  %v139 = vlaneseq
  %v140 = vshrl.u32 %v139, 7
  %v141 = vsub.s32 0, %v140
  %v142 = vrot.slane %v136, %v141
  %v147 = vunpack.c.l.b16 %v120
  %v148 = vunpack.c.l.b16 %v122
  %v149 = vunpack.c.l.b16 %v124
  %v150 = vunpack.c.l.b16 %v126
  %v151 = vpack.c.b16 %v148, %v147
  %v152 = vpack.c.b16 %v150, %v149
  %v156 = vsel %vm50, %v137, 0
  %v159 = vsel %vm50, %v138, 0
  %161 = vmatprep.subr.bf16.mxu0 0
  %162 = vmatpush1.bf16.msra.mxu0 0
  %163 = vmatprep.subr.bf16.mxu0 0
  %164 = vmatpush1.bf16.msra.mxu0 0
  %165 = vmatprep.subr.bf16.mxu0 0
  %166 = vmatpush1.bf16.msra.mxu0 0
  %167 = vmatprep.subr.bf16.mxu0 0
  %168 = vmatpush1.bf16.msra.mxu0 0
  %169 = vmatprep.subr.bf16.mxu0 0
  %170 = vmatpush1.bf16.msra.mxu0 0
  %171 = vmatprep.subr.bf16.mxu0 0
  %172 = vmatpush1.bf16.msra.mxu0 0
  %173 = vmatprep.subr.bf16.mxu0 0
  %174 = vmatpush1.bf16.msra.mxu0 %v152
  %175 = vmatprep.subr.bf16.mxu0 0
  %176 = vmatpush1.bf16.msra.mxu0 %v151
  %177 = vmatprep.subr.bf16.mxu0 0
  %178 = vmatpush2.bf16.msra.mxu0 0
  %179 = vmatprep.subr.bf16.mxu0 0
  %180 = vmatpush2.bf16.msra.mxu0 0
  %181 = vmatprep.subr.bf16.mxu0 0
  %182 = vmatpush2.bf16.msra.mxu0 0
  %183 = vmatprep.subr.bf16.mxu0 0
  %184 = vmatpush2.bf16.msra.mxu0 0
  %185 = vmatprep.subr.bf16.mxu0 0
  %186 = vmatpush2.bf16.msra.mxu0 0
  %187 = vmatprep.subr.bf16.mxu0 0
  %188 = vmatpush2.bf16.msra.mxu0 0
  %189 = vmatprep.subr.bf16.mxu0 0
  %190 = vmatpush2.bf16.msra.mxu0 0
  %191 = vmatprep.subr.bf16.mxu0 0
  %192 = vmatpush2.bf16.msra.mxu0 0
  %193 = vmatprep.mubr.bf16.mxu0 0
  %194 = vmatmul.mubr.bf16.gmra.mxu0 %v156
  %v195 = vpop.f32.mrf.mxu0
  %v196 = vadd.f32 %v142, %v195
  %v197 = vpop.f32.mrf.mxu0
  %v198 = vpop.f32.mrf.mxu0
  %v199 = vadd.f32 %v142, %v198
  %v200 = vpop.f32.mrf.mxu0
  %201 = vmatprep.mubr.bf16.mxu0 0
  %202 = vmatmul.mubr.bf16.gmra.mxu0 %v159
  %v203 = vpop.f32.mrf.mxu0
  %v204 = vadd.f32 %v142, %v203
  %v205 = vpop.f32.mrf.mxu0
  %v206 = vpop.f32.mrf.mxu0
  %v207 = vadd.f32 %v142, %v206
  %v208 = vpop.f32.mrf.mxu0
  %209 = vdwg.mxu0
  %214 = vrot.lane.b32.xlu0 %v196, 120
  %v215 = vpop.permute.xlu0 %214
  %216 = vrot.lane.b32.xlu0 %v199, 120
  %v217 = vpop.permute.xlu0 %216
  %218 = vrot.lane.b32.xlu0 %v204, 120
  %v219 = vpop.permute.xlu0 %218
  %220 = vrot.lane.b32.xlu0 %v207, 120
  %v221 = vpop.permute.xlu0 %220
  %226 = vrot.lane.b32.xlu0 %v196, 112
  %v227 = vpop.permute.xlu0 %226
  %228 = vrot.lane.b32.xlu0 %v199, 112
  %v229 = vpop.permute.xlu0 %228
  %230 = vrot.lane.b32.xlu0 %v204, 112
  %v231 = vpop.permute.xlu0 %230
  %232 = vrot.lane.b32.xlu0 %v207, 112
  %v233 = vpop.permute.xlu0 %232
  %238 = vrot.lane.b32.xlu0 %v196, 104
  %v239 = vpop.permute.xlu0 %238
  %240 = vrot.lane.b32.xlu0 %v199, 104
  %v241 = vpop.permute.xlu0 %240
  %242 = vrot.lane.b32.xlu0 %v204, 104
  %v243 = vpop.permute.xlu0 %242
  %244 = vrot.lane.b32.xlu0 %v207, 104
  %v245 = vpop.permute.xlu0 %244
  %v250 = vpack.c.bf16 %v199, %v196
  %v251 = vpack.c.bf16 %v207, %v204
  %v252 = vpack.c.bf16 %v217, %v215
  %v253 = vpack.c.bf16 %v221, %v219
  %v254 = vpack.c.bf16 %v229, %v227
  %v255 = vpack.c.bf16 %v233, %v231
  %v256 = vpack.c.bf16 %v241, %v239
  %v257 = vpack.c.bf16 %v245, %v243
  %259 = vrot.lane.b32.xlu0 %v250, 96
  %v260 = vpop.permute.xlu0 %259
  %vm261 = vcmask 64512
  %v263 = vsel %vm261, %v250, 0
  %v266 = vsel %vm261, %v260, 0
  %268 = vmatprep.subr.bf16.mxu0 0
  %269 = vmatpush1.bf16.xpose.msra.mxu0 0
  %270 = vmatprep.subr.bf16.mxu0 0
  %271 = vmatpush1.bf16.xpose.msra.mxu0 0
  %272 = vmatprep.subr.bf16.mxu0 0
  %273 = vmatpush1.bf16.xpose.msra.mxu0 0
  %274 = vmatprep.subr.bf16.mxu0 0
  %275 = vmatpush1.bf16.xpose.msra.mxu0 0
  %276 = vmatprep.subr.bf16.mxu0 0
  %277 = vmatpush1.bf16.xpose.msra.mxu0 0
  %278 = vmatprep.subr.bf16.mxu0 0
  %279 = vmatpush1.bf16.xpose.msra.mxu0 0
  %280 = vmatprep.subr.bf16.mxu0 0
  %281 = vmatpush1.bf16.xpose.msra.mxu0 0
  %282 = vmatprep.subr.bf16.mxu0 0
  %283 = vmatpush1.bf16.xpose.msra.mxu0 %v266
  %284 = vmatprep.subr.bf16.mxu0 0
  %285 = vmatpush2.bf16.xpose.msra.mxu0 0
  %286 = vmatprep.subr.bf16.mxu0 0
  %287 = vmatpush2.bf16.xpose.msra.mxu0 0
  %288 = vmatprep.subr.bf16.mxu0 0
  %289 = vmatpush2.bf16.xpose.msra.mxu0 0
  %290 = vmatprep.subr.bf16.mxu0 0
  %291 = vmatpush2.bf16.xpose.msra.mxu0 0
  %292 = vmatprep.subr.bf16.mxu0 0
  %293 = vmatpush2.bf16.xpose.msra.mxu0 0
  %294 = vmatprep.subr.bf16.mxu0 0
  %295 = vmatpush2.bf16.xpose.msra.mxu0 0
  %296 = vmatprep.subr.bf16.mxu0 0
  %297 = vmatpush2.bf16.xpose.msra.mxu0 0
  %298 = vmatprep.subr.bf16.mxu0 0
  %299 = vmatpush2.bf16.xpose.msra.mxu0 0
  %300 = vmatprep.mubr.bf16.mxu0 0
  %301 = vmatmul.mubr.bf16.gmra.mxu0 %v263
  %v302 = vpop.f32.mrf.mxu0
  %v303 = vadd.f32 %v34, %v302
  %v304 = vpop.f32.mrf.mxu0
  %v305 = vpop.f32.mrf.mxu0
  %v306 = vadd.f32 %v35, %v305
  %v307 = vpop.f32.mrf.mxu0
  %308 = vdwg.mxu0
  %310 = vrot.lane.b32.xlu0 %v251, 96
  %v311 = vpop.permute.xlu0 %310
  %v313 = vsel %vm261, %v251, 0
  %v316 = vsel %vm261, %v311, 0
  %318 = vmatprep.subr.bf16.mxu0 0
  %319 = vmatpush1.bf16.xpose.msra.mxu0 0
  %320 = vmatprep.subr.bf16.mxu0 0
  %321 = vmatpush1.bf16.xpose.msra.mxu0 0
  %322 = vmatprep.subr.bf16.mxu0 0
  %323 = vmatpush1.bf16.xpose.msra.mxu0 0
  %324 = vmatprep.subr.bf16.mxu0 0
  %325 = vmatpush1.bf16.xpose.msra.mxu0 0
  %326 = vmatprep.subr.bf16.mxu0 0
  %327 = vmatpush1.bf16.xpose.msra.mxu0 0
  %328 = vmatprep.subr.bf16.mxu0 0
  %329 = vmatpush1.bf16.xpose.msra.mxu0 0
  %330 = vmatprep.subr.bf16.mxu0 0
  %331 = vmatpush1.bf16.xpose.msra.mxu0 0
  %332 = vmatprep.subr.bf16.mxu0 0
  %333 = vmatpush1.bf16.xpose.msra.mxu0 %v316
  %334 = vmatprep.subr.bf16.mxu0 0
  %335 = vmatpush2.bf16.xpose.msra.mxu0 0
  %336 = vmatprep.subr.bf16.mxu0 0
  %337 = vmatpush2.bf16.xpose.msra.mxu0 0
  %338 = vmatprep.subr.bf16.mxu0 0
  %339 = vmatpush2.bf16.xpose.msra.mxu0 0
  %340 = vmatprep.subr.bf16.mxu0 0
  %341 = vmatpush2.bf16.xpose.msra.mxu0 0
  %342 = vmatprep.subr.bf16.mxu0 0
  %343 = vmatpush2.bf16.xpose.msra.mxu0 0
  %344 = vmatprep.subr.bf16.mxu0 0
  %345 = vmatpush2.bf16.xpose.msra.mxu0 0
  %346 = vmatprep.subr.bf16.mxu0 0
  %347 = vmatpush2.bf16.xpose.msra.mxu0 0
  %348 = vmatprep.subr.bf16.mxu0 0
  %349 = vmatpush2.bf16.xpose.msra.mxu0 0
  %350 = vmatprep.mubr.bf16.mxu0 0
  %351 = vmatmul.mubr.bf16.gmra.mxu0 %v313
  %v352 = vpop.f32.mrf.mxu0
  %v353 = vadd.f32 %v36, %v352
  %v354 = vpop.f32.mrf.mxu0
  %v355 = vpop.f32.mrf.mxu0
  %v356 = vadd.f32 %v37, %v355
  %v357 = vpop.f32.mrf.mxu0
  %358 = vdwg.mxu0
  %360 = vrot.lane.b32.xlu0 %v252, 96
  %v361 = vpop.permute.xlu0 %360
  %v363 = vsel %vm261, %v252, 0
  %v366 = vsel %vm261, %v361, 0
  %368 = vmatprep.subr.bf16.mxu0 0
  %369 = vmatpush1.bf16.xpose.msra.mxu0 0
  %370 = vmatprep.subr.bf16.mxu0 0
  %371 = vmatpush1.bf16.xpose.msra.mxu0 0
  %372 = vmatprep.subr.bf16.mxu0 0
  %373 = vmatpush1.bf16.xpose.msra.mxu0 0
  %374 = vmatprep.subr.bf16.mxu0 0
  %375 = vmatpush1.bf16.xpose.msra.mxu0 0
  %376 = vmatprep.subr.bf16.mxu0 0
  %377 = vmatpush1.bf16.xpose.msra.mxu0 0
  %378 = vmatprep.subr.bf16.mxu0 0
  %379 = vmatpush1.bf16.xpose.msra.mxu0 0
  %380 = vmatprep.subr.bf16.mxu0 0
  %381 = vmatpush1.bf16.xpose.msra.mxu0 0
  %382 = vmatprep.subr.bf16.mxu0 0
  %383 = vmatpush1.bf16.xpose.msra.mxu0 %v366
  %384 = vmatprep.subr.bf16.mxu0 0
  %385 = vmatpush2.bf16.xpose.msra.mxu0 0
  %386 = vmatprep.subr.bf16.mxu0 0
  %387 = vmatpush2.bf16.xpose.msra.mxu0 0
  %388 = vmatprep.subr.bf16.mxu0 0
  %389 = vmatpush2.bf16.xpose.msra.mxu0 0
  %390 = vmatprep.subr.bf16.mxu0 0
  %391 = vmatpush2.bf16.xpose.msra.mxu0 0
  %392 = vmatprep.subr.bf16.mxu0 0
  %393 = vmatpush2.bf16.xpose.msra.mxu0 0
  %394 = vmatprep.subr.bf16.mxu0 0
  %395 = vmatpush2.bf16.xpose.msra.mxu0 0
  %396 = vmatprep.subr.bf16.mxu0 0
  %397 = vmatpush2.bf16.xpose.msra.mxu0 0
  %398 = vmatprep.subr.bf16.mxu0 0
  %399 = vmatpush2.bf16.xpose.msra.mxu0 0
  %400 = vmatprep.mubr.bf16.mxu0 0
  %401 = vmatmul.mubr.bf16.gmra.mxu0 %v363
  %v402 = vpop.f32.mrf.mxu0
  %v403 = vadd.f32 %v38, %v402
  %v404 = vpop.f32.mrf.mxu0
  %v405 = vpop.f32.mrf.mxu0
  %v406 = vadd.f32 %v39, %v405
  %v407 = vpop.f32.mrf.mxu0
  %408 = vdwg.mxu0
  %410 = vrot.lane.b32.xlu0 %v253, 96
  %v411 = vpop.permute.xlu0 %410
  %v413 = vsel %vm261, %v253, 0
  %v416 = vsel %vm261, %v411, 0
  %418 = vmatprep.subr.bf16.mxu0 0
  %419 = vmatpush1.bf16.xpose.msra.mxu0 0
  %420 = vmatprep.subr.bf16.mxu0 0
  %421 = vmatpush1.bf16.xpose.msra.mxu0 0
  %422 = vmatprep.subr.bf16.mxu0 0
  %423 = vmatpush1.bf16.xpose.msra.mxu0 0
  %424 = vmatprep.subr.bf16.mxu0 0
  %425 = vmatpush1.bf16.xpose.msra.mxu0 0
  %426 = vmatprep.subr.bf16.mxu0 0
  %427 = vmatpush1.bf16.xpose.msra.mxu0 0
  %428 = vmatprep.subr.bf16.mxu0 0
  %429 = vmatpush1.bf16.xpose.msra.mxu0 0
  %430 = vmatprep.subr.bf16.mxu0 0
  %431 = vmatpush1.bf16.xpose.msra.mxu0 0
  %432 = vmatprep.subr.bf16.mxu0 0
  %433 = vmatpush1.bf16.xpose.msra.mxu0 %v416
  %434 = vmatprep.subr.bf16.mxu0 0
  %435 = vmatpush2.bf16.xpose.msra.mxu0 0
  %436 = vmatprep.subr.bf16.mxu0 0
  %437 = vmatpush2.bf16.xpose.msra.mxu0 0
  %438 = vmatprep.subr.bf16.mxu0 0
  %439 = vmatpush2.bf16.xpose.msra.mxu0 0
  %440 = vmatprep.subr.bf16.mxu0 0
  %441 = vmatpush2.bf16.xpose.msra.mxu0 0
  %442 = vmatprep.subr.bf16.mxu0 0
  %443 = vmatpush2.bf16.xpose.msra.mxu0 0
  %444 = vmatprep.subr.bf16.mxu0 0
  %445 = vmatpush2.bf16.xpose.msra.mxu0 0
  %446 = vmatprep.subr.bf16.mxu0 0
  %447 = vmatpush2.bf16.xpose.msra.mxu0 0
  %448 = vmatprep.subr.bf16.mxu0 0
  %449 = vmatpush2.bf16.xpose.msra.mxu0 0
  %450 = vmatprep.mubr.bf16.mxu0 0
  %451 = vmatmul.mubr.bf16.gmra.mxu0 %v413
  %v452 = vpop.f32.mrf.mxu0
  %v453 = vadd.f32 %v40, %v452
  %v454 = vpop.f32.mrf.mxu0
  %v455 = vpop.f32.mrf.mxu0
  %v456 = vadd.f32 %v41, %v455
  %v457 = vpop.f32.mrf.mxu0
  %458 = vdwg.mxu0
  %460 = vrot.lane.b32.xlu0 %v254, 96
  %v461 = vpop.permute.xlu0 %460
  %v463 = vsel %vm261, %v254, 0
  %v466 = vsel %vm261, %v461, 0
  %468 = vmatprep.subr.bf16.mxu0 0
  %469 = vmatpush1.bf16.xpose.msra.mxu0 0
  %470 = vmatprep.subr.bf16.mxu0 0
  %471 = vmatpush1.bf16.xpose.msra.mxu0 0
  %472 = vmatprep.subr.bf16.mxu0 0
  %473 = vmatpush1.bf16.xpose.msra.mxu0 0
  %474 = vmatprep.subr.bf16.mxu0 0
  %475 = vmatpush1.bf16.xpose.msra.mxu0 0
  %476 = vmatprep.subr.bf16.mxu0 0
  %477 = vmatpush1.bf16.xpose.msra.mxu0 0
  %478 = vmatprep.subr.bf16.mxu0 0
  %479 = vmatpush1.bf16.xpose.msra.mxu0 0
  %480 = vmatprep.subr.bf16.mxu0 0
  %481 = vmatpush1.bf16.xpose.msra.mxu0 0
  %482 = vmatprep.subr.bf16.mxu0 0
  %483 = vmatpush1.bf16.xpose.msra.mxu0 %v466
  %484 = vmatprep.subr.bf16.mxu0 0
  %485 = vmatpush2.bf16.xpose.msra.mxu0 0
  %486 = vmatprep.subr.bf16.mxu0 0
  %487 = vmatpush2.bf16.xpose.msra.mxu0 0
  %488 = vmatprep.subr.bf16.mxu0 0
  %489 = vmatpush2.bf16.xpose.msra.mxu0 0
  %490 = vmatprep.subr.bf16.mxu0 0
  %491 = vmatpush2.bf16.xpose.msra.mxu0 0
  %492 = vmatprep.subr.bf16.mxu0 0
  %493 = vmatpush2.bf16.xpose.msra.mxu0 0
  %494 = vmatprep.subr.bf16.mxu0 0
  %495 = vmatpush2.bf16.xpose.msra.mxu0 0
  %496 = vmatprep.subr.bf16.mxu0 0
  %497 = vmatpush2.bf16.xpose.msra.mxu0 0
  %498 = vmatprep.subr.bf16.mxu0 0
  %499 = vmatpush2.bf16.xpose.msra.mxu0 0
  %500 = vmatprep.mubr.bf16.mxu0 0
  %501 = vmatmul.mubr.bf16.gmra.mxu0 %v463
  %v502 = vpop.f32.mrf.mxu0
  %v503 = vadd.f32 %v42, %v502
  %v504 = vpop.f32.mrf.mxu0
  %v505 = vpop.f32.mrf.mxu0
  %v506 = vadd.f32 %v43, %v505
  %v507 = vpop.f32.mrf.mxu0
  %508 = vdwg.mxu0
  %510 = vrot.lane.b32.xlu0 %v255, 96
  %v511 = vpop.permute.xlu0 %510
  %v513 = vsel %vm261, %v255, 0
  %v516 = vsel %vm261, %v511, 0
  %518 = vmatprep.subr.bf16.mxu0 0
  %519 = vmatpush1.bf16.xpose.msra.mxu0 0
  %520 = vmatprep.subr.bf16.mxu0 0
  %521 = vmatpush1.bf16.xpose.msra.mxu0 0
  %522 = vmatprep.subr.bf16.mxu0 0
  %523 = vmatpush1.bf16.xpose.msra.mxu0 0
  %524 = vmatprep.subr.bf16.mxu0 0
  %525 = vmatpush1.bf16.xpose.msra.mxu0 0
  %526 = vmatprep.subr.bf16.mxu0 0
  %527 = vmatpush1.bf16.xpose.msra.mxu0 0
  %528 = vmatprep.subr.bf16.mxu0 0
  %529 = vmatpush1.bf16.xpose.msra.mxu0 0
  %530 = vmatprep.subr.bf16.mxu0 0
  %531 = vmatpush1.bf16.xpose.msra.mxu0 0
  %532 = vmatprep.subr.bf16.mxu0 0
  %533 = vmatpush1.bf16.xpose.msra.mxu0 %v516
  %534 = vmatprep.subr.bf16.mxu0 0
  %535 = vmatpush2.bf16.xpose.msra.mxu0 0
  %536 = vmatprep.subr.bf16.mxu0 0
  %537 = vmatpush2.bf16.xpose.msra.mxu0 0
  %538 = vmatprep.subr.bf16.mxu0 0
  %539 = vmatpush2.bf16.xpose.msra.mxu0 0
  %540 = vmatprep.subr.bf16.mxu0 0
  %541 = vmatpush2.bf16.xpose.msra.mxu0 0
  %542 = vmatprep.subr.bf16.mxu0 0
  %543 = vmatpush2.bf16.xpose.msra.mxu0 0
  %544 = vmatprep.subr.bf16.mxu0 0
  %545 = vmatpush2.bf16.xpose.msra.mxu0 0
  %546 = vmatprep.subr.bf16.mxu0 0
  %547 = vmatpush2.bf16.xpose.msra.mxu0 0
  %548 = vmatprep.subr.bf16.mxu0 0
  %549 = vmatpush2.bf16.xpose.msra.mxu0 0
  %550 = vmatprep.mubr.bf16.mxu0 0
  %551 = vmatmul.mubr.bf16.gmra.mxu0 %v513
  %v552 = vpop.f32.mrf.mxu0
  %v553 = vadd.f32 %v44, %v552
  %v554 = vpop.f32.mrf.mxu0
  %v555 = vpop.f32.mrf.mxu0
  %v556 = vadd.f32 %v45, %v555
  %v557 = vpop.f32.mrf.mxu0
  %558 = vdwg.mxu0
  %560 = vrot.lane.b32.xlu0 %v256, 96
  %v561 = vpop.permute.xlu0 %560
  %v563 = vsel %vm261, %v256, 0
  %v566 = vsel %vm261, %v561, 0
  %568 = vmatprep.subr.bf16.mxu0 0
  %569 = vmatpush1.bf16.xpose.msra.mxu0 0
  %570 = vmatprep.subr.bf16.mxu0 0
  %571 = vmatpush1.bf16.xpose.msra.mxu0 0
  %572 = vmatprep.subr.bf16.mxu0 0
  %573 = vmatpush1.bf16.xpose.msra.mxu0 0
  %574 = vmatprep.subr.bf16.mxu0 0
  %575 = vmatpush1.bf16.xpose.msra.mxu0 0
  %576 = vmatprep.subr.bf16.mxu0 0
  %577 = vmatpush1.bf16.xpose.msra.mxu0 0
  %578 = vmatprep.subr.bf16.mxu0 0
  %579 = vmatpush1.bf16.xpose.msra.mxu0 0
  %580 = vmatprep.subr.bf16.mxu0 0
  %581 = vmatpush1.bf16.xpose.msra.mxu0 0
  %582 = vmatprep.subr.bf16.mxu0 0
  %583 = vmatpush1.bf16.xpose.msra.mxu0 %v566
  %584 = vmatprep.subr.bf16.mxu0 0
  %585 = vmatpush2.bf16.xpose.msra.mxu0 0
  %586 = vmatprep.subr.bf16.mxu0 0
  %587 = vmatpush2.bf16.xpose.msra.mxu0 0
  %588 = vmatprep.subr.bf16.mxu0 0
  %589 = vmatpush2.bf16.xpose.msra.mxu0 0
  %590 = vmatprep.subr.bf16.mxu0 0
  %591 = vmatpush2.bf16.xpose.msra.mxu0 0
  %592 = vmatprep.subr.bf16.mxu0 0
  %593 = vmatpush2.bf16.xpose.msra.mxu0 0
  %594 = vmatprep.subr.bf16.mxu0 0
  %595 = vmatpush2.bf16.xpose.msra.mxu0 0
  %596 = vmatprep.subr.bf16.mxu0 0
  %597 = vmatpush2.bf16.xpose.msra.mxu0 0
  %598 = vmatprep.subr.bf16.mxu0 0
  %599 = vmatpush2.bf16.xpose.msra.mxu0 0
  %600 = vmatprep.mubr.bf16.mxu0 0
  %601 = vmatmul.mubr.bf16.gmra.mxu0 %v563
  %v602 = vpop.f32.mrf.mxu0
  %v603 = vadd.f32 %v46, %v602
  %v604 = vpop.f32.mrf.mxu0
  %v605 = vpop.f32.mrf.mxu0
  %v606 = vadd.f32 %v47, %v605
  %v607 = vpop.f32.mrf.mxu0
  %608 = vdwg.mxu0
  %610 = vrot.lane.b32.xlu0 %v257, 96
  %v611 = vpop.permute.xlu0 %610
  %v613 = vsel %vm261, %v257, 0
  %v616 = vsel %vm261, %v611, 0
  %618 = vmatprep.subr.bf16.mxu0 0
  %619 = vmatpush1.bf16.xpose.msra.mxu0 0
  %620 = vmatprep.subr.bf16.mxu0 0
  %621 = vmatpush1.bf16.xpose.msra.mxu0 0
  %622 = vmatprep.subr.bf16.mxu0 0
  %623 = vmatpush1.bf16.xpose.msra.mxu0 0
  %624 = vmatprep.subr.bf16.mxu0 0
  %625 = vmatpush1.bf16.xpose.msra.mxu0 0
  %626 = vmatprep.subr.bf16.mxu0 0
  %627 = vmatpush1.bf16.xpose.msra.mxu0 0
  %628 = vmatprep.subr.bf16.mxu0 0
  %629 = vmatpush1.bf16.xpose.msra.mxu0 0
  %630 = vmatprep.subr.bf16.mxu0 0
  %631 = vmatpush1.bf16.xpose.msra.mxu0 0
  %632 = vmatprep.subr.bf16.mxu0 0
  %633 = vmatpush1.bf16.xpose.msra.mxu0 %v616
  %634 = vmatprep.subr.bf16.mxu0 0
  %635 = vmatpush2.bf16.xpose.msra.mxu0 0
  %636 = vmatprep.subr.bf16.mxu0 0
  %637 = vmatpush2.bf16.xpose.msra.mxu0 0
  %638 = vmatprep.subr.bf16.mxu0 0
  %639 = vmatpush2.bf16.xpose.msra.mxu0 0
  %640 = vmatprep.subr.bf16.mxu0 0
  %641 = vmatpush2.bf16.xpose.msra.mxu0 0
  %642 = vmatprep.subr.bf16.mxu0 0
  %643 = vmatpush2.bf16.xpose.msra.mxu0 0
  %644 = vmatprep.subr.bf16.mxu0 0
  %645 = vmatpush2.bf16.xpose.msra.mxu0 0
  %646 = vmatprep.subr.bf16.mxu0 0
  %647 = vmatpush2.bf16.xpose.msra.mxu0 0
  %648 = vmatprep.subr.bf16.mxu0 0
  %649 = vmatpush2.bf16.xpose.msra.mxu0 0
  %650 = vmatprep.mubr.bf16.mxu0 0
  %651 = vmatmul.mubr.bf16.gmra.mxu0 %v613
  %v652 = vpop.f32.mrf.mxu0
  %v653 = vadd.f32 %v48, %v652
  %v654 = vpop.f32.mrf.mxu0
  %v655 = vpop.f32.mrf.mxu0
  %v656 = vadd.f32 %v49, %v655
  %v657 = vpop.f32.mrf.mxu0
  %658 = vdwg.mxu0
  %vm659 = vcmask 130048
  %v660 = vsel %vm659, %v303, -inf
  %661 = vmax.xlane.f32.xlu0 %v660
  %v662 = vpop.xlane.xlu0 %661
  %v663 = vsel %vm659, %v306, -inf
  %664 = vmax.xlane.f32.xlu0 %v663
  %v665 = vpop.xlane.xlu0 %664
  %v666 = vsel %vm659, %v353, -inf
  %667 = vmax.xlane.f32.xlu0 %v666
  %v668 = vpop.xlane.xlu0 %667
  %v669 = vsel %vm659, %v356, -inf
  %670 = vmax.xlane.f32.xlu0 %v669
  %v671 = vpop.xlane.xlu0 %670
  %v672 = vsel %vm659, %v403, -inf
  %673 = vmax.xlane.f32.xlu0 %v672
  %v674 = vpop.xlane.xlu0 %673
  %v675 = vsel %vm659, %v406, -inf
  %676 = vmax.xlane.f32.xlu0 %v675
  %v677 = vpop.xlane.xlu0 %676
  %v678 = vsel %vm659, %v453, -inf
  %679 = vmax.xlane.f32.xlu0 %v678
  %v680 = vpop.xlane.xlu0 %679
  %v681 = vsel %vm659, %v456, -inf
  %682 = vmax.xlane.f32.xlu0 %v681
  %v683 = vpop.xlane.xlu0 %682
  %v684 = vsel %vm659, %v503, -inf
  %685 = vmax.xlane.f32.xlu0 %v684
  %v686 = vpop.xlane.xlu0 %685
  %v687 = vsel %vm659, %v506, -inf
  %688 = vmax.xlane.f32.xlu0 %v687
  %v689 = vpop.xlane.xlu0 %688
  %v690 = vsel %vm659, %v553, -inf
  %691 = vmax.xlane.f32.xlu0 %v690
  %v692 = vpop.xlane.xlu0 %691
  %v693 = vsel %vm659, %v556, -inf
  %694 = vmax.xlane.f32.xlu0 %v693
  %v695 = vpop.xlane.xlu0 %694
  %v696 = vsel %vm659, %v603, -inf
  %697 = vmax.xlane.f32.xlu0 %v696
  %v698 = vpop.xlane.xlu0 %697
  %v699 = vsel %vm659, %v606, -inf
  %700 = vmax.xlane.f32.xlu0 %v699
  %v701 = vpop.xlane.xlu0 %700
  %v702 = vsel %vm659, %v653, -inf
  %703 = vmax.xlane.f32.xlu0 %v702
  %v704 = vpop.xlane.xlu0 %703
  %v705 = vsel %vm659, %v656, -inf
  %706 = vmax.xlane.f32.xlu0 %v705
  %v707 = vpop.xlane.xlu0 %706
  %v708 = vsub.f32 %v303, %v662
  %v709 = vsub.f32 %v306, %v665
  %v710 = vsub.f32 %v353, %v668
  %v711 = vsub.f32 %v356, %v671
  %v712 = vsub.f32 %v403, %v674
  %v713 = vsub.f32 %v406, %v677
  %v714 = vsub.f32 %v453, %v680
  %v715 = vsub.f32 %v456, %v683
  %v716 = vsub.f32 %v503, %v686
  %v717 = vsub.f32 %v506, %v689
  %v718 = vsub.f32 %v553, %v692
  %v719 = vsub.f32 %v556, %v695
  %v720 = vsub.f32 %v603, %v698
  %v721 = vsub.f32 %v606, %v701
  %v722 = vsub.f32 %v653, %v704
  %v723 = vsub.f32 %v656, %v707
  %v724 = vmul.f32 %v708, 1.442695
  %v725 = vpow.pop %v724
  %v726 = vmul.f32 %v709, 1.442695
  %v727 = vpow.pop %v726
  %v728 = vmul.f32 %v710, 1.442695
  %v729 = vpow.pop %v728
  %v730 = vmul.f32 %v711, 1.442695
  %v731 = vpow.pop %v730
  %v732 = vmul.f32 %v712, 1.442695
  %v733 = vpow.pop %v732
  %v734 = vmul.f32 %v713, 1.442695
  %v735 = vpow.pop %v734
  %v736 = vmul.f32 %v714, 1.442695
  %v737 = vpow.pop %v736
  %v738 = vmul.f32 %v715, 1.442695
  %v739 = vpow.pop %v738
  %v740 = vmul.f32 %v716, 1.442695
  %v741 = vpow.pop %v740
  %v742 = vmul.f32 %v717, 1.442695
  %v743 = vpow.pop %v742
  %v744 = vmul.f32 %v718, 1.442695
  %v745 = vpow.pop %v744
  %v746 = vmul.f32 %v719, 1.442695
  %v747 = vpow.pop %v746
  %v748 = vmul.f32 %v720, 1.442695
  %v749 = vpow.pop %v748
  %v750 = vmul.f32 %v721, 1.442695
  %v751 = vpow.pop %v750
  %v752 = vmul.f32 %v722, 1.442695
  %v753 = vpow.pop %v752
  %v754 = vmul.f32 %v723, 1.442695
  %v755 = vpow.pop %v754
  %v756 = vsel %vm659, %v725, 0.0
  %757 = vadd.xlane.f32.xlu0 %v756
  %v758 = vpop.xlane.xlu0 %757
  %v759 = vsel %vm659, %v727, 0.0
  %760 = vadd.xlane.f32.xlu0 %v759
  %v761 = vpop.xlane.xlu0 %760
  %v762 = vsel %vm659, %v729, 0.0
  %763 = vadd.xlane.f32.xlu0 %v762
  %v764 = vpop.xlane.xlu0 %763
  %v765 = vsel %vm659, %v731, 0.0
  %766 = vadd.xlane.f32.xlu0 %v765
  %v767 = vpop.xlane.xlu0 %766
  %v768 = vsel %vm659, %v733, 0.0
  %769 = vadd.xlane.f32.xlu0 %v768
  %v770 = vpop.xlane.xlu0 %769
  %v771 = vsel %vm659, %v735, 0.0
  %772 = vadd.xlane.f32.xlu0 %v771
  %v773 = vpop.xlane.xlu0 %772
  %v774 = vsel %vm659, %v737, 0.0
  %775 = vadd.xlane.f32.xlu0 %v774
  %v776 = vpop.xlane.xlu0 %775
  %v777 = vsel %vm659, %v739, 0.0
  %778 = vadd.xlane.f32.xlu0 %v777
  %v779 = vpop.xlane.xlu0 %778
  %v780 = vsel %vm659, %v741, 0.0
  %781 = vadd.xlane.f32.xlu0 %v780
  %v782 = vpop.xlane.xlu0 %781
  %v783 = vsel %vm659, %v743, 0.0
  %784 = vadd.xlane.f32.xlu0 %v783
  %v785 = vpop.xlane.xlu0 %784
  %v786 = vsel %vm659, %v745, 0.0
  %787 = vadd.xlane.f32.xlu0 %v786
  %v788 = vpop.xlane.xlu0 %787
  %v789 = vsel %vm659, %v747, 0.0
  %790 = vadd.xlane.f32.xlu0 %v789
  %v791 = vpop.xlane.xlu0 %790
  %v792 = vsel %vm659, %v749, 0.0
  %793 = vadd.xlane.f32.xlu0 %v792
  %v794 = vpop.xlane.xlu0 %793
  %v795 = vsel %vm659, %v751, 0.0
  %796 = vadd.xlane.f32.xlu0 %v795
  %v797 = vpop.xlane.xlu0 %796
  %v798 = vsel %vm659, %v753, 0.0
  %799 = vadd.xlane.f32.xlu0 %v798
  %v800 = vpop.xlane.xlu0 %799
  %v801 = vsel %vm659, %v755, 0.0
  %802 = vadd.xlane.f32.xlu0 %v801
  %v803 = vpop.xlane.xlu0 %802
  %v804 = vrcp.pop %v758
  %v805 = vrcp.pop %v761
  %v806 = vrcp.pop %v764
  %v807 = vrcp.pop %v767
  %v808 = vrcp.pop %v770
  %v809 = vrcp.pop %v773
  %v810 = vrcp.pop %v776
  %v811 = vrcp.pop %v779
  %v812 = vrcp.pop %v782
  %v813 = vrcp.pop %v785
  %v814 = vrcp.pop %v788
  %v815 = vrcp.pop %v791
  %v816 = vrcp.pop %v794
  %v817 = vrcp.pop %v797
  %v818 = vrcp.pop %v800
  %v819 = vrcp.pop %v803
  %v820 = vmul.f32 %v725, %v804
  %v821 = vmul.f32 %v727, %v805
  %v822 = vmul.f32 %v729, %v806
  %v823 = vmul.f32 %v731, %v807
  %v824 = vmul.f32 %v733, %v808
  %v825 = vmul.f32 %v735, %v809
  %v826 = vmul.f32 %v737, %v810
  %v827 = vmul.f32 %v739, %v811
  %v828 = vmul.f32 %v741, %v812
  %v829 = vmul.f32 %v743, %v813
  %v830 = vmul.f32 %v745, %v814
  %v831 = vmul.f32 %v747, %v815
  %v832 = vmul.f32 %v749, %v816
  %v833 = vmul.f32 %v751, %v817
  %v834 = vmul.f32 %v753, %v818
  %v835 = vmul.f32 %v755, %v819
  %v836 = vpack.c.bf16 %v821, %v820
  %v837 = vpack.c.bf16 %v823, %v822
  %v838 = vpack.c.bf16 %v825, %v824
  %v839 = vpack.c.bf16 %v827, %v826
  %v840 = vpack.c.bf16 %v829, %v828
  %v841 = vpack.c.bf16 %v831, %v830
  %v842 = vpack.c.bf16 %v833, %v832
  %v843 = vpack.c.bf16 %v835, %v834
  %844 = vrot.lane.b32.xlu0 %v250, 64
  %v845 = vpop.permute.xlu0 %844
  %v848 = vsel %vm659, %v836, 0
  %850 = vmatprep.subr.bf16.mxu0 0
  %851 = vmatpush1.bf16.msra.mxu0 0
  %852 = vmatprep.subr.bf16.mxu0 0
  %853 = vmatpush1.bf16.msra.mxu0 0
  %854 = vmatprep.subr.bf16.mxu0 0
  %855 = vmatpush1.bf16.msra.mxu0 0
  %856 = vmatprep.subr.bf16.mxu0 0
  %857 = vmatpush1.bf16.msra.mxu0 0
  %858 = vmatprep.subr.bf16.mxu0 0
  %859 = vmatpush1.bf16.msra.mxu0 0
  %860 = vmatprep.subr.bf16.mxu0 0
  %861 = vmatpush1.bf16.msra.mxu0 0
  %862 = vmatprep.subr.bf16.mxu0 0
  %863 = vmatpush1.bf16.msra.mxu0 0
  %864 = vmatprep.subr.bf16.mxu0 0
  %865 = vmatpush1.bf16.msra.mxu0 %v845
  %866 = vmatprep.subr.bf16.mxu0 0
  %867 = vmatpush2.bf16.msra.mxu0 0
  %868 = vmatprep.subr.bf16.mxu0 0
  %869 = vmatpush2.bf16.msra.mxu0 0
  %870 = vmatprep.subr.bf16.mxu0 0
  %871 = vmatpush2.bf16.msra.mxu0 0
  %872 = vmatprep.subr.bf16.mxu0 0
  %873 = vmatpush2.bf16.msra.mxu0 0
  %874 = vmatprep.subr.bf16.mxu0 0
  %875 = vmatpush2.bf16.msra.mxu0 0
  %876 = vmatprep.subr.bf16.mxu0 0
  %877 = vmatpush2.bf16.msra.mxu0 0
  %878 = vmatprep.subr.bf16.mxu0 0
  %879 = vmatpush2.bf16.msra.mxu0 0
  %880 = vmatprep.subr.bf16.mxu0 0
  %881 = vmatpush2.bf16.msra.mxu0 0
  %882 = vmatprep.mubr.bf16.mxu0 0
  %883 = vmatmul.mubr.bf16.gmra.mxu0 %v848
  %v884 = vpop.f32.mrf.mxu0
  %v885 = vadd.f32 0.0, %v884
  %v886 = vpop.f32.mrf.mxu0
  %v887 = vpop.f32.mrf.mxu0
  %v888 = vadd.f32 0.0, %v887
  %v889 = vpop.f32.mrf.mxu0
  %890 = vdwg.mxu0
  %891 = vrot.lane.b32.xlu0 %v251, 64
  %v892 = vpop.permute.xlu0 %891
  %v895 = vsel %vm659, %v837, 0
  %897 = vmatprep.subr.bf16.mxu0 0
  %898 = vmatpush1.bf16.msra.mxu0 0
  %899 = vmatprep.subr.bf16.mxu0 0
  %900 = vmatpush1.bf16.msra.mxu0 0
  %901 = vmatprep.subr.bf16.mxu0 0
  %902 = vmatpush1.bf16.msra.mxu0 0
  %903 = vmatprep.subr.bf16.mxu0 0
  %904 = vmatpush1.bf16.msra.mxu0 0
  %905 = vmatprep.subr.bf16.mxu0 0
  %906 = vmatpush1.bf16.msra.mxu0 0
  %907 = vmatprep.subr.bf16.mxu0 0
  %908 = vmatpush1.bf16.msra.mxu0 0
  %909 = vmatprep.subr.bf16.mxu0 0
  %910 = vmatpush1.bf16.msra.mxu0 0
  %911 = vmatprep.subr.bf16.mxu0 0
  %912 = vmatpush1.bf16.msra.mxu0 %v892
  %913 = vmatprep.subr.bf16.mxu0 0
  %914 = vmatpush2.bf16.msra.mxu0 0
  %915 = vmatprep.subr.bf16.mxu0 0
  %916 = vmatpush2.bf16.msra.mxu0 0
  %917 = vmatprep.subr.bf16.mxu0 0
  %918 = vmatpush2.bf16.msra.mxu0 0
  %919 = vmatprep.subr.bf16.mxu0 0
  %920 = vmatpush2.bf16.msra.mxu0 0
  %921 = vmatprep.subr.bf16.mxu0 0
  %922 = vmatpush2.bf16.msra.mxu0 0
  %923 = vmatprep.subr.bf16.mxu0 0
  %924 = vmatpush2.bf16.msra.mxu0 0
  %925 = vmatprep.subr.bf16.mxu0 0
  %926 = vmatpush2.bf16.msra.mxu0 0
  %927 = vmatprep.subr.bf16.mxu0 0
  %928 = vmatpush2.bf16.msra.mxu0 0
  %929 = vmatprep.mubr.bf16.mxu0 0
  %930 = vmatmul.mubr.bf16.gmra.mxu0 %v895
  %v931 = vpop.f32.mrf.mxu0
  %v932 = vadd.f32 0.0, %v931
  %v933 = vpop.f32.mrf.mxu0
  %v934 = vpop.f32.mrf.mxu0
  %v935 = vadd.f32 0.0, %v934
  %v936 = vpop.f32.mrf.mxu0
  %937 = vdwg.mxu0
  %938 = vrot.lane.b32.xlu0 %v252, 64
  %v939 = vpop.permute.xlu0 %938
  %v942 = vsel %vm659, %v838, 0
  %944 = vmatprep.subr.bf16.mxu0 0
  %945 = vmatpush1.bf16.msra.mxu0 0
  %946 = vmatprep.subr.bf16.mxu0 0
  %947 = vmatpush1.bf16.msra.mxu0 0
  %948 = vmatprep.subr.bf16.mxu0 0
  %949 = vmatpush1.bf16.msra.mxu0 0
  %950 = vmatprep.subr.bf16.mxu0 0
  %951 = vmatpush1.bf16.msra.mxu0 0
  %952 = vmatprep.subr.bf16.mxu0 0
  %953 = vmatpush1.bf16.msra.mxu0 0
  %954 = vmatprep.subr.bf16.mxu0 0
  %955 = vmatpush1.bf16.msra.mxu0 0
  %956 = vmatprep.subr.bf16.mxu0 0
  %957 = vmatpush1.bf16.msra.mxu0 0
  %958 = vmatprep.subr.bf16.mxu0 0
  %959 = vmatpush1.bf16.msra.mxu0 %v939
  %960 = vmatprep.subr.bf16.mxu0 0
  %961 = vmatpush2.bf16.msra.mxu0 0
  %962 = vmatprep.subr.bf16.mxu0 0
  %963 = vmatpush2.bf16.msra.mxu0 0
  %964 = vmatprep.subr.bf16.mxu0 0
  %965 = vmatpush2.bf16.msra.mxu0 0
  %966 = vmatprep.subr.bf16.mxu0 0
  %967 = vmatpush2.bf16.msra.mxu0 0
  %968 = vmatprep.subr.bf16.mxu0 0
  %969 = vmatpush2.bf16.msra.mxu0 0
  %970 = vmatprep.subr.bf16.mxu0 0
  %971 = vmatpush2.bf16.msra.mxu0 0
  %972 = vmatprep.subr.bf16.mxu0 0
  %973 = vmatpush2.bf16.msra.mxu0 0
  %974 = vmatprep.subr.bf16.mxu0 0
  %975 = vmatpush2.bf16.msra.mxu0 0
  %976 = vmatprep.mubr.bf16.mxu0 0
  %977 = vmatmul.mubr.bf16.gmra.mxu0 %v942
  %v978 = vpop.f32.mrf.mxu0
  %v979 = vadd.f32 0.0, %v978
  %v980 = vpop.f32.mrf.mxu0
  %v981 = vpop.f32.mrf.mxu0
  %v982 = vadd.f32 0.0, %v981
  %v983 = vpop.f32.mrf.mxu0
  %984 = vdwg.mxu0
  %985 = vrot.lane.b32.xlu0 %v253, 64
  %v986 = vpop.permute.xlu0 %985
  %v989 = vsel %vm659, %v839, 0
  %991 = vmatprep.subr.bf16.mxu0 0
  %992 = vmatpush1.bf16.msra.mxu0 0
  %993 = vmatprep.subr.bf16.mxu0 0
  %994 = vmatpush1.bf16.msra.mxu0 0
  %995 = vmatprep.subr.bf16.mxu0 0
  %996 = vmatpush1.bf16.msra.mxu0 0
  %997 = vmatprep.subr.bf16.mxu0 0
  %998 = vmatpush1.bf16.msra.mxu0 0
  %999 = vmatprep.subr.bf16.mxu0 0
  %1000 = vmatpush1.bf16.msra.mxu0 0
  %1001 = vmatprep.subr.bf16.mxu0 0
  %1002 = vmatpush1.bf16.msra.mxu0 0
  %1003 = vmatprep.subr.bf16.mxu0 0
  %1004 = vmatpush1.bf16.msra.mxu0 0
  %1005 = vmatprep.subr.bf16.mxu0 0
  %1006 = vmatpush1.bf16.msra.mxu0 %v986
  %1007 = vmatprep.subr.bf16.mxu0 0
  %1008 = vmatpush2.bf16.msra.mxu0 0
  %1009 = vmatprep.subr.bf16.mxu0 0
  %1010 = vmatpush2.bf16.msra.mxu0 0
  %1011 = vmatprep.subr.bf16.mxu0 0
  %1012 = vmatpush2.bf16.msra.mxu0 0
  %1013 = vmatprep.subr.bf16.mxu0 0
  %1014 = vmatpush2.bf16.msra.mxu0 0
  %1015 = vmatprep.subr.bf16.mxu0 0
  %1016 = vmatpush2.bf16.msra.mxu0 0
  %1017 = vmatprep.subr.bf16.mxu0 0
  %1018 = vmatpush2.bf16.msra.mxu0 0
  %1019 = vmatprep.subr.bf16.mxu0 0
  %1020 = vmatpush2.bf16.msra.mxu0 0
  %1021 = vmatprep.subr.bf16.mxu0 0
  %1022 = vmatpush2.bf16.msra.mxu0 0
  %1023 = vmatprep.mubr.bf16.mxu0 0
  %1024 = vmatmul.mubr.bf16.gmra.mxu0 %v989
  %v1025 = vpop.f32.mrf.mxu0
  %v1026 = vadd.f32 0.0, %v1025
  %v1027 = vpop.f32.mrf.mxu0
  %v1028 = vpop.f32.mrf.mxu0
  %v1029 = vadd.f32 0.0, %v1028
  %v1030 = vpop.f32.mrf.mxu0
  %1031 = vdwg.mxu0
  %1032 = vrot.lane.b32.xlu0 %v254, 64
  %v1033 = vpop.permute.xlu0 %1032
  %v1036 = vsel %vm659, %v840, 0
  %1038 = vmatprep.subr.bf16.mxu0 0
  %1039 = vmatpush1.bf16.msra.mxu0 0
  %1040 = vmatprep.subr.bf16.mxu0 0
  %1041 = vmatpush1.bf16.msra.mxu0 0
  %1042 = vmatprep.subr.bf16.mxu0 0
  %1043 = vmatpush1.bf16.msra.mxu0 0
  %1044 = vmatprep.subr.bf16.mxu0 0
  %1045 = vmatpush1.bf16.msra.mxu0 0
  %1046 = vmatprep.subr.bf16.mxu0 0
  %1047 = vmatpush1.bf16.msra.mxu0 0
  %1048 = vmatprep.subr.bf16.mxu0 0
  %1049 = vmatpush1.bf16.msra.mxu0 0
  %1050 = vmatprep.subr.bf16.mxu0 0
  %1051 = vmatpush1.bf16.msra.mxu0 0
  %1052 = vmatprep.subr.bf16.mxu0 0
  %1053 = vmatpush1.bf16.msra.mxu0 %v1033
  %1054 = vmatprep.subr.bf16.mxu0 0
  %1055 = vmatpush2.bf16.msra.mxu0 0
  %1056 = vmatprep.subr.bf16.mxu0 0
  %1057 = vmatpush2.bf16.msra.mxu0 0
  %1058 = vmatprep.subr.bf16.mxu0 0
  %1059 = vmatpush2.bf16.msra.mxu0 0
  %1060 = vmatprep.subr.bf16.mxu0 0
  %1061 = vmatpush2.bf16.msra.mxu0 0
  %1062 = vmatprep.subr.bf16.mxu0 0
  %1063 = vmatpush2.bf16.msra.mxu0 0
  %1064 = vmatprep.subr.bf16.mxu0 0
  %1065 = vmatpush2.bf16.msra.mxu0 0
  %1066 = vmatprep.subr.bf16.mxu0 0
  %1067 = vmatpush2.bf16.msra.mxu0 0
  %1068 = vmatprep.subr.bf16.mxu0 0
  %1069 = vmatpush2.bf16.msra.mxu0 0
  %1070 = vmatprep.mubr.bf16.mxu0 0
  %1071 = vmatmul.mubr.bf16.gmra.mxu0 %v1036
  %v1072 = vpop.f32.mrf.mxu0
  %v1073 = vadd.f32 0.0, %v1072
  %v1074 = vpop.f32.mrf.mxu0
  %v1075 = vpop.f32.mrf.mxu0
  %v1076 = vadd.f32 0.0, %v1075
  %v1077 = vpop.f32.mrf.mxu0
  %1078 = vdwg.mxu0
  %1079 = vrot.lane.b32.xlu0 %v255, 64
  %v1080 = vpop.permute.xlu0 %1079
  %v1083 = vsel %vm659, %v841, 0
  %1085 = vmatprep.subr.bf16.mxu0 0
  %1086 = vmatpush1.bf16.msra.mxu0 0
  %1087 = vmatprep.subr.bf16.mxu0 0
  %1088 = vmatpush1.bf16.msra.mxu0 0
  %1089 = vmatprep.subr.bf16.mxu0 0
  %1090 = vmatpush1.bf16.msra.mxu0 0
  %1091 = vmatprep.subr.bf16.mxu0 0
  %1092 = vmatpush1.bf16.msra.mxu0 0
  %1093 = vmatprep.subr.bf16.mxu0 0
  %1094 = vmatpush1.bf16.msra.mxu0 0
  %1095 = vmatprep.subr.bf16.mxu0 0
  %1096 = vmatpush1.bf16.msra.mxu0 0
  %1097 = vmatprep.subr.bf16.mxu0 0
  %1098 = vmatpush1.bf16.msra.mxu0 0
  %1099 = vmatprep.subr.bf16.mxu0 0
  %1100 = vmatpush1.bf16.msra.mxu0 %v1080
  %1101 = vmatprep.subr.bf16.mxu0 0
  %1102 = vmatpush2.bf16.msra.mxu0 0
  %1103 = vmatprep.subr.bf16.mxu0 0
  %1104 = vmatpush2.bf16.msra.mxu0 0
  %1105 = vmatprep.subr.bf16.mxu0 0
  %1106 = vmatpush2.bf16.msra.mxu0 0
  %1107 = vmatprep.subr.bf16.mxu0 0
  %1108 = vmatpush2.bf16.msra.mxu0 0
  %1109 = vmatprep.subr.bf16.mxu0 0
  %1110 = vmatpush2.bf16.msra.mxu0 0
  %1111 = vmatprep.subr.bf16.mxu0 0
  %1112 = vmatpush2.bf16.msra.mxu0 0
  %1113 = vmatprep.subr.bf16.mxu0 0
  %1114 = vmatpush2.bf16.msra.mxu0 0
  %1115 = vmatprep.subr.bf16.mxu0 0
  %1116 = vmatpush2.bf16.msra.mxu0 0
  %1117 = vmatprep.mubr.bf16.mxu0 0
  %1118 = vmatmul.mubr.bf16.gmra.mxu0 %v1083
  %v1119 = vpop.f32.mrf.mxu0
  %v1120 = vadd.f32 0.0, %v1119
  %v1121 = vpop.f32.mrf.mxu0
  %v1122 = vpop.f32.mrf.mxu0
  %v1123 = vadd.f32 0.0, %v1122
  %v1124 = vpop.f32.mrf.mxu0
  %1125 = vdwg.mxu0
  %1126 = vrot.lane.b32.xlu0 %v256, 64
  %v1127 = vpop.permute.xlu0 %1126
  %v1130 = vsel %vm659, %v842, 0
  %1132 = vmatprep.subr.bf16.mxu0 0
  %1133 = vmatpush1.bf16.msra.mxu0 0
  %1134 = vmatprep.subr.bf16.mxu0 0
  %1135 = vmatpush1.bf16.msra.mxu0 0
  %1136 = vmatprep.subr.bf16.mxu0 0
  %1137 = vmatpush1.bf16.msra.mxu0 0
  %1138 = vmatprep.subr.bf16.mxu0 0
  %1139 = vmatpush1.bf16.msra.mxu0 0
  %1140 = vmatprep.subr.bf16.mxu0 0
  %1141 = vmatpush1.bf16.msra.mxu0 0
  %1142 = vmatprep.subr.bf16.mxu0 0
  %1143 = vmatpush1.bf16.msra.mxu0 0
  %1144 = vmatprep.subr.bf16.mxu0 0
  %1145 = vmatpush1.bf16.msra.mxu0 0
  %1146 = vmatprep.subr.bf16.mxu0 0
  %1147 = vmatpush1.bf16.msra.mxu0 %v1127
  %1148 = vmatprep.subr.bf16.mxu0 0
  %1149 = vmatpush2.bf16.msra.mxu0 0
  %1150 = vmatprep.subr.bf16.mxu0 0
  %1151 = vmatpush2.bf16.msra.mxu0 0
  %1152 = vmatprep.subr.bf16.mxu0 0
  %1153 = vmatpush2.bf16.msra.mxu0 0
  %1154 = vmatprep.subr.bf16.mxu0 0
  %1155 = vmatpush2.bf16.msra.mxu0 0
  %1156 = vmatprep.subr.bf16.mxu0 0
  %1157 = vmatpush2.bf16.msra.mxu0 0
  %1158 = vmatprep.subr.bf16.mxu0 0
  %1159 = vmatpush2.bf16.msra.mxu0 0
  %1160 = vmatprep.subr.bf16.mxu0 0
  %1161 = vmatpush2.bf16.msra.mxu0 0
  %1162 = vmatprep.subr.bf16.mxu0 0
  %1163 = vmatpush2.bf16.msra.mxu0 0
  %1164 = vmatprep.mubr.bf16.mxu0 0
  %1165 = vmatmul.mubr.bf16.gmra.mxu0 %v1130
  %v1166 = vpop.f32.mrf.mxu0
  %v1167 = vadd.f32 0.0, %v1166
  %v1168 = vpop.f32.mrf.mxu0
  %v1169 = vpop.f32.mrf.mxu0
  %v1170 = vadd.f32 0.0, %v1169
  %v1171 = vpop.f32.mrf.mxu0
  %1172 = vdwg.mxu0
  %1173 = vrot.lane.b32.xlu0 %v257, 64
  %v1174 = vpop.permute.xlu0 %1173
  %v1177 = vsel %vm659, %v843, 0
  %1179 = vmatprep.subr.bf16.mxu0 0
  %1180 = vmatpush1.bf16.msra.mxu0 0
  %1181 = vmatprep.subr.bf16.mxu0 0
  %1182 = vmatpush1.bf16.msra.mxu0 0
  %1183 = vmatprep.subr.bf16.mxu0 0
  %1184 = vmatpush1.bf16.msra.mxu0 0
  %1185 = vmatprep.subr.bf16.mxu0 0
  %1186 = vmatpush1.bf16.msra.mxu0 0
  %1187 = vmatprep.subr.bf16.mxu0 0
  %1188 = vmatpush1.bf16.msra.mxu0 0
  %1189 = vmatprep.subr.bf16.mxu0 0
  %1190 = vmatpush1.bf16.msra.mxu0 0
  %1191 = vmatprep.subr.bf16.mxu0 0
  %1192 = vmatpush1.bf16.msra.mxu0 0
  %1193 = vmatprep.subr.bf16.mxu0 0
  %1194 = vmatpush1.bf16.msra.mxu0 %v1174
  %1195 = vmatprep.subr.bf16.mxu0 0
  %1196 = vmatpush2.bf16.msra.mxu0 0
  %1197 = vmatprep.subr.bf16.mxu0 0
  %1198 = vmatpush2.bf16.msra.mxu0 0
  %1199 = vmatprep.subr.bf16.mxu0 0
  %1200 = vmatpush2.bf16.msra.mxu0 0
  %1201 = vmatprep.subr.bf16.mxu0 0
  %1202 = vmatpush2.bf16.msra.mxu0 0
  %1203 = vmatprep.subr.bf16.mxu0 0
  %1204 = vmatpush2.bf16.msra.mxu0 0
  %1205 = vmatprep.subr.bf16.mxu0 0
  %1206 = vmatpush2.bf16.msra.mxu0 0
  %1207 = vmatprep.subr.bf16.mxu0 0
  %1208 = vmatpush2.bf16.msra.mxu0 0
  %1209 = vmatprep.subr.bf16.mxu0 0
  %1210 = vmatpush2.bf16.msra.mxu0 0
  %1211 = vmatprep.mubr.bf16.mxu0 0
  %1212 = vmatmul.mubr.bf16.gmra.mxu0 %v1177
  %v1213 = vpop.f32.mrf.mxu0
  %v1214 = vadd.f32 0.0, %v1213
  %v1215 = vpop.f32.mrf.mxu0
  %v1216 = vpop.f32.mrf.mxu0
  %v1217 = vadd.f32 0.0, %v1216
  %v1218 = vpop.f32.mrf.mxu0
  %1219 = vdwg.mxu0
  %1224 = vrot.lane.b32.xlu0 %v979, 8
  %v1225 = vpop.permute.xlu0 %1224
  %1226 = vrot.lane.b32.xlu0 %v982, 8
  %v1227 = vpop.permute.xlu0 %1226
  %1228 = vrot.lane.b32.xlu0 %v1026, 8
  %v1229 = vpop.permute.xlu0 %1228
  %1230 = vrot.lane.b32.xlu0 %v1029, 8
  %v1231 = vpop.permute.xlu0 %1230
  %1240 = vrot.lane.b32.xlu0 %v1073, 16
  %v1241 = vpop.permute.xlu0 %1240
  %1242 = vrot.lane.b32.xlu0 %v1076, 16
  %v1243 = vpop.permute.xlu0 %1242
  %1244 = vrot.lane.b32.xlu0 %v1120, 16
  %v1245 = vpop.permute.xlu0 %1244
  %1246 = vrot.lane.b32.xlu0 %v1123, 16
  %v1247 = vpop.permute.xlu0 %1246
  %1256 = vrot.lane.b32.xlu0 %v1167, 24
  %v1257 = vpop.permute.xlu0 %1256
  %1258 = vrot.lane.b32.xlu0 %v1170, 24
  %v1259 = vpop.permute.xlu0 %1258
  %1260 = vrot.lane.b32.xlu0 %v1214, 24
  %v1261 = vpop.permute.xlu0 %1260
  %1262 = vrot.lane.b32.xlu0 %v1217, 24
  %v1263 = vpop.permute.xlu0 %1262
  %v1268 = vsel %vm261, %v885, %v1225
  %v1269 = vsel %vm261, %v888, %v1227
  %v1270 = vsel %vm261, %v932, %v1229
  %v1271 = vsel %vm261, %v935, %v1231
  %v1272 = vsel %vm659, %v1268, %v1241
  %v1273 = vsel %vm659, %v1269, %v1243
  %v1274 = vsel %vm659, %v1270, %v1245
  %v1275 = vsel %vm659, %v1271, %v1247
  %vm1276 = vcmask 195584
  %v1277 = vsel %vm1276, %v1272, %v1257
  %v1278 = vsel %vm1276, %v1273, %v1259
  %v1279 = vsel %vm1276, %v1274, %v1261
  %v1280 = vsel %vm1276, %v1275, %v1263
  %v1281 = vpack.c.bf16 %v1278, %v1277
  %v1282 = vpack.c.bf16 %v1280, %v1279
  %v1283 = vlaneseq
  %v1284 = vshrl.u32 %v1283, 7
  %v1285 = vsub.s32 1, %v1284
  %v1286 = vrot.slane %v136, %v1285
  %v1287 = vunpack.c.h.b16 %v120
  %v1288 = vunpack.c.h.b16 %v122
  %v1289 = vunpack.c.h.b16 %v124
  %v1290 = vunpack.c.h.b16 %v126
  %v1291 = vpack.c.b16 %v1288, %v1287
  %v1292 = vpack.c.b16 %v1290, %v1289
  %v1296 = vsel %vm50, %v1281, 0
  %v1299 = vsel %vm50, %v1282, 0
  %1301 = vmatprep.subr.bf16.mxu0 0
  %1302 = vmatpush1.bf16.msra.mxu0 0
  %1303 = vmatprep.subr.bf16.mxu0 0
  %1304 = vmatpush1.bf16.msra.mxu0 0
  %1305 = vmatprep.subr.bf16.mxu0 0
  %1306 = vmatpush1.bf16.msra.mxu0 0
  %1307 = vmatprep.subr.bf16.mxu0 0
  %1308 = vmatpush1.bf16.msra.mxu0 0
  %1309 = vmatprep.subr.bf16.mxu0 0
  %1310 = vmatpush1.bf16.msra.mxu0 0
  %1311 = vmatprep.subr.bf16.mxu0 0
  %1312 = vmatpush1.bf16.msra.mxu0 0
  %1313 = vmatprep.subr.bf16.mxu0 0
  %1314 = vmatpush1.bf16.msra.mxu0 %v1292
  %1315 = vmatprep.subr.bf16.mxu0 0
  %1316 = vmatpush1.bf16.msra.mxu0 %v1291
  %1317 = vmatprep.subr.bf16.mxu0 0
  %1318 = vmatpush2.bf16.msra.mxu0 0
  %1319 = vmatprep.subr.bf16.mxu0 0
  %1320 = vmatpush2.bf16.msra.mxu0 0
  %1321 = vmatprep.subr.bf16.mxu0 0
  %1322 = vmatpush2.bf16.msra.mxu0 0
  %1323 = vmatprep.subr.bf16.mxu0 0
  %1324 = vmatpush2.bf16.msra.mxu0 0
  %1325 = vmatprep.subr.bf16.mxu0 0
  %1326 = vmatpush2.bf16.msra.mxu0 0
  %1327 = vmatprep.subr.bf16.mxu0 0
  %1328 = vmatpush2.bf16.msra.mxu0 0
  %1329 = vmatprep.subr.bf16.mxu0 0
  %1330 = vmatpush2.bf16.msra.mxu0 0
  %1331 = vmatprep.subr.bf16.mxu0 0
  %1332 = vmatpush2.bf16.msra.mxu0 0
  %1333 = vmatprep.mubr.bf16.mxu0 0
  %1334 = vmatmul.mubr.bf16.gmra.mxu0 %v1296
  %v1335 = vpop.f32.mrf.mxu0
  %v1336 = vadd.f32 %v1286, %v1335
  %v1337 = vpop.f32.mrf.mxu0
  %v1338 = vpop.f32.mrf.mxu0
  %v1339 = vadd.f32 %v1286, %v1338
  %v1340 = vpop.f32.mrf.mxu0
  %1341 = vmatprep.mubr.bf16.mxu0 0
  %1342 = vmatmul.mubr.bf16.gmra.mxu0 %v1299
  %v1343 = vpop.f32.mrf.mxu0
  %v1344 = vadd.f32 %v1286, %v1343
  %v1345 = vpop.f32.mrf.mxu0
  %v1346 = vpop.f32.mrf.mxu0
  %v1347 = vadd.f32 %v1286, %v1346
  %v1348 = vpop.f32.mrf.mxu0
  %1349 = vdwg.mxu0
  %v1350 = vadd.f32 %v116, %v1336
  %v1351 = vadd.f32 %v117, %v1339
  %v1352 = vadd.f32 %v118, %v1344
  %v1353 = vadd.f32 %v119, %v1347
  %v1354 = vsel %vm50, %v1350, 0.0
  %1355 = vadd.xlane.f32.xlu0 %v1354
  %v1356 = vpop.xlane.xlu0 %1355
  %v1357 = vsel %vm50, %v1351, 0.0
  %1358 = vadd.xlane.f32.xlu0 %v1357
  %v1359 = vpop.xlane.xlu0 %1358
  %v1360 = vsel %vm50, %v1352, 0.0
  %1361 = vadd.xlane.f32.xlu0 %v1360
  %v1362 = vpop.xlane.xlu0 %1361
  %v1363 = vsel %vm50, %v1353, 0.0
  %1364 = vadd.xlane.f32.xlu0 %v1363
  %v1365 = vpop.xlane.xlu0 %1364
  %v1366 = vmul.f32 %v1356, %v63
  %v1367 = vmul.f32 %v1359, %v63
  %v1368 = vmul.f32 %v1362, %v63
  %v1369 = vmul.f32 %v1365, %v63
  %v1370 = vsub.f32 %v1350, %v1366
  %v1371 = vsub.f32 %v1351, %v1367
  %v1372 = vsub.f32 %v1352, %v1368
  %v1373 = vsub.f32 %v1353, %v1369
  %v1374 = vmul.f32 %v1370, %v1370
  %v1375 = vmul.f32 %v1371, %v1371
  %v1376 = vmul.f32 %v1372, %v1372
  %v1377 = vmul.f32 %v1373, %v1373
  %v1378 = vsel %vm50, %v1374, 0.0
  %1379 = vadd.xlane.f32.xlu0 %v1378
  %v1380 = vpop.xlane.xlu0 %1379
  %v1381 = vsel %vm50, %v1375, 0.0
  %1382 = vadd.xlane.f32.xlu0 %v1381
  %v1383 = vpop.xlane.xlu0 %1382
  %v1384 = vsel %vm50, %v1376, 0.0
  %1385 = vadd.xlane.f32.xlu0 %v1384
  %v1386 = vpop.xlane.xlu0 %1385
  %v1387 = vsel %vm50, %v1377, 0.0
  %1388 = vadd.xlane.f32.xlu0 %v1387
  %v1389 = vpop.xlane.xlu0 %1388
  %v1390 = vmul.f32 %v1380, %v63
  %v1391 = vmul.f32 %v1383, %v63
  %v1392 = vmul.f32 %v1386, %v63
  %v1393 = vmul.f32 %v1389, %v63
  %v1394 = vadd.f32 %v1390, 1e-05
  %v1395 = vadd.f32 %v1391, 1e-05
  %v1396 = vadd.f32 %v1392, 1e-05
  %v1397 = vadd.f32 %v1393, 1e-05
  %v1398 = vrsqrt.pop %v1394
  %v1399 = vrsqrt.pop %v1395
  %v1400 = vrsqrt.pop %v1396
  %v1401 = vrsqrt.pop %v1397
  %v1402 = vmul.f32 %v1370, %v1398
  %v1403 = vmul.f32 %v1371, %v1399
  %v1404 = vmul.f32 %v1372, %v1400
  %v1405 = vmul.f32 %v1373, %v1401
  %v1406 = vlaneseq
  %v1407 = vshrl.u32 %v1406, 7
  %v1408 = vsub.s32 4, %v1407
  %v1409 = vrot.slane %v136, %v1408
  %v1410 = vmul.f32 %v1402, %v1409
  %v1411 = vmul.f32 %v1403, %v1409
  %v1412 = vmul.f32 %v1404, %v1409
  %v1413 = vmul.f32 %v1405, %v1409
  %v1414 = vlaneseq
  %v1415 = vshrl.u32 %v1414, 7
  %v1416 = vsub.s32 5, %v1415
  %v1417 = vrot.slane %v136, %v1416
  %v1418 = vadd.f32 %v1410, %v1417
  %v1419 = vadd.f32 %v1411, %v1417
  %v1420 = vadd.f32 %v1412, %v1417
  %v1421 = vadd.f32 %v1413, %v1417
  %v1422 = vpack.c.bf16 %v1419, %v1418
  %v1423 = vpack.c.bf16 %v1421, %v1420
  %v1424 = vlaneseq
  %v1425 = vshrl.u32 %v1424, 7
  %v1426 = vsub.s32 2, %v1425
  %v1427 = vrot.slane %v136, %v1426
  %v1432 = vunpack.c.l.b16 %v121
  %v1433 = vunpack.c.l.b16 %v123
  %v1434 = vunpack.c.l.b16 %v125
  %v1435 = vunpack.c.l.b16 %v127
  %v1436 = vpack.c.b16 %v1433, %v1432
  %v1437 = vpack.c.b16 %v1435, %v1434
  %v1441 = vsel %vm50, %v1422, 0
  %v1444 = vsel %vm50, %v1423, 0
  %1446 = vmatprep.subr.bf16.mxu0 0
  %1447 = vmatpush1.bf16.msra.mxu0 0
  %1448 = vmatprep.subr.bf16.mxu0 0
  %1449 = vmatpush1.bf16.msra.mxu0 0
  %1450 = vmatprep.subr.bf16.mxu0 0
  %1451 = vmatpush1.bf16.msra.mxu0 0
  %1452 = vmatprep.subr.bf16.mxu0 0
  %1453 = vmatpush1.bf16.msra.mxu0 0
  %1454 = vmatprep.subr.bf16.mxu0 0
  %1455 = vmatpush1.bf16.msra.mxu0 0
  %1456 = vmatprep.subr.bf16.mxu0 0
  %1457 = vmatpush1.bf16.msra.mxu0 0
  %1458 = vmatprep.subr.bf16.mxu0 0
  %1459 = vmatpush1.bf16.msra.mxu0 %v1437
  %1460 = vmatprep.subr.bf16.mxu0 0
  %1461 = vmatpush1.bf16.msra.mxu0 %v1436
  %1462 = vmatprep.subr.bf16.mxu0 0
  %1463 = vmatpush2.bf16.msra.mxu0 0
  %1464 = vmatprep.subr.bf16.mxu0 0
  %1465 = vmatpush2.bf16.msra.mxu0 0
  %1466 = vmatprep.subr.bf16.mxu0 0
  %1467 = vmatpush2.bf16.msra.mxu0 0
  %1468 = vmatprep.subr.bf16.mxu0 0
  %1469 = vmatpush2.bf16.msra.mxu0 0
  %1470 = vmatprep.subr.bf16.mxu0 0
  %1471 = vmatpush2.bf16.msra.mxu0 0
  %1472 = vmatprep.subr.bf16.mxu0 0
  %1473 = vmatpush2.bf16.msra.mxu0 0
  %1474 = vmatprep.subr.bf16.mxu0 0
  %1475 = vmatpush2.bf16.msra.mxu0 0
  %1476 = vmatprep.subr.bf16.mxu0 0
  %1477 = vmatpush2.bf16.msra.mxu0 0
  %1478 = vmatprep.mubr.bf16.mxu0 0
  %1479 = vmatmul.mubr.bf16.gmra.mxu0 %v1441
  %v1480 = vpop.f32.mrf.mxu0
  %v1481 = vadd.f32 %v1427, %v1480
  %v1482 = vpop.f32.mrf.mxu0
  %v1483 = vpop.f32.mrf.mxu0
  %v1484 = vadd.f32 %v1427, %v1483
  %v1485 = vpop.f32.mrf.mxu0
  %1486 = vmatprep.mubr.bf16.mxu0 0
  %1487 = vmatmul.mubr.bf16.gmra.mxu0 %v1444
  %v1488 = vpop.f32.mrf.mxu0
  %v1489 = vadd.f32 %v1427, %v1488
  %v1490 = vpop.f32.mrf.mxu0
  %v1491 = vpop.f32.mrf.mxu0
  %v1492 = vadd.f32 %v1427, %v1491
  %v1493 = vpop.f32.mrf.mxu0
  %1494 = vdwg.mxu0
  %v1495 = vmax.f32 %v1481, 0.0
  %v1496 = vmax.f32 %v1484, 0.0
  %v1497 = vmax.f32 %v1489, 0.0
  %v1498 = vmax.f32 %v1492, 0.0
  %v1499 = vpack.c.bf16 %v1496, %v1495
  %v1500 = vpack.c.bf16 %v1498, %v1497
  %v1501 = vlaneseq
  %v1502 = vshrl.u32 %v1501, 7
  %v1503 = vsub.s32 3, %v1502
  %v1504 = vrot.slane %v136, %v1503
  %v1513 = vunpack.c.l.b16 %v128
  %v1514 = vunpack.c.l.b16 %v129
  %v1515 = vunpack.c.l.b16 %v130
  %v1516 = vunpack.c.l.b16 %v131
  %v1517 = vunpack.c.l.b16 %v132
  %v1518 = vunpack.c.l.b16 %v133
  %v1519 = vunpack.c.l.b16 %v134
  %v1520 = vunpack.c.l.b16 %v135
  %v1521 = vpack.c.b16 %v1514, %v1513
  %v1522 = vpack.c.b16 %v1516, %v1515
  %v1523 = vpack.c.b16 %v1518, %v1517
  %v1524 = vpack.c.b16 %v1520, %v1519
  %vm1529 = vcmask 523264
  %v1531 = vsel %vm1529, %v1499, 0
  %v1534 = vsel %vm1529, %v1500, 0
  %1536 = vmatprep.subr.bf16.mxu0 0
  %1537 = vmatpush1.bf16.msra.mxu0 0
  %1538 = vmatprep.subr.bf16.mxu0 0
  %1539 = vmatpush1.bf16.msra.mxu0 0
  %1540 = vmatprep.subr.bf16.mxu0 0
  %1541 = vmatpush1.bf16.msra.mxu0 0
  %1542 = vmatprep.subr.bf16.mxu0 0
  %1543 = vmatpush1.bf16.msra.mxu0 0
  %1544 = vmatprep.subr.bf16.mxu0 0
  %1545 = vmatpush1.bf16.msra.mxu0 %v1524
  %1546 = vmatprep.subr.bf16.mxu0 0
  %1547 = vmatpush1.bf16.msra.mxu0 %v1523
  %1548 = vmatprep.subr.bf16.mxu0 0
  %1549 = vmatpush1.bf16.msra.mxu0 %v1522
  %1550 = vmatprep.subr.bf16.mxu0 0
  %1551 = vmatpush1.bf16.msra.mxu0 %v1521
  %1552 = vmatprep.subr.bf16.mxu0 0
  %1553 = vmatpush2.bf16.msra.mxu0 0
  %1554 = vmatprep.subr.bf16.mxu0 0
  %1555 = vmatpush2.bf16.msra.mxu0 0
  %1556 = vmatprep.subr.bf16.mxu0 0
  %1557 = vmatpush2.bf16.msra.mxu0 0
  %1558 = vmatprep.subr.bf16.mxu0 0
  %1559 = vmatpush2.bf16.msra.mxu0 0
  %1560 = vmatprep.subr.bf16.mxu0 0
  %1561 = vmatpush2.bf16.msra.mxu0 0
  %1562 = vmatprep.subr.bf16.mxu0 0
  %1563 = vmatpush2.bf16.msra.mxu0 0
  %1564 = vmatprep.subr.bf16.mxu0 0
  %1565 = vmatpush2.bf16.msra.mxu0 0
  %1566 = vmatprep.subr.bf16.mxu0 0
  %1567 = vmatpush2.bf16.msra.mxu0 0
  %1568 = vmatprep.mubr.bf16.mxu0 0
  %1569 = vmatmul.mubr.bf16.gmra.mxu0 %v1531
  %v1570 = vpop.f32.mrf.mxu0
  %v1571 = vadd.f32 %v1504, %v1570
  %v1572 = vpop.f32.mrf.mxu0
  %v1573 = vpop.f32.mrf.mxu0
  %v1574 = vadd.f32 %v1504, %v1573
  %v1575 = vpop.f32.mrf.mxu0
  %1576 = vmatprep.mubr.bf16.mxu0 0
  %1577 = vmatmul.mubr.bf16.gmra.mxu0 %v1534
  %v1578 = vpop.f32.mrf.mxu0
  %v1579 = vadd.f32 %v1504, %v1578
  %v1580 = vpop.f32.mrf.mxu0
  %v1581 = vpop.f32.mrf.mxu0
  %v1582 = vadd.f32 %v1504, %v1581
  %v1583 = vpop.f32.mrf.mxu0
  %1584 = vdwg.mxu0
  %v1585 = vadd.f32 %v1418, %v1571
  %v1586 = vadd.f32 %v1419, %v1574
  %v1587 = vadd.f32 %v1420, %v1579
  %v1588 = vadd.f32 %v1421, %v1582
  %v1589 = vsel %vm50, %v1585, 0.0
  %1590 = vadd.xlane.f32.xlu0 %v1589
  %v1591 = vpop.xlane.xlu0 %1590
  %v1592 = vsel %vm50, %v1586, 0.0
  %1593 = vadd.xlane.f32.xlu0 %v1592
  %v1594 = vpop.xlane.xlu0 %1593
  %v1595 = vsel %vm50, %v1587, 0.0
  %1596 = vadd.xlane.f32.xlu0 %v1595
  %v1597 = vpop.xlane.xlu0 %1596
  %v1598 = vsel %vm50, %v1588, 0.0
  %1599 = vadd.xlane.f32.xlu0 %v1598
  %v1600 = vpop.xlane.xlu0 %1599
  %v1601 = vmul.f32 %v1591, %v63
  %v1602 = vmul.f32 %v1594, %v63
  %v1603 = vmul.f32 %v1597, %v63
  %v1604 = vmul.f32 %v1600, %v63
  %v1605 = vsub.f32 %v1585, %v1601
  %v1606 = vsub.f32 %v1586, %v1602
  %v1607 = vsub.f32 %v1587, %v1603
  %v1608 = vsub.f32 %v1588, %v1604
  %v1609 = vmul.f32 %v1605, %v1605
  %v1610 = vmul.f32 %v1606, %v1606
  %v1611 = vmul.f32 %v1607, %v1607
  %v1612 = vmul.f32 %v1608, %v1608
  %v1613 = vsel %vm50, %v1609, 0.0
  %1614 = vadd.xlane.f32.xlu0 %v1613
  %v1615 = vpop.xlane.xlu0 %1614
  %v1616 = vsel %vm50, %v1610, 0.0
  %1617 = vadd.xlane.f32.xlu0 %v1616
  %v1618 = vpop.xlane.xlu0 %1617
  %v1619 = vsel %vm50, %v1611, 0.0
  %1620 = vadd.xlane.f32.xlu0 %v1619
  %v1621 = vpop.xlane.xlu0 %1620
  %v1622 = vsel %vm50, %v1612, 0.0
  %1623 = vadd.xlane.f32.xlu0 %v1622
  %v1624 = vpop.xlane.xlu0 %1623
  %v1625 = vmul.f32 %v1615, %v63
  %v1626 = vmul.f32 %v1618, %v63
  %v1627 = vmul.f32 %v1621, %v63
  %v1628 = vmul.f32 %v1624, %v63
  %v1629 = vadd.f32 %v1625, 1e-05
  %v1630 = vadd.f32 %v1626, 1e-05
  %v1631 = vadd.f32 %v1627, 1e-05
  %v1632 = vadd.f32 %v1628, 1e-05
  %v1633 = vrsqrt.pop %v1629
  %v1634 = vrsqrt.pop %v1630
  %v1635 = vrsqrt.pop %v1631
  %v1636 = vrsqrt.pop %v1632
  %v1637 = vmul.f32 %v1605, %v1633
  %v1638 = vmul.f32 %v1606, %v1634
  %v1639 = vmul.f32 %v1607, %v1635
  %v1640 = vmul.f32 %v1608, %v1636
  %v1641 = vlaneseq
  %v1642 = vshrl.u32 %v1641, 7
  %v1643 = vsub.s32 6, %v1642
  %v1644 = vrot.slane %v136, %v1643
  %v1645 = vmul.f32 %v1637, %v1644
  %v1646 = vmul.f32 %v1638, %v1644
  %v1647 = vmul.f32 %v1639, %v1644
  %v1648 = vmul.f32 %v1640, %v1644
  %v1649 = vlaneseq
  %v1650 = vshrl.u32 %v1649, 7
  %v1651 = vsub.s32 7, %v1650
  %v1652 = vrot.slane %v136, %v1651
  %v1653 = vadd.f32 %v1645, %v1652
  %v1654 = vadd.f32 %v1646, %v1652
  %v1655 = vadd.f32 %v1647, %v1652
  %v1656 = vadd.f32 %v1648, %v1652
  %s1657 = scalar_lea.vmem %s2, 48
  %v1658 = vld [vmem:[%s1657] sm:$0xff]
  %v1659 = vld [vmem:[%s1657 + $0x8] sm:$0xf]
  %v1660 = vld [vmem:[%s1657 + $0xc] sm:$0xff]
  %v1661 = vld [vmem:[%s1657 + $0x14] sm:$0xf]
  %v1662 = vld [vmem:[%s1657 + $0x18] sm:$0xff]
  %v1663 = vld [vmem:[%s1657 + $0x20] sm:$0xf]
  %v1664 = vld [vmem:[%s1657 + $0x24] sm:$0xff]
  %v1665 = vld [vmem:[%s1657 + $0x2c] sm:$0xf]
  %s1666 = scalar_lea.vmem %s3, 32
  %v1667 = vld [vmem:[%s1666] sm:$0xf]
  %v1668 = vld [vmem:[%s1666 + $0x4] sm:$0xf]
  %v1669 = vld [vmem:[%s1666 + $0x8] sm:$0xf]
  %v1670 = vld [vmem:[%s1666 + $0xc] sm:$0xf]
  %v1671 = vld [vmem:[%s1666 + $0x10] sm:$0xf]
  %v1672 = vld [vmem:[%s1666 + $0x14] sm:$0xf]
  %v1673 = vld [vmem:[%s1666 + $0x18] sm:$0xf]
  %v1674 = vld [vmem:[%s1666 + $0x1c] sm:$0xf]
  %s1675 = scalar_lea.vmem %s4, 8
  %v1676 = vld [vmem:[%s1675] sm:$0xff]
  %v1677 = vpack.c.bf16 %v1654, %v1653
  %v1678 = vpack.c.bf16 %v1656, %v1655
  %v1679 = vlaneseq
  %v1680 = vshrl.u32 %v1679, 7
  %v1681 = vsub.s32 0, %v1680
  %v1682 = vrot.slane %v1676, %v1681
  %v1687 = vunpack.c.l.b16 %v1658
  %v1688 = vunpack.c.l.b16 %v1660
  %v1689 = vunpack.c.l.b16 %v1662
  %v1690 = vunpack.c.l.b16 %v1664
  %v1691 = vpack.c.b16 %v1688, %v1687
  %v1692 = vpack.c.b16 %v1690, %v1689
  %v1696 = vsel %vm50, %v1677, 0
  %v1699 = vsel %vm50, %v1678, 0
  %1701 = vmatprep.subr.bf16.mxu0 0
  %1702 = vmatpush1.bf16.msra.mxu0 0
  %1703 = vmatprep.subr.bf16.mxu0 0
  %1704 = vmatpush1.bf16.msra.mxu0 0
  %1705 = vmatprep.subr.bf16.mxu0 0
  %1706 = vmatpush1.bf16.msra.mxu0 0
  %1707 = vmatprep.subr.bf16.mxu0 0
  %1708 = vmatpush1.bf16.msra.mxu0 0
  %1709 = vmatprep.subr.bf16.mxu0 0
  %1710 = vmatpush1.bf16.msra.mxu0 0
  %1711 = vmatprep.subr.bf16.mxu0 0
  %1712 = vmatpush1.bf16.msra.mxu0 0
  %1713 = vmatprep.subr.bf16.mxu0 0
  %1714 = vmatpush1.bf16.msra.mxu0 %v1692
  %1715 = vmatprep.subr.bf16.mxu0 0
  %1716 = vmatpush1.bf16.msra.mxu0 %v1691
  %1717 = vmatprep.subr.bf16.mxu0 0
  %1718 = vmatpush2.bf16.msra.mxu0 0
  %1719 = vmatprep.subr.bf16.mxu0 0
  %1720 = vmatpush2.bf16.msra.mxu0 0
  %1721 = vmatprep.subr.bf16.mxu0 0
  %1722 = vmatpush2.bf16.msra.mxu0 0
  %1723 = vmatprep.subr.bf16.mxu0 0
  %1724 = vmatpush2.bf16.msra.mxu0 0
  %1725 = vmatprep.subr.bf16.mxu0 0
  %1726 = vmatpush2.bf16.msra.mxu0 0
  %1727 = vmatprep.subr.bf16.mxu0 0
  %1728 = vmatpush2.bf16.msra.mxu0 0
  %1729 = vmatprep.subr.bf16.mxu0 0
  %1730 = vmatpush2.bf16.msra.mxu0 0
  %1731 = vmatprep.subr.bf16.mxu0 0
  %1732 = vmatpush2.bf16.msra.mxu0 0
  %1733 = vmatprep.mubr.bf16.mxu0 0
  %1734 = vmatmul.mubr.bf16.gmra.mxu0 %v1696
  %v1735 = vpop.f32.mrf.mxu0
  %v1736 = vadd.f32 %v1682, %v1735
  %v1737 = vpop.f32.mrf.mxu0
  %v1738 = vpop.f32.mrf.mxu0
  %v1739 = vadd.f32 %v1682, %v1738
  %v1740 = vpop.f32.mrf.mxu0
  %1741 = vmatprep.mubr.bf16.mxu0 0
  %1742 = vmatmul.mubr.bf16.gmra.mxu0 %v1699
  %v1743 = vpop.f32.mrf.mxu0
  %v1744 = vadd.f32 %v1682, %v1743
  %v1745 = vpop.f32.mrf.mxu0
  %v1746 = vpop.f32.mrf.mxu0
  %v1747 = vadd.f32 %v1682, %v1746
  %v1748 = vpop.f32.mrf.mxu0
  %1749 = vdwg.mxu0
  %1754 = vrot.lane.b32.xlu0 %v1736, 120
  %v1755 = vpop.permute.xlu0 %1754
  %1756 = vrot.lane.b32.xlu0 %v1739, 120
  %v1757 = vpop.permute.xlu0 %1756
  %1758 = vrot.lane.b32.xlu0 %v1744, 120
  %v1759 = vpop.permute.xlu0 %1758
  %1760 = vrot.lane.b32.xlu0 %v1747, 120
  %v1761 = vpop.permute.xlu0 %1760
  %1766 = vrot.lane.b32.xlu0 %v1736, 112
  %v1767 = vpop.permute.xlu0 %1766
  %1768 = vrot.lane.b32.xlu0 %v1739, 112
  %v1769 = vpop.permute.xlu0 %1768
  %1770 = vrot.lane.b32.xlu0 %v1744, 112
  %v1771 = vpop.permute.xlu0 %1770
  %1772 = vrot.lane.b32.xlu0 %v1747, 112
  %v1773 = vpop.permute.xlu0 %1772
  %1778 = vrot.lane.b32.xlu0 %v1736, 104
  %v1779 = vpop.permute.xlu0 %1778
  %1780 = vrot.lane.b32.xlu0 %v1739, 104
  %v1781 = vpop.permute.xlu0 %1780
  %1782 = vrot.lane.b32.xlu0 %v1744, 104
  %v1783 = vpop.permute.xlu0 %1782
  %1784 = vrot.lane.b32.xlu0 %v1747, 104
  %v1785 = vpop.permute.xlu0 %1784
  %v1790 = vpack.c.bf16 %v1739, %v1736
  %v1791 = vpack.c.bf16 %v1747, %v1744
  %v1792 = vpack.c.bf16 %v1757, %v1755
  %v1793 = vpack.c.bf16 %v1761, %v1759
  %v1794 = vpack.c.bf16 %v1769, %v1767
  %v1795 = vpack.c.bf16 %v1773, %v1771
  %v1796 = vpack.c.bf16 %v1781, %v1779
  %v1797 = vpack.c.bf16 %v1785, %v1783
  %1799 = vrot.lane.b32.xlu0 %v1790, 96
  %v1800 = vpop.permute.xlu0 %1799
  %v1802 = vsel %vm261, %v1790, 0
  %v1805 = vsel %vm261, %v1800, 0
  %1807 = vmatprep.subr.bf16.mxu0 0
  %1808 = vmatpush1.bf16.xpose.msra.mxu0 0
  %1809 = vmatprep.subr.bf16.mxu0 0
  %1810 = vmatpush1.bf16.xpose.msra.mxu0 0
  %1811 = vmatprep.subr.bf16.mxu0 0
  %1812 = vmatpush1.bf16.xpose.msra.mxu0 0
  %1813 = vmatprep.subr.bf16.mxu0 0
  %1814 = vmatpush1.bf16.xpose.msra.mxu0 0
  %1815 = vmatprep.subr.bf16.mxu0 0
  %1816 = vmatpush1.bf16.xpose.msra.mxu0 0
  %1817 = vmatprep.subr.bf16.mxu0 0
  %1818 = vmatpush1.bf16.xpose.msra.mxu0 0
  %1819 = vmatprep.subr.bf16.mxu0 0
  %1820 = vmatpush1.bf16.xpose.msra.mxu0 0
  %1821 = vmatprep.subr.bf16.mxu0 0
  %1822 = vmatpush1.bf16.xpose.msra.mxu0 %v1805
  %1823 = vmatprep.subr.bf16.mxu0 0
  %1824 = vmatpush2.bf16.xpose.msra.mxu0 0
  %1825 = vmatprep.subr.bf16.mxu0 0
  %1826 = vmatpush2.bf16.xpose.msra.mxu0 0
  %1827 = vmatprep.subr.bf16.mxu0 0
  %1828 = vmatpush2.bf16.xpose.msra.mxu0 0
  %1829 = vmatprep.subr.bf16.mxu0 0
  %1830 = vmatpush2.bf16.xpose.msra.mxu0 0
  %1831 = vmatprep.subr.bf16.mxu0 0
  %1832 = vmatpush2.bf16.xpose.msra.mxu0 0
  %1833 = vmatprep.subr.bf16.mxu0 0
  %1834 = vmatpush2.bf16.xpose.msra.mxu0 0
  %1835 = vmatprep.subr.bf16.mxu0 0
  %1836 = vmatpush2.bf16.xpose.msra.mxu0 0
  %1837 = vmatprep.subr.bf16.mxu0 0
  %1838 = vmatpush2.bf16.xpose.msra.mxu0 0
  %1839 = vmatprep.mubr.bf16.mxu0 0
  %1840 = vmatmul.mubr.bf16.gmra.mxu0 %v1802
  %v1841 = vpop.f32.mrf.mxu0
  %v1842 = vadd.f32 %v34, %v1841
  %v1843 = vpop.f32.mrf.mxu0
  %v1844 = vpop.f32.mrf.mxu0
  %v1845 = vadd.f32 %v35, %v1844
  %v1846 = vpop.f32.mrf.mxu0
  %1847 = vdwg.mxu0
  %1849 = vrot.lane.b32.xlu0 %v1791, 96
  %v1850 = vpop.permute.xlu0 %1849
  %v1852 = vsel %vm261, %v1791, 0
  %v1855 = vsel %vm261, %v1850, 0
  %1857 = vmatprep.subr.bf16.mxu0 0
  %1858 = vmatpush1.bf16.xpose.msra.mxu0 0
  %1859 = vmatprep.subr.bf16.mxu0 0
  %1860 = vmatpush1.bf16.xpose.msra.mxu0 0
  %1861 = vmatprep.subr.bf16.mxu0 0
  %1862 = vmatpush1.bf16.xpose.msra.mxu0 0
  %1863 = vmatprep.subr.bf16.mxu0 0
  %1864 = vmatpush1.bf16.xpose.msra.mxu0 0
  %1865 = vmatprep.subr.bf16.mxu0 0
  %1866 = vmatpush1.bf16.xpose.msra.mxu0 0
  %1867 = vmatprep.subr.bf16.mxu0 0
  %1868 = vmatpush1.bf16.xpose.msra.mxu0 0
  %1869 = vmatprep.subr.bf16.mxu0 0
  %1870 = vmatpush1.bf16.xpose.msra.mxu0 0
  %1871 = vmatprep.subr.bf16.mxu0 0
  %1872 = vmatpush1.bf16.xpose.msra.mxu0 %v1855
  %1873 = vmatprep.subr.bf16.mxu0 0
  %1874 = vmatpush2.bf16.xpose.msra.mxu0 0
  %1875 = vmatprep.subr.bf16.mxu0 0
  %1876 = vmatpush2.bf16.xpose.msra.mxu0 0
  %1877 = vmatprep.subr.bf16.mxu0 0
  %1878 = vmatpush2.bf16.xpose.msra.mxu0 0
  %1879 = vmatprep.subr.bf16.mxu0 0
  %1880 = vmatpush2.bf16.xpose.msra.mxu0 0
  %1881 = vmatprep.subr.bf16.mxu0 0
  %1882 = vmatpush2.bf16.xpose.msra.mxu0 0
  %1883 = vmatprep.subr.bf16.mxu0 0
  %1884 = vmatpush2.bf16.xpose.msra.mxu0 0
  %1885 = vmatprep.subr.bf16.mxu0 0
  %1886 = vmatpush2.bf16.xpose.msra.mxu0 0
  %1887 = vmatprep.subr.bf16.mxu0 0
  %1888 = vmatpush2.bf16.xpose.msra.mxu0 0
  %1889 = vmatprep.mubr.bf16.mxu0 0
  %1890 = vmatmul.mubr.bf16.gmra.mxu0 %v1852
  %v1891 = vpop.f32.mrf.mxu0
  %v1892 = vadd.f32 %v36, %v1891
  %v1893 = vpop.f32.mrf.mxu0
  %v1894 = vpop.f32.mrf.mxu0
  %v1895 = vadd.f32 %v37, %v1894
  %v1896 = vpop.f32.mrf.mxu0
  %1897 = vdwg.mxu0
  %1899 = vrot.lane.b32.xlu0 %v1792, 96
  %v1900 = vpop.permute.xlu0 %1899
  %v1902 = vsel %vm261, %v1792, 0
  %v1905 = vsel %vm261, %v1900, 0
  %1907 = vmatprep.subr.bf16.mxu0 0
  %1908 = vmatpush1.bf16.xpose.msra.mxu0 0
  %1909 = vmatprep.subr.bf16.mxu0 0
  %1910 = vmatpush1.bf16.xpose.msra.mxu0 0
  %1911 = vmatprep.subr.bf16.mxu0 0
  %1912 = vmatpush1.bf16.xpose.msra.mxu0 0
  %1913 = vmatprep.subr.bf16.mxu0 0
  %1914 = vmatpush1.bf16.xpose.msra.mxu0 0
  %1915 = vmatprep.subr.bf16.mxu0 0
  %1916 = vmatpush1.bf16.xpose.msra.mxu0 0
  %1917 = vmatprep.subr.bf16.mxu0 0
  %1918 = vmatpush1.bf16.xpose.msra.mxu0 0
  %1919 = vmatprep.subr.bf16.mxu0 0
  %1920 = vmatpush1.bf16.xpose.msra.mxu0 0
  %1921 = vmatprep.subr.bf16.mxu0 0
  %1922 = vmatpush1.bf16.xpose.msra.mxu0 %v1905
  %1923 = vmatprep.subr.bf16.mxu0 0
  %1924 = vmatpush2.bf16.xpose.msra.mxu0 0
  %1925 = vmatprep.subr.bf16.mxu0 0
  %1926 = vmatpush2.bf16.xpose.msra.mxu0 0
  %1927 = vmatprep.subr.bf16.mxu0 0
  %1928 = vmatpush2.bf16.xpose.msra.mxu0 0
  %1929 = vmatprep.subr.bf16.mxu0 0
  %1930 = vmatpush2.bf16.xpose.msra.mxu0 0
  %1931 = vmatprep.subr.bf16.mxu0 0
  %1932 = vmatpush2.bf16.xpose.msra.mxu0 0
  %1933 = vmatprep.subr.bf16.mxu0 0
  %1934 = vmatpush2.bf16.xpose.msra.mxu0 0
  %1935 = vmatprep.subr.bf16.mxu0 0
  %1936 = vmatpush2.bf16.xpose.msra.mxu0 0
  %1937 = vmatprep.subr.bf16.mxu0 0
  %1938 = vmatpush2.bf16.xpose.msra.mxu0 0
  %1939 = vmatprep.mubr.bf16.mxu0 0
  %1940 = vmatmul.mubr.bf16.gmra.mxu0 %v1902
  %v1941 = vpop.f32.mrf.mxu0
  %v1942 = vadd.f32 %v38, %v1941
  %v1943 = vpop.f32.mrf.mxu0
  %v1944 = vpop.f32.mrf.mxu0
  %v1945 = vadd.f32 %v39, %v1944
  %v1946 = vpop.f32.mrf.mxu0
  %1947 = vdwg.mxu0
  %1949 = vrot.lane.b32.xlu0 %v1793, 96
  %v1950 = vpop.permute.xlu0 %1949
  %v1952 = vsel %vm261, %v1793, 0
  %v1955 = vsel %vm261, %v1950, 0
  %1957 = vmatprep.subr.bf16.mxu0 0
  %1958 = vmatpush1.bf16.xpose.msra.mxu0 0
  %1959 = vmatprep.subr.bf16.mxu0 0
  %1960 = vmatpush1.bf16.xpose.msra.mxu0 0
  %1961 = vmatprep.subr.bf16.mxu0 0
  %1962 = vmatpush1.bf16.xpose.msra.mxu0 0
  %1963 = vmatprep.subr.bf16.mxu0 0
  %1964 = vmatpush1.bf16.xpose.msra.mxu0 0
  %1965 = vmatprep.subr.bf16.mxu0 0
  %1966 = vmatpush1.bf16.xpose.msra.mxu0 0
  %1967 = vmatprep.subr.bf16.mxu0 0
  %1968 = vmatpush1.bf16.xpose.msra.mxu0 0
  %1969 = vmatprep.subr.bf16.mxu0 0
  %1970 = vmatpush1.bf16.xpose.msra.mxu0 0
  %1971 = vmatprep.subr.bf16.mxu0 0
  %1972 = vmatpush1.bf16.xpose.msra.mxu0 %v1955
  %1973 = vmatprep.subr.bf16.mxu0 0
  %1974 = vmatpush2.bf16.xpose.msra.mxu0 0
  %1975 = vmatprep.subr.bf16.mxu0 0
  %1976 = vmatpush2.bf16.xpose.msra.mxu0 0
  %1977 = vmatprep.subr.bf16.mxu0 0
  %1978 = vmatpush2.bf16.xpose.msra.mxu0 0
  %1979 = vmatprep.subr.bf16.mxu0 0
  %1980 = vmatpush2.bf16.xpose.msra.mxu0 0
  %1981 = vmatprep.subr.bf16.mxu0 0
  %1982 = vmatpush2.bf16.xpose.msra.mxu0 0
  %1983 = vmatprep.subr.bf16.mxu0 0
  %1984 = vmatpush2.bf16.xpose.msra.mxu0 0
  %1985 = vmatprep.subr.bf16.mxu0 0
  %1986 = vmatpush2.bf16.xpose.msra.mxu0 0
  %1987 = vmatprep.subr.bf16.mxu0 0
  %1988 = vmatpush2.bf16.xpose.msra.mxu0 0
  %1989 = vmatprep.mubr.bf16.mxu0 0
  %1990 = vmatmul.mubr.bf16.gmra.mxu0 %v1952
  %v1991 = vpop.f32.mrf.mxu0
  %v1992 = vadd.f32 %v40, %v1991
  %v1993 = vpop.f32.mrf.mxu0
  %v1994 = vpop.f32.mrf.mxu0
  %v1995 = vadd.f32 %v41, %v1994
  %v1996 = vpop.f32.mrf.mxu0
  %1997 = vdwg.mxu0
  %1999 = vrot.lane.b32.xlu0 %v1794, 96
  %v2000 = vpop.permute.xlu0 %1999
  %v2002 = vsel %vm261, %v1794, 0
  %v2005 = vsel %vm261, %v2000, 0
  %2007 = vmatprep.subr.bf16.mxu0 0
  %2008 = vmatpush1.bf16.xpose.msra.mxu0 0
  %2009 = vmatprep.subr.bf16.mxu0 0
  %2010 = vmatpush1.bf16.xpose.msra.mxu0 0
  %2011 = vmatprep.subr.bf16.mxu0 0
  %2012 = vmatpush1.bf16.xpose.msra.mxu0 0
  %2013 = vmatprep.subr.bf16.mxu0 0
  %2014 = vmatpush1.bf16.xpose.msra.mxu0 0
  %2015 = vmatprep.subr.bf16.mxu0 0
  %2016 = vmatpush1.bf16.xpose.msra.mxu0 0
  %2017 = vmatprep.subr.bf16.mxu0 0
  %2018 = vmatpush1.bf16.xpose.msra.mxu0 0
  %2019 = vmatprep.subr.bf16.mxu0 0
  %2020 = vmatpush1.bf16.xpose.msra.mxu0 0
  %2021 = vmatprep.subr.bf16.mxu0 0
  %2022 = vmatpush1.bf16.xpose.msra.mxu0 %v2005
  %2023 = vmatprep.subr.bf16.mxu0 0
  %2024 = vmatpush2.bf16.xpose.msra.mxu0 0
  %2025 = vmatprep.subr.bf16.mxu0 0
  %2026 = vmatpush2.bf16.xpose.msra.mxu0 0
  %2027 = vmatprep.subr.bf16.mxu0 0
  %2028 = vmatpush2.bf16.xpose.msra.mxu0 0
  %2029 = vmatprep.subr.bf16.mxu0 0
  %2030 = vmatpush2.bf16.xpose.msra.mxu0 0
  %2031 = vmatprep.subr.bf16.mxu0 0
  %2032 = vmatpush2.bf16.xpose.msra.mxu0 0
  %2033 = vmatprep.subr.bf16.mxu0 0
  %2034 = vmatpush2.bf16.xpose.msra.mxu0 0
  %2035 = vmatprep.subr.bf16.mxu0 0
  %2036 = vmatpush2.bf16.xpose.msra.mxu0 0
  %2037 = vmatprep.subr.bf16.mxu0 0
  %2038 = vmatpush2.bf16.xpose.msra.mxu0 0
  %2039 = vmatprep.mubr.bf16.mxu0 0
  %2040 = vmatmul.mubr.bf16.gmra.mxu0 %v2002
  %v2041 = vpop.f32.mrf.mxu0
  %v2042 = vadd.f32 %v42, %v2041
  %v2043 = vpop.f32.mrf.mxu0
  %v2044 = vpop.f32.mrf.mxu0
  %v2045 = vadd.f32 %v43, %v2044
  %v2046 = vpop.f32.mrf.mxu0
  %2047 = vdwg.mxu0
  %2049 = vrot.lane.b32.xlu0 %v1795, 96
  %v2050 = vpop.permute.xlu0 %2049
  %v2052 = vsel %vm261, %v1795, 0
  %v2055 = vsel %vm261, %v2050, 0
  %2057 = vmatprep.subr.bf16.mxu0 0
  %2058 = vmatpush1.bf16.xpose.msra.mxu0 0
  %2059 = vmatprep.subr.bf16.mxu0 0
  %2060 = vmatpush1.bf16.xpose.msra.mxu0 0
  %2061 = vmatprep.subr.bf16.mxu0 0
  %2062 = vmatpush1.bf16.xpose.msra.mxu0 0
  %2063 = vmatprep.subr.bf16.mxu0 0
  %2064 = vmatpush1.bf16.xpose.msra.mxu0 0
  %2065 = vmatprep.subr.bf16.mxu0 0
  %2066 = vmatpush1.bf16.xpose.msra.mxu0 0
  %2067 = vmatprep.subr.bf16.mxu0 0
  %2068 = vmatpush1.bf16.xpose.msra.mxu0 0
  %2069 = vmatprep.subr.bf16.mxu0 0
  %2070 = vmatpush1.bf16.xpose.msra.mxu0 0
  %2071 = vmatprep.subr.bf16.mxu0 0
  %2072 = vmatpush1.bf16.xpose.msra.mxu0 %v2055
  %2073 = vmatprep.subr.bf16.mxu0 0
  %2074 = vmatpush2.bf16.xpose.msra.mxu0 0
  %2075 = vmatprep.subr.bf16.mxu0 0
  %2076 = vmatpush2.bf16.xpose.msra.mxu0 0
  %2077 = vmatprep.subr.bf16.mxu0 0
  %2078 = vmatpush2.bf16.xpose.msra.mxu0 0
  %2079 = vmatprep.subr.bf16.mxu0 0
  %2080 = vmatpush2.bf16.xpose.msra.mxu0 0
  %2081 = vmatprep.subr.bf16.mxu0 0
  %2082 = vmatpush2.bf16.xpose.msra.mxu0 0
  %2083 = vmatprep.subr.bf16.mxu0 0
  %2084 = vmatpush2.bf16.xpose.msra.mxu0 0
  %2085 = vmatprep.subr.bf16.mxu0 0
  %2086 = vmatpush2.bf16.xpose.msra.mxu0 0
  %2087 = vmatprep.subr.bf16.mxu0 0
  %2088 = vmatpush2.bf16.xpose.msra.mxu0 0
  %2089 = vmatprep.mubr.bf16.mxu0 0
  %2090 = vmatmul.mubr.bf16.gmra.mxu0 %v2052
  %v2091 = vpop.f32.mrf.mxu0
  %v2092 = vadd.f32 %v44, %v2091
  %v2093 = vpop.f32.mrf.mxu0
  %v2094 = vpop.f32.mrf.mxu0
  %v2095 = vadd.f32 %v45, %v2094
  %v2096 = vpop.f32.mrf.mxu0
  %2097 = vdwg.mxu0
  %2099 = vrot.lane.b32.xlu0 %v1796, 96
  %v2100 = vpop.permute.xlu0 %2099
  %v2102 = vsel %vm261, %v1796, 0
  %v2105 = vsel %vm261, %v2100, 0
  %2107 = vmatprep.subr.bf16.mxu0 0
  %2108 = vmatpush1.bf16.xpose.msra.mxu0 0
  %2109 = vmatprep.subr.bf16.mxu0 0
  %2110 = vmatpush1.bf16.xpose.msra.mxu0 0
  %2111 = vmatprep.subr.bf16.mxu0 0
  %2112 = vmatpush1.bf16.xpose.msra.mxu0 0
  %2113 = vmatprep.subr.bf16.mxu0 0
  %2114 = vmatpush1.bf16.xpose.msra.mxu0 0
  %2115 = vmatprep.subr.bf16.mxu0 0
  %2116 = vmatpush1.bf16.xpose.msra.mxu0 0
  %2117 = vmatprep.subr.bf16.mxu0 0
  %2118 = vmatpush1.bf16.xpose.msra.mxu0 0
  %2119 = vmatprep.subr.bf16.mxu0 0
  %2120 = vmatpush1.bf16.xpose.msra.mxu0 0
  %2121 = vmatprep.subr.bf16.mxu0 0
  %2122 = vmatpush1.bf16.xpose.msra.mxu0 %v2105
  %2123 = vmatprep.subr.bf16.mxu0 0
  %2124 = vmatpush2.bf16.xpose.msra.mxu0 0
  %2125 = vmatprep.subr.bf16.mxu0 0
  %2126 = vmatpush2.bf16.xpose.msra.mxu0 0
  %2127 = vmatprep.subr.bf16.mxu0 0
  %2128 = vmatpush2.bf16.xpose.msra.mxu0 0
  %2129 = vmatprep.subr.bf16.mxu0 0
  %2130 = vmatpush2.bf16.xpose.msra.mxu0 0
  %2131 = vmatprep.subr.bf16.mxu0 0
  %2132 = vmatpush2.bf16.xpose.msra.mxu0 0
  %2133 = vmatprep.subr.bf16.mxu0 0
  %2134 = vmatpush2.bf16.xpose.msra.mxu0 0
  %2135 = vmatprep.subr.bf16.mxu0 0
  %2136 = vmatpush2.bf16.xpose.msra.mxu0 0
  %2137 = vmatprep.subr.bf16.mxu0 0
  %2138 = vmatpush2.bf16.xpose.msra.mxu0 0
  %2139 = vmatprep.mubr.bf16.mxu0 0
  %2140 = vmatmul.mubr.bf16.gmra.mxu0 %v2102
  %v2141 = vpop.f32.mrf.mxu0
  %v2142 = vadd.f32 %v46, %v2141
  %v2143 = vpop.f32.mrf.mxu0
  %v2144 = vpop.f32.mrf.mxu0
  %v2145 = vadd.f32 %v47, %v2144
  %v2146 = vpop.f32.mrf.mxu0
  %2147 = vdwg.mxu0
  %2149 = vrot.lane.b32.xlu0 %v1797, 96
  %v2150 = vpop.permute.xlu0 %2149
  %v2152 = vsel %vm261, %v1797, 0
  %v2155 = vsel %vm261, %v2150, 0
  %2157 = vmatprep.subr.bf16.mxu0 0
  %2158 = vmatpush1.bf16.xpose.msra.mxu0 0
  %2159 = vmatprep.subr.bf16.mxu0 0
  %2160 = vmatpush1.bf16.xpose.msra.mxu0 0
  %2161 = vmatprep.subr.bf16.mxu0 0
  %2162 = vmatpush1.bf16.xpose.msra.mxu0 0
  %2163 = vmatprep.subr.bf16.mxu0 0
  %2164 = vmatpush1.bf16.xpose.msra.mxu0 0
  %2165 = vmatprep.subr.bf16.mxu0 0
  %2166 = vmatpush1.bf16.xpose.msra.mxu0 0
  %2167 = vmatprep.subr.bf16.mxu0 0
  %2168 = vmatpush1.bf16.xpose.msra.mxu0 0
  %2169 = vmatprep.subr.bf16.mxu0 0
  %2170 = vmatpush1.bf16.xpose.msra.mxu0 0
  %2171 = vmatprep.subr.bf16.mxu0 0
  %2172 = vmatpush1.bf16.xpose.msra.mxu0 %v2155
  %2173 = vmatprep.subr.bf16.mxu0 0
  %2174 = vmatpush2.bf16.xpose.msra.mxu0 0
  %2175 = vmatprep.subr.bf16.mxu0 0
  %2176 = vmatpush2.bf16.xpose.msra.mxu0 0
  %2177 = vmatprep.subr.bf16.mxu0 0
  %2178 = vmatpush2.bf16.xpose.msra.mxu0 0
  %2179 = vmatprep.subr.bf16.mxu0 0
  %2180 = vmatpush2.bf16.xpose.msra.mxu0 0
  %2181 = vmatprep.subr.bf16.mxu0 0
  %2182 = vmatpush2.bf16.xpose.msra.mxu0 0
  %2183 = vmatprep.subr.bf16.mxu0 0
  %2184 = vmatpush2.bf16.xpose.msra.mxu0 0
  %2185 = vmatprep.subr.bf16.mxu0 0
  %2186 = vmatpush2.bf16.xpose.msra.mxu0 0
  %2187 = vmatprep.subr.bf16.mxu0 0
  %2188 = vmatpush2.bf16.xpose.msra.mxu0 0
  %2189 = vmatprep.mubr.bf16.mxu0 0
  %2190 = vmatmul.mubr.bf16.gmra.mxu0 %v2152
  %v2191 = vpop.f32.mrf.mxu0
  %v2192 = vadd.f32 %v48, %v2191
  %v2193 = vpop.f32.mrf.mxu0
  %v2194 = vpop.f32.mrf.mxu0
  %v2195 = vadd.f32 %v49, %v2194
  %v2196 = vpop.f32.mrf.mxu0
  %2197 = vdwg.mxu0
  %v2198 = vsel %vm659, %v1842, -inf
  %2199 = vmax.xlane.f32.xlu0 %v2198
  %v2200 = vpop.xlane.xlu0 %2199
  %v2201 = vsel %vm659, %v1845, -inf
  %2202 = vmax.xlane.f32.xlu0 %v2201
  %v2203 = vpop.xlane.xlu0 %2202
  %v2204 = vsel %vm659, %v1892, -inf
  %2205 = vmax.xlane.f32.xlu0 %v2204
  %v2206 = vpop.xlane.xlu0 %2205
  %v2207 = vsel %vm659, %v1895, -inf
  %2208 = vmax.xlane.f32.xlu0 %v2207
  %v2209 = vpop.xlane.xlu0 %2208
  %v2210 = vsel %vm659, %v1942, -inf
  %2211 = vmax.xlane.f32.xlu0 %v2210
  %v2212 = vpop.xlane.xlu0 %2211
  %v2213 = vsel %vm659, %v1945, -inf
  %2214 = vmax.xlane.f32.xlu0 %v2213
  %v2215 = vpop.xlane.xlu0 %2214
  %v2216 = vsel %vm659, %v1992, -inf
  %2217 = vmax.xlane.f32.xlu0 %v2216
  %v2218 = vpop.xlane.xlu0 %2217
  %v2219 = vsel %vm659, %v1995, -inf
  %2220 = vmax.xlane.f32.xlu0 %v2219
  %v2221 = vpop.xlane.xlu0 %2220
  %v2222 = vsel %vm659, %v2042, -inf
  %2223 = vmax.xlane.f32.xlu0 %v2222
  %v2224 = vpop.xlane.xlu0 %2223
  %v2225 = vsel %vm659, %v2045, -inf
  %2226 = vmax.xlane.f32.xlu0 %v2225
  %v2227 = vpop.xlane.xlu0 %2226
  %v2228 = vsel %vm659, %v2092, -inf
  %2229 = vmax.xlane.f32.xlu0 %v2228
  %v2230 = vpop.xlane.xlu0 %2229
  %v2231 = vsel %vm659, %v2095, -inf
  %2232 = vmax.xlane.f32.xlu0 %v2231
  %v2233 = vpop.xlane.xlu0 %2232
  %v2234 = vsel %vm659, %v2142, -inf
  %2235 = vmax.xlane.f32.xlu0 %v2234
  %v2236 = vpop.xlane.xlu0 %2235
  %v2237 = vsel %vm659, %v2145, -inf
  %2238 = vmax.xlane.f32.xlu0 %v2237
  %v2239 = vpop.xlane.xlu0 %2238
  %v2240 = vsel %vm659, %v2192, -inf
  %2241 = vmax.xlane.f32.xlu0 %v2240
  %v2242 = vpop.xlane.xlu0 %2241
  %v2243 = vsel %vm659, %v2195, -inf
  %2244 = vmax.xlane.f32.xlu0 %v2243
  %v2245 = vpop.xlane.xlu0 %2244
  %v2246 = vsub.f32 %v1842, %v2200
  %v2247 = vsub.f32 %v1845, %v2203
  %v2248 = vsub.f32 %v1892, %v2206
  %v2249 = vsub.f32 %v1895, %v2209
  %v2250 = vsub.f32 %v1942, %v2212
  %v2251 = vsub.f32 %v1945, %v2215
  %v2252 = vsub.f32 %v1992, %v2218
  %v2253 = vsub.f32 %v1995, %v2221
  %v2254 = vsub.f32 %v2042, %v2224
  %v2255 = vsub.f32 %v2045, %v2227
  %v2256 = vsub.f32 %v2092, %v2230
  %v2257 = vsub.f32 %v2095, %v2233
  %v2258 = vsub.f32 %v2142, %v2236
  %v2259 = vsub.f32 %v2145, %v2239
  %v2260 = vsub.f32 %v2192, %v2242
  %v2261 = vsub.f32 %v2195, %v2245
  %v2262 = vmul.f32 %v2246, 1.442695
  %v2263 = vpow.pop %v2262
  %v2264 = vmul.f32 %v2247, 1.442695
  %v2265 = vpow.pop %v2264
  %v2266 = vmul.f32 %v2248, 1.442695
  %v2267 = vpow.pop %v2266
  %v2268 = vmul.f32 %v2249, 1.442695
  %v2269 = vpow.pop %v2268
  %v2270 = vmul.f32 %v2250, 1.442695
  %v2271 = vpow.pop %v2270
  %v2272 = vmul.f32 %v2251, 1.442695
  %v2273 = vpow.pop %v2272
  %v2274 = vmul.f32 %v2252, 1.442695
  %v2275 = vpow.pop %v2274
  %v2276 = vmul.f32 %v2253, 1.442695
  %v2277 = vpow.pop %v2276
  %v2278 = vmul.f32 %v2254, 1.442695
  %v2279 = vpow.pop %v2278
  %v2280 = vmul.f32 %v2255, 1.442695
  %v2281 = vpow.pop %v2280
  %v2282 = vmul.f32 %v2256, 1.442695
  %v2283 = vpow.pop %v2282
  %v2284 = vmul.f32 %v2257, 1.442695
  %v2285 = vpow.pop %v2284
  %v2286 = vmul.f32 %v2258, 1.442695
  %v2287 = vpow.pop %v2286
  %v2288 = vmul.f32 %v2259, 1.442695
  %v2289 = vpow.pop %v2288
  %v2290 = vmul.f32 %v2260, 1.442695
  %v2291 = vpow.pop %v2290
  %v2292 = vmul.f32 %v2261, 1.442695
  %v2293 = vpow.pop %v2292
  %v2294 = vsel %vm659, %v2263, 0.0
  %2295 = vadd.xlane.f32.xlu0 %v2294
  %v2296 = vpop.xlane.xlu0 %2295
  %v2297 = vsel %vm659, %v2265, 0.0
  %2298 = vadd.xlane.f32.xlu0 %v2297
  %v2299 = vpop.xlane.xlu0 %2298
  %v2300 = vsel %vm659, %v2267, 0.0
  %2301 = vadd.xlane.f32.xlu0 %v2300
  %v2302 = vpop.xlane.xlu0 %2301
  %v2303 = vsel %vm659, %v2269, 0.0
  %2304 = vadd.xlane.f32.xlu0 %v2303
  %v2305 = vpop.xlane.xlu0 %2304
  %v2306 = vsel %vm659, %v2271, 0.0
  %2307 = vadd.xlane.f32.xlu0 %v2306
  %v2308 = vpop.xlane.xlu0 %2307
  %v2309 = vsel %vm659, %v2273, 0.0
  %2310 = vadd.xlane.f32.xlu0 %v2309
  %v2311 = vpop.xlane.xlu0 %2310
  %v2312 = vsel %vm659, %v2275, 0.0
  %2313 = vadd.xlane.f32.xlu0 %v2312
  %v2314 = vpop.xlane.xlu0 %2313
  %v2315 = vsel %vm659, %v2277, 0.0
  %2316 = vadd.xlane.f32.xlu0 %v2315
  %v2317 = vpop.xlane.xlu0 %2316
  %v2318 = vsel %vm659, %v2279, 0.0
  %2319 = vadd.xlane.f32.xlu0 %v2318
  %v2320 = vpop.xlane.xlu0 %2319
  %v2321 = vsel %vm659, %v2281, 0.0
  %2322 = vadd.xlane.f32.xlu0 %v2321
  %v2323 = vpop.xlane.xlu0 %2322
  %v2324 = vsel %vm659, %v2283, 0.0
  %2325 = vadd.xlane.f32.xlu0 %v2324
  %v2326 = vpop.xlane.xlu0 %2325
  %v2327 = vsel %vm659, %v2285, 0.0
  %2328 = vadd.xlane.f32.xlu0 %v2327
  %v2329 = vpop.xlane.xlu0 %2328
  %v2330 = vsel %vm659, %v2287, 0.0
  %2331 = vadd.xlane.f32.xlu0 %v2330
  %v2332 = vpop.xlane.xlu0 %2331
  %v2333 = vsel %vm659, %v2289, 0.0
  %2334 = vadd.xlane.f32.xlu0 %v2333
  %v2335 = vpop.xlane.xlu0 %2334
  %v2336 = vsel %vm659, %v2291, 0.0
  %2337 = vadd.xlane.f32.xlu0 %v2336
  %v2338 = vpop.xlane.xlu0 %2337
  %v2339 = vsel %vm659, %v2293, 0.0
  %2340 = vadd.xlane.f32.xlu0 %v2339
  %v2341 = vpop.xlane.xlu0 %2340
  %v2342 = vrcp.pop %v2296
  %v2343 = vrcp.pop %v2299
  %v2344 = vrcp.pop %v2302
  %v2345 = vrcp.pop %v2305
  %v2346 = vrcp.pop %v2308
  %v2347 = vrcp.pop %v2311
  %v2348 = vrcp.pop %v2314
  %v2349 = vrcp.pop %v2317
  %v2350 = vrcp.pop %v2320
  %v2351 = vrcp.pop %v2323
  %v2352 = vrcp.pop %v2326
  %v2353 = vrcp.pop %v2329
  %v2354 = vrcp.pop %v2332
  %v2355 = vrcp.pop %v2335
  %v2356 = vrcp.pop %v2338
  %v2357 = vrcp.pop %v2341
  %v2358 = vmul.f32 %v2263, %v2342
  %v2359 = vmul.f32 %v2265, %v2343
  %v2360 = vmul.f32 %v2267, %v2344
  %v2361 = vmul.f32 %v2269, %v2345
  %v2362 = vmul.f32 %v2271, %v2346
  %v2363 = vmul.f32 %v2273, %v2347
  %v2364 = vmul.f32 %v2275, %v2348
  %v2365 = vmul.f32 %v2277, %v2349
  %v2366 = vmul.f32 %v2279, %v2350
  %v2367 = vmul.f32 %v2281, %v2351
  %v2368 = vmul.f32 %v2283, %v2352
  %v2369 = vmul.f32 %v2285, %v2353
  %v2370 = vmul.f32 %v2287, %v2354
  %v2371 = vmul.f32 %v2289, %v2355
  %v2372 = vmul.f32 %v2291, %v2356
  %v2373 = vmul.f32 %v2293, %v2357
  %v2374 = vpack.c.bf16 %v2359, %v2358
  %v2375 = vpack.c.bf16 %v2361, %v2360
  %v2376 = vpack.c.bf16 %v2363, %v2362
  %v2377 = vpack.c.bf16 %v2365, %v2364
  %v2378 = vpack.c.bf16 %v2367, %v2366
  %v2379 = vpack.c.bf16 %v2369, %v2368
  %v2380 = vpack.c.bf16 %v2371, %v2370
  %v2381 = vpack.c.bf16 %v2373, %v2372
  %2382 = vrot.lane.b32.xlu0 %v1790, 64
  %v2383 = vpop.permute.xlu0 %2382
  %v2386 = vsel %vm659, %v2374, 0
  %2388 = vmatprep.subr.bf16.mxu0 0
  %2389 = vmatpush1.bf16.msra.mxu0 0
  %2390 = vmatprep.subr.bf16.mxu0 0
  %2391 = vmatpush1.bf16.msra.mxu0 0
  %2392 = vmatprep.subr.bf16.mxu0 0
  %2393 = vmatpush1.bf16.msra.mxu0 0
  %2394 = vmatprep.subr.bf16.mxu0 0
  %2395 = vmatpush1.bf16.msra.mxu0 0
  %2396 = vmatprep.subr.bf16.mxu0 0
  %2397 = vmatpush1.bf16.msra.mxu0 0
  %2398 = vmatprep.subr.bf16.mxu0 0
  %2399 = vmatpush1.bf16.msra.mxu0 0
  %2400 = vmatprep.subr.bf16.mxu0 0
  %2401 = vmatpush1.bf16.msra.mxu0 0
  %2402 = vmatprep.subr.bf16.mxu0 0
  %2403 = vmatpush1.bf16.msra.mxu0 %v2383
  %2404 = vmatprep.subr.bf16.mxu0 0
  %2405 = vmatpush2.bf16.msra.mxu0 0
  %2406 = vmatprep.subr.bf16.mxu0 0
  %2407 = vmatpush2.bf16.msra.mxu0 0
  %2408 = vmatprep.subr.bf16.mxu0 0
  %2409 = vmatpush2.bf16.msra.mxu0 0
  %2410 = vmatprep.subr.bf16.mxu0 0
  %2411 = vmatpush2.bf16.msra.mxu0 0
  %2412 = vmatprep.subr.bf16.mxu0 0
  %2413 = vmatpush2.bf16.msra.mxu0 0
  %2414 = vmatprep.subr.bf16.mxu0 0
  %2415 = vmatpush2.bf16.msra.mxu0 0
  %2416 = vmatprep.subr.bf16.mxu0 0
  %2417 = vmatpush2.bf16.msra.mxu0 0
  %2418 = vmatprep.subr.bf16.mxu0 0
  %2419 = vmatpush2.bf16.msra.mxu0 0
  %2420 = vmatprep.mubr.bf16.mxu0 0
  %2421 = vmatmul.mubr.bf16.gmra.mxu0 %v2386
  %v2422 = vpop.f32.mrf.mxu0
  %v2423 = vadd.f32 0.0, %v2422
  %v2424 = vpop.f32.mrf.mxu0
  %v2425 = vpop.f32.mrf.mxu0
  %v2426 = vadd.f32 0.0, %v2425
  %v2427 = vpop.f32.mrf.mxu0
  %2428 = vdwg.mxu0
  %2429 = vrot.lane.b32.xlu0 %v1791, 64
  %v2430 = vpop.permute.xlu0 %2429
  %v2433 = vsel %vm659, %v2375, 0
  %2435 = vmatprep.subr.bf16.mxu0 0
  %2436 = vmatpush1.bf16.msra.mxu0 0
  %2437 = vmatprep.subr.bf16.mxu0 0
  %2438 = vmatpush1.bf16.msra.mxu0 0
  %2439 = vmatprep.subr.bf16.mxu0 0
  %2440 = vmatpush1.bf16.msra.mxu0 0
  %2441 = vmatprep.subr.bf16.mxu0 0
  %2442 = vmatpush1.bf16.msra.mxu0 0
  %2443 = vmatprep.subr.bf16.mxu0 0
  %2444 = vmatpush1.bf16.msra.mxu0 0
  %2445 = vmatprep.subr.bf16.mxu0 0
  %2446 = vmatpush1.bf16.msra.mxu0 0
  %2447 = vmatprep.subr.bf16.mxu0 0
  %2448 = vmatpush1.bf16.msra.mxu0 0
  %2449 = vmatprep.subr.bf16.mxu0 0
  %2450 = vmatpush1.bf16.msra.mxu0 %v2430
  %2451 = vmatprep.subr.bf16.mxu0 0
  %2452 = vmatpush2.bf16.msra.mxu0 0
  %2453 = vmatprep.subr.bf16.mxu0 0
  %2454 = vmatpush2.bf16.msra.mxu0 0
  %2455 = vmatprep.subr.bf16.mxu0 0
  %2456 = vmatpush2.bf16.msra.mxu0 0
  %2457 = vmatprep.subr.bf16.mxu0 0
  %2458 = vmatpush2.bf16.msra.mxu0 0
  %2459 = vmatprep.subr.bf16.mxu0 0
  %2460 = vmatpush2.bf16.msra.mxu0 0
  %2461 = vmatprep.subr.bf16.mxu0 0
  %2462 = vmatpush2.bf16.msra.mxu0 0
  %2463 = vmatprep.subr.bf16.mxu0 0
  %2464 = vmatpush2.bf16.msra.mxu0 0
  %2465 = vmatprep.subr.bf16.mxu0 0
  %2466 = vmatpush2.bf16.msra.mxu0 0
  %2467 = vmatprep.mubr.bf16.mxu0 0
  %2468 = vmatmul.mubr.bf16.gmra.mxu0 %v2433
  %v2469 = vpop.f32.mrf.mxu0
  %v2470 = vadd.f32 0.0, %v2469
  %v2471 = vpop.f32.mrf.mxu0
  %v2472 = vpop.f32.mrf.mxu0
  %v2473 = vadd.f32 0.0, %v2472
  %v2474 = vpop.f32.mrf.mxu0
  %2475 = vdwg.mxu0
  %2476 = vrot.lane.b32.xlu0 %v1792, 64
  %v2477 = vpop.permute.xlu0 %2476
  %v2480 = vsel %vm659, %v2376, 0
  %2482 = vmatprep.subr.bf16.mxu0 0
  %2483 = vmatpush1.bf16.msra.mxu0 0
  %2484 = vmatprep.subr.bf16.mxu0 0
  %2485 = vmatpush1.bf16.msra.mxu0 0
  %2486 = vmatprep.subr.bf16.mxu0 0
  %2487 = vmatpush1.bf16.msra.mxu0 0
  %2488 = vmatprep.subr.bf16.mxu0 0
  %2489 = vmatpush1.bf16.msra.mxu0 0
  %2490 = vmatprep.subr.bf16.mxu0 0
  %2491 = vmatpush1.bf16.msra.mxu0 0
  %2492 = vmatprep.subr.bf16.mxu0 0
  %2493 = vmatpush1.bf16.msra.mxu0 0
  %2494 = vmatprep.subr.bf16.mxu0 0
  %2495 = vmatpush1.bf16.msra.mxu0 0
  %2496 = vmatprep.subr.bf16.mxu0 0
  %2497 = vmatpush1.bf16.msra.mxu0 %v2477
  %2498 = vmatprep.subr.bf16.mxu0 0
  %2499 = vmatpush2.bf16.msra.mxu0 0
  %2500 = vmatprep.subr.bf16.mxu0 0
  %2501 = vmatpush2.bf16.msra.mxu0 0
  %2502 = vmatprep.subr.bf16.mxu0 0
  %2503 = vmatpush2.bf16.msra.mxu0 0
  %2504 = vmatprep.subr.bf16.mxu0 0
  %2505 = vmatpush2.bf16.msra.mxu0 0
  %2506 = vmatprep.subr.bf16.mxu0 0
  %2507 = vmatpush2.bf16.msra.mxu0 0
  %2508 = vmatprep.subr.bf16.mxu0 0
  %2509 = vmatpush2.bf16.msra.mxu0 0
  %2510 = vmatprep.subr.bf16.mxu0 0
  %2511 = vmatpush2.bf16.msra.mxu0 0
  %2512 = vmatprep.subr.bf16.mxu0 0
  %2513 = vmatpush2.bf16.msra.mxu0 0
  %2514 = vmatprep.mubr.bf16.mxu0 0
  %2515 = vmatmul.mubr.bf16.gmra.mxu0 %v2480
  %v2516 = vpop.f32.mrf.mxu0
  %v2517 = vadd.f32 0.0, %v2516
  %v2518 = vpop.f32.mrf.mxu0
  %v2519 = vpop.f32.mrf.mxu0
  %v2520 = vadd.f32 0.0, %v2519
  %v2521 = vpop.f32.mrf.mxu0
  %2522 = vdwg.mxu0
  %2523 = vrot.lane.b32.xlu0 %v1793, 64
  %v2524 = vpop.permute.xlu0 %2523
  %v2527 = vsel %vm659, %v2377, 0
  %2529 = vmatprep.subr.bf16.mxu0 0
  %2530 = vmatpush1.bf16.msra.mxu0 0
  %2531 = vmatprep.subr.bf16.mxu0 0
  %2532 = vmatpush1.bf16.msra.mxu0 0
  %2533 = vmatprep.subr.bf16.mxu0 0
  %2534 = vmatpush1.bf16.msra.mxu0 0
  %2535 = vmatprep.subr.bf16.mxu0 0
  %2536 = vmatpush1.bf16.msra.mxu0 0
  %2537 = vmatprep.subr.bf16.mxu0 0
  %2538 = vmatpush1.bf16.msra.mxu0 0
  %2539 = vmatprep.subr.bf16.mxu0 0
  %2540 = vmatpush1.bf16.msra.mxu0 0
  %2541 = vmatprep.subr.bf16.mxu0 0
  %2542 = vmatpush1.bf16.msra.mxu0 0
  %2543 = vmatprep.subr.bf16.mxu0 0
  %2544 = vmatpush1.bf16.msra.mxu0 %v2524
  %2545 = vmatprep.subr.bf16.mxu0 0
  %2546 = vmatpush2.bf16.msra.mxu0 0
  %2547 = vmatprep.subr.bf16.mxu0 0
  %2548 = vmatpush2.bf16.msra.mxu0 0
  %2549 = vmatprep.subr.bf16.mxu0 0
  %2550 = vmatpush2.bf16.msra.mxu0 0
  %2551 = vmatprep.subr.bf16.mxu0 0
  %2552 = vmatpush2.bf16.msra.mxu0 0
  %2553 = vmatprep.subr.bf16.mxu0 0
  %2554 = vmatpush2.bf16.msra.mxu0 0
  %2555 = vmatprep.subr.bf16.mxu0 0
  %2556 = vmatpush2.bf16.msra.mxu0 0
  %2557 = vmatprep.subr.bf16.mxu0 0
  %2558 = vmatpush2.bf16.msra.mxu0 0
  %2559 = vmatprep.subr.bf16.mxu0 0
  %2560 = vmatpush2.bf16.msra.mxu0 0
  %2561 = vmatprep.mubr.bf16.mxu0 0
  %2562 = vmatmul.mubr.bf16.gmra.mxu0 %v2527
  %v2563 = vpop.f32.mrf.mxu0
  %v2564 = vadd.f32 0.0, %v2563
  %v2565 = vpop.f32.mrf.mxu0
  %v2566 = vpop.f32.mrf.mxu0
  %v2567 = vadd.f32 0.0, %v2566
  %v2568 = vpop.f32.mrf.mxu0
  %2569 = vdwg.mxu0
  %2570 = vrot.lane.b32.xlu0 %v1794, 64
  %v2571 = vpop.permute.xlu0 %2570
  %v2574 = vsel %vm659, %v2378, 0
  %2576 = vmatprep.subr.bf16.mxu0 0
  %2577 = vmatpush1.bf16.msra.mxu0 0
  %2578 = vmatprep.subr.bf16.mxu0 0
  %2579 = vmatpush1.bf16.msra.mxu0 0
  %2580 = vmatprep.subr.bf16.mxu0 0
  %2581 = vmatpush1.bf16.msra.mxu0 0
  %2582 = vmatprep.subr.bf16.mxu0 0
  %2583 = vmatpush1.bf16.msra.mxu0 0
  %2584 = vmatprep.subr.bf16.mxu0 0
  %2585 = vmatpush1.bf16.msra.mxu0 0
  %2586 = vmatprep.subr.bf16.mxu0 0
  %2587 = vmatpush1.bf16.msra.mxu0 0
  %2588 = vmatprep.subr.bf16.mxu0 0
  %2589 = vmatpush1.bf16.msra.mxu0 0
  %2590 = vmatprep.subr.bf16.mxu0 0
  %2591 = vmatpush1.bf16.msra.mxu0 %v2571
  %2592 = vmatprep.subr.bf16.mxu0 0
  %2593 = vmatpush2.bf16.msra.mxu0 0
  %2594 = vmatprep.subr.bf16.mxu0 0
  %2595 = vmatpush2.bf16.msra.mxu0 0
  %2596 = vmatprep.subr.bf16.mxu0 0
  %2597 = vmatpush2.bf16.msra.mxu0 0
  %2598 = vmatprep.subr.bf16.mxu0 0
  %2599 = vmatpush2.bf16.msra.mxu0 0
  %2600 = vmatprep.subr.bf16.mxu0 0
  %2601 = vmatpush2.bf16.msra.mxu0 0
  %2602 = vmatprep.subr.bf16.mxu0 0
  %2603 = vmatpush2.bf16.msra.mxu0 0
  %2604 = vmatprep.subr.bf16.mxu0 0
  %2605 = vmatpush2.bf16.msra.mxu0 0
  %2606 = vmatprep.subr.bf16.mxu0 0
  %2607 = vmatpush2.bf16.msra.mxu0 0
  %2608 = vmatprep.mubr.bf16.mxu0 0
  %2609 = vmatmul.mubr.bf16.gmra.mxu0 %v2574
  %v2610 = vpop.f32.mrf.mxu0
  %v2611 = vadd.f32 0.0, %v2610
  %v2612 = vpop.f32.mrf.mxu0
  %v2613 = vpop.f32.mrf.mxu0
  %v2614 = vadd.f32 0.0, %v2613
  %v2615 = vpop.f32.mrf.mxu0
  %2616 = vdwg.mxu0
  %2617 = vrot.lane.b32.xlu0 %v1795, 64
  %v2618 = vpop.permute.xlu0 %2617
  %v2621 = vsel %vm659, %v2379, 0
  %2623 = vmatprep.subr.bf16.mxu0 0
  %2624 = vmatpush1.bf16.msra.mxu0 0
  %2625 = vmatprep.subr.bf16.mxu0 0
  %2626 = vmatpush1.bf16.msra.mxu0 0
  %2627 = vmatprep.subr.bf16.mxu0 0
  %2628 = vmatpush1.bf16.msra.mxu0 0
  %2629 = vmatprep.subr.bf16.mxu0 0
  %2630 = vmatpush1.bf16.msra.mxu0 0
  %2631 = vmatprep.subr.bf16.mxu0 0
  %2632 = vmatpush1.bf16.msra.mxu0 0
  %2633 = vmatprep.subr.bf16.mxu0 0
  %2634 = vmatpush1.bf16.msra.mxu0 0
  %2635 = vmatprep.subr.bf16.mxu0 0
  %2636 = vmatpush1.bf16.msra.mxu0 0
  %2637 = vmatprep.subr.bf16.mxu0 0
  %2638 = vmatpush1.bf16.msra.mxu0 %v2618
  %2639 = vmatprep.subr.bf16.mxu0 0
  %2640 = vmatpush2.bf16.msra.mxu0 0
  %2641 = vmatprep.subr.bf16.mxu0 0
  %2642 = vmatpush2.bf16.msra.mxu0 0
  %2643 = vmatprep.subr.bf16.mxu0 0
  %2644 = vmatpush2.bf16.msra.mxu0 0
  %2645 = vmatprep.subr.bf16.mxu0 0
  %2646 = vmatpush2.bf16.msra.mxu0 0
  %2647 = vmatprep.subr.bf16.mxu0 0
  %2648 = vmatpush2.bf16.msra.mxu0 0
  %2649 = vmatprep.subr.bf16.mxu0 0
  %2650 = vmatpush2.bf16.msra.mxu0 0
  %2651 = vmatprep.subr.bf16.mxu0 0
  %2652 = vmatpush2.bf16.msra.mxu0 0
  %2653 = vmatprep.subr.bf16.mxu0 0
  %2654 = vmatpush2.bf16.msra.mxu0 0
  %2655 = vmatprep.mubr.bf16.mxu0 0
  %2656 = vmatmul.mubr.bf16.gmra.mxu0 %v2621
  %v2657 = vpop.f32.mrf.mxu0
  %v2658 = vadd.f32 0.0, %v2657
  %v2659 = vpop.f32.mrf.mxu0
  %v2660 = vpop.f32.mrf.mxu0
  %v2661 = vadd.f32 0.0, %v2660
  %v2662 = vpop.f32.mrf.mxu0
  %2663 = vdwg.mxu0
  %2664 = vrot.lane.b32.xlu0 %v1796, 64
  %v2665 = vpop.permute.xlu0 %2664
  %v2668 = vsel %vm659, %v2380, 0
  %2670 = vmatprep.subr.bf16.mxu0 0
  %2671 = vmatpush1.bf16.msra.mxu0 0
  %2672 = vmatprep.subr.bf16.mxu0 0
  %2673 = vmatpush1.bf16.msra.mxu0 0
  %2674 = vmatprep.subr.bf16.mxu0 0
  %2675 = vmatpush1.bf16.msra.mxu0 0
  %2676 = vmatprep.subr.bf16.mxu0 0
  %2677 = vmatpush1.bf16.msra.mxu0 0
  %2678 = vmatprep.subr.bf16.mxu0 0
  %2679 = vmatpush1.bf16.msra.mxu0 0
  %2680 = vmatprep.subr.bf16.mxu0 0
  %2681 = vmatpush1.bf16.msra.mxu0 0
  %2682 = vmatprep.subr.bf16.mxu0 0
  %2683 = vmatpush1.bf16.msra.mxu0 0
  %2684 = vmatprep.subr.bf16.mxu0 0
  %2685 = vmatpush1.bf16.msra.mxu0 %v2665
  %2686 = vmatprep.subr.bf16.mxu0 0
  %2687 = vmatpush2.bf16.msra.mxu0 0
  %2688 = vmatprep.subr.bf16.mxu0 0
  %2689 = vmatpush2.bf16.msra.mxu0 0
  %2690 = vmatprep.subr.bf16.mxu0 0
  %2691 = vmatpush2.bf16.msra.mxu0 0
  %2692 = vmatprep.subr.bf16.mxu0 0
  %2693 = vmatpush2.bf16.msra.mxu0 0
  %2694 = vmatprep.subr.bf16.mxu0 0
  %2695 = vmatpush2.bf16.msra.mxu0 0
  %2696 = vmatprep.subr.bf16.mxu0 0
  %2697 = vmatpush2.bf16.msra.mxu0 0
  %2698 = vmatprep.subr.bf16.mxu0 0
  %2699 = vmatpush2.bf16.msra.mxu0 0
  %2700 = vmatprep.subr.bf16.mxu0 0
  %2701 = vmatpush2.bf16.msra.mxu0 0
  %2702 = vmatprep.mubr.bf16.mxu0 0
  %2703 = vmatmul.mubr.bf16.gmra.mxu0 %v2668
  %v2704 = vpop.f32.mrf.mxu0
  %v2705 = vadd.f32 0.0, %v2704
  %v2706 = vpop.f32.mrf.mxu0
  %v2707 = vpop.f32.mrf.mxu0
  %v2708 = vadd.f32 0.0, %v2707
  %v2709 = vpop.f32.mrf.mxu0
  %2710 = vdwg.mxu0
  %2711 = vrot.lane.b32.xlu0 %v1797, 64
  %v2712 = vpop.permute.xlu0 %2711
  %v2715 = vsel %vm659, %v2381, 0
  %2717 = vmatprep.subr.bf16.mxu0 0
  %2718 = vmatpush1.bf16.msra.mxu0 0
  %2719 = vmatprep.subr.bf16.mxu0 0
  %2720 = vmatpush1.bf16.msra.mxu0 0
  %2721 = vmatprep.subr.bf16.mxu0 0
  %2722 = vmatpush1.bf16.msra.mxu0 0
  %2723 = vmatprep.subr.bf16.mxu0 0
  %2724 = vmatpush1.bf16.msra.mxu0 0
  %2725 = vmatprep.subr.bf16.mxu0 0
  %2726 = vmatpush1.bf16.msra.mxu0 0
  %2727 = vmatprep.subr.bf16.mxu0 0
  %2728 = vmatpush1.bf16.msra.mxu0 0
  %2729 = vmatprep.subr.bf16.mxu0 0
  %2730 = vmatpush1.bf16.msra.mxu0 0
  %2731 = vmatprep.subr.bf16.mxu0 0
  %2732 = vmatpush1.bf16.msra.mxu0 %v2712
  %2733 = vmatprep.subr.bf16.mxu0 0
  %2734 = vmatpush2.bf16.msra.mxu0 0
  %2735 = vmatprep.subr.bf16.mxu0 0
  %2736 = vmatpush2.bf16.msra.mxu0 0
  %2737 = vmatprep.subr.bf16.mxu0 0
  %2738 = vmatpush2.bf16.msra.mxu0 0
  %2739 = vmatprep.subr.bf16.mxu0 0
  %2740 = vmatpush2.bf16.msra.mxu0 0
  %2741 = vmatprep.subr.bf16.mxu0 0
  %2742 = vmatpush2.bf16.msra.mxu0 0
  %2743 = vmatprep.subr.bf16.mxu0 0
  %2744 = vmatpush2.bf16.msra.mxu0 0
  %2745 = vmatprep.subr.bf16.mxu0 0
  %2746 = vmatpush2.bf16.msra.mxu0 0
  %2747 = vmatprep.subr.bf16.mxu0 0
  %2748 = vmatpush2.bf16.msra.mxu0 0
  %2749 = vmatprep.mubr.bf16.mxu0 0
  %2750 = vmatmul.mubr.bf16.gmra.mxu0 %v2715
  %v2751 = vpop.f32.mrf.mxu0
  %v2752 = vadd.f32 0.0, %v2751
  %v2753 = vpop.f32.mrf.mxu0
  %v2754 = vpop.f32.mrf.mxu0
  %v2755 = vadd.f32 0.0, %v2754
  %v2756 = vpop.f32.mrf.mxu0
  %2757 = vdwg.mxu0
  %2762 = vrot.lane.b32.xlu0 %v2517, 8
  %v2763 = vpop.permute.xlu0 %2762
  %2764 = vrot.lane.b32.xlu0 %v2520, 8
  %v2765 = vpop.permute.xlu0 %2764
  %2766 = vrot.lane.b32.xlu0 %v2564, 8
  %v2767 = vpop.permute.xlu0 %2766
  %2768 = vrot.lane.b32.xlu0 %v2567, 8
  %v2769 = vpop.permute.xlu0 %2768
  %2778 = vrot.lane.b32.xlu0 %v2611, 16
  %v2779 = vpop.permute.xlu0 %2778
  %2780 = vrot.lane.b32.xlu0 %v2614, 16
  %v2781 = vpop.permute.xlu0 %2780
  %2782 = vrot.lane.b32.xlu0 %v2658, 16
  %v2783 = vpop.permute.xlu0 %2782
  %2784 = vrot.lane.b32.xlu0 %v2661, 16
  %v2785 = vpop.permute.xlu0 %2784
  %2794 = vrot.lane.b32.xlu0 %v2705, 24
  %v2795 = vpop.permute.xlu0 %2794
  %2796 = vrot.lane.b32.xlu0 %v2708, 24
  %v2797 = vpop.permute.xlu0 %2796
  %2798 = vrot.lane.b32.xlu0 %v2752, 24
  %v2799 = vpop.permute.xlu0 %2798
  %2800 = vrot.lane.b32.xlu0 %v2755, 24
  %v2801 = vpop.permute.xlu0 %2800
  %v2806 = vsel %vm261, %v2423, %v2763
  %v2807 = vsel %vm261, %v2426, %v2765
  %v2808 = vsel %vm261, %v2470, %v2767
  %v2809 = vsel %vm261, %v2473, %v2769
  %v2810 = vsel %vm659, %v2806, %v2779
  %v2811 = vsel %vm659, %v2807, %v2781
  %v2812 = vsel %vm659, %v2808, %v2783
  %v2813 = vsel %vm659, %v2809, %v2785
  %v2814 = vsel %vm1276, %v2810, %v2795
  %v2815 = vsel %vm1276, %v2811, %v2797
  %v2816 = vsel %vm1276, %v2812, %v2799
  %v2817 = vsel %vm1276, %v2813, %v2801
  %v2818 = vpack.c.bf16 %v2815, %v2814
  %v2819 = vpack.c.bf16 %v2817, %v2816
  %v2820 = vlaneseq
  %v2821 = vshrl.u32 %v2820, 7
  %v2822 = vsub.s32 1, %v2821
  %v2823 = vrot.slane %v1676, %v2822
  %v2824 = vunpack.c.h.b16 %v1658
  %v2825 = vunpack.c.h.b16 %v1660
  %v2826 = vunpack.c.h.b16 %v1662
  %v2827 = vunpack.c.h.b16 %v1664
  %v2828 = vpack.c.b16 %v2825, %v2824
  %v2829 = vpack.c.b16 %v2827, %v2826
  %v2833 = vsel %vm50, %v2818, 0
  %v2836 = vsel %vm50, %v2819, 0
  %2838 = vmatprep.subr.bf16.mxu0 0
  %2839 = vmatpush1.bf16.msra.mxu0 0
  %2840 = vmatprep.subr.bf16.mxu0 0
  %2841 = vmatpush1.bf16.msra.mxu0 0
  %2842 = vmatprep.subr.bf16.mxu0 0
  %2843 = vmatpush1.bf16.msra.mxu0 0
  %2844 = vmatprep.subr.bf16.mxu0 0
  %2845 = vmatpush1.bf16.msra.mxu0 0
  %2846 = vmatprep.subr.bf16.mxu0 0
  %2847 = vmatpush1.bf16.msra.mxu0 0
  %2848 = vmatprep.subr.bf16.mxu0 0
  %2849 = vmatpush1.bf16.msra.mxu0 0
  %2850 = vmatprep.subr.bf16.mxu0 0
  %2851 = vmatpush1.bf16.msra.mxu0 %v2829
  %2852 = vmatprep.subr.bf16.mxu0 0
  %2853 = vmatpush1.bf16.msra.mxu0 %v2828
  %2854 = vmatprep.subr.bf16.mxu0 0
  %2855 = vmatpush2.bf16.msra.mxu0 0
  %2856 = vmatprep.subr.bf16.mxu0 0
  %2857 = vmatpush2.bf16.msra.mxu0 0
  %2858 = vmatprep.subr.bf16.mxu0 0
  %2859 = vmatpush2.bf16.msra.mxu0 0
  %2860 = vmatprep.subr.bf16.mxu0 0
  %2861 = vmatpush2.bf16.msra.mxu0 0
  %2862 = vmatprep.subr.bf16.mxu0 0
  %2863 = vmatpush2.bf16.msra.mxu0 0
  %2864 = vmatprep.subr.bf16.mxu0 0
  %2865 = vmatpush2.bf16.msra.mxu0 0
  %2866 = vmatprep.subr.bf16.mxu0 0
  %2867 = vmatpush2.bf16.msra.mxu0 0
  %2868 = vmatprep.subr.bf16.mxu0 0
  %2869 = vmatpush2.bf16.msra.mxu0 0
  %2870 = vmatprep.mubr.bf16.mxu0 0
  %2871 = vmatmul.mubr.bf16.gmra.mxu0 %v2833
  %v2872 = vpop.f32.mrf.mxu0
  %v2873 = vadd.f32 %v2823, %v2872
  %v2874 = vpop.f32.mrf.mxu0
  %v2875 = vpop.f32.mrf.mxu0
  %v2876 = vadd.f32 %v2823, %v2875
  %v2877 = vpop.f32.mrf.mxu0
  %2878 = vmatprep.mubr.bf16.mxu0 0
  %2879 = vmatmul.mubr.bf16.gmra.mxu0 %v2836
  %v2880 = vpop.f32.mrf.mxu0
  %v2881 = vadd.f32 %v2823, %v2880
  %v2882 = vpop.f32.mrf.mxu0
  %v2883 = vpop.f32.mrf.mxu0
  %v2884 = vadd.f32 %v2823, %v2883
  %v2885 = vpop.f32.mrf.mxu0
  %2886 = vdwg.mxu0
  %v2887 = vadd.f32 %v1653, %v2873
  %v2888 = vadd.f32 %v1654, %v2876
  %v2889 = vadd.f32 %v1655, %v2881
  %v2890 = vadd.f32 %v1656, %v2884
  %v2891 = vsel %vm50, %v2887, 0.0
  %2892 = vadd.xlane.f32.xlu0 %v2891
  %v2893 = vpop.xlane.xlu0 %2892
  %v2894 = vsel %vm50, %v2888, 0.0
  %2895 = vadd.xlane.f32.xlu0 %v2894
  %v2896 = vpop.xlane.xlu0 %2895
  %v2897 = vsel %vm50, %v2889, 0.0
  %2898 = vadd.xlane.f32.xlu0 %v2897
  %v2899 = vpop.xlane.xlu0 %2898
  %v2900 = vsel %vm50, %v2890, 0.0
  %2901 = vadd.xlane.f32.xlu0 %v2900
  %v2902 = vpop.xlane.xlu0 %2901
  %v2903 = vmul.f32 %v2893, %v63
  %v2904 = vmul.f32 %v2896, %v63
  %v2905 = vmul.f32 %v2899, %v63
  %v2906 = vmul.f32 %v2902, %v63
  %v2907 = vsub.f32 %v2887, %v2903
  %v2908 = vsub.f32 %v2888, %v2904
  %v2909 = vsub.f32 %v2889, %v2905
  %v2910 = vsub.f32 %v2890, %v2906
  %v2911 = vmul.f32 %v2907, %v2907
  %v2912 = vmul.f32 %v2908, %v2908
  %v2913 = vmul.f32 %v2909, %v2909
  %v2914 = vmul.f32 %v2910, %v2910
  %v2915 = vsel %vm50, %v2911, 0.0
  %2916 = vadd.xlane.f32.xlu0 %v2915
  %v2917 = vpop.xlane.xlu0 %2916
  %v2918 = vsel %vm50, %v2912, 0.0
  %2919 = vadd.xlane.f32.xlu0 %v2918
  %v2920 = vpop.xlane.xlu0 %2919
  %v2921 = vsel %vm50, %v2913, 0.0
  %2922 = vadd.xlane.f32.xlu0 %v2921
  %v2923 = vpop.xlane.xlu0 %2922
  %v2924 = vsel %vm50, %v2914, 0.0
  %2925 = vadd.xlane.f32.xlu0 %v2924
  %v2926 = vpop.xlane.xlu0 %2925
  %v2927 = vmul.f32 %v2917, %v63
  %v2928 = vmul.f32 %v2920, %v63
  %v2929 = vmul.f32 %v2923, %v63
  %v2930 = vmul.f32 %v2926, %v63
  %v2931 = vadd.f32 %v2927, 1e-05
  %v2932 = vadd.f32 %v2928, 1e-05
  %v2933 = vadd.f32 %v2929, 1e-05
  %v2934 = vadd.f32 %v2930, 1e-05
  %v2935 = vrsqrt.pop %v2931
  %v2936 = vrsqrt.pop %v2932
  %v2937 = vrsqrt.pop %v2933
  %v2938 = vrsqrt.pop %v2934
  %v2939 = vmul.f32 %v2907, %v2935
  %v2940 = vmul.f32 %v2908, %v2936
  %v2941 = vmul.f32 %v2909, %v2937
  %v2942 = vmul.f32 %v2910, %v2938
  %v2943 = vlaneseq
  %v2944 = vshrl.u32 %v2943, 7
  %v2945 = vsub.s32 4, %v2944
  %v2946 = vrot.slane %v1676, %v2945
  %v2947 = vmul.f32 %v2939, %v2946
  %v2948 = vmul.f32 %v2940, %v2946
  %v2949 = vmul.f32 %v2941, %v2946
  %v2950 = vmul.f32 %v2942, %v2946
  %v2951 = vlaneseq
  %v2952 = vshrl.u32 %v2951, 7
  %v2953 = vsub.s32 5, %v2952
  %v2954 = vrot.slane %v1676, %v2953
  %v2955 = vadd.f32 %v2947, %v2954
  %v2956 = vadd.f32 %v2948, %v2954
  %v2957 = vadd.f32 %v2949, %v2954
  %v2958 = vadd.f32 %v2950, %v2954
  %v2959 = vpack.c.bf16 %v2956, %v2955
  %v2960 = vpack.c.bf16 %v2958, %v2957
  %v2961 = vlaneseq
  %v2962 = vshrl.u32 %v2961, 7
  %v2963 = vsub.s32 2, %v2962
  %v2964 = vrot.slane %v1676, %v2963
  %v2969 = vunpack.c.l.b16 %v1659
  %v2970 = vunpack.c.l.b16 %v1661
  %v2971 = vunpack.c.l.b16 %v1663
  %v2972 = vunpack.c.l.b16 %v1665
  %v2973 = vpack.c.b16 %v2970, %v2969
  %v2974 = vpack.c.b16 %v2972, %v2971
  %v2978 = vsel %vm50, %v2959, 0
  %v2981 = vsel %vm50, %v2960, 0
  %2983 = vmatprep.subr.bf16.mxu0 0
  %2984 = vmatpush1.bf16.msra.mxu0 0
  %2985 = vmatprep.subr.bf16.mxu0 0
  %2986 = vmatpush1.bf16.msra.mxu0 0
  %2987 = vmatprep.subr.bf16.mxu0 0
  %2988 = vmatpush1.bf16.msra.mxu0 0
  %2989 = vmatprep.subr.bf16.mxu0 0
  %2990 = vmatpush1.bf16.msra.mxu0 0
  %2991 = vmatprep.subr.bf16.mxu0 0
  %2992 = vmatpush1.bf16.msra.mxu0 0
  %2993 = vmatprep.subr.bf16.mxu0 0
  %2994 = vmatpush1.bf16.msra.mxu0 0
  %2995 = vmatprep.subr.bf16.mxu0 0
  %2996 = vmatpush1.bf16.msra.mxu0 %v2974
  %2997 = vmatprep.subr.bf16.mxu0 0
  %2998 = vmatpush1.bf16.msra.mxu0 %v2973
  %2999 = vmatprep.subr.bf16.mxu0 0
  %3000 = vmatpush2.bf16.msra.mxu0 0
  %3001 = vmatprep.subr.bf16.mxu0 0
  %3002 = vmatpush2.bf16.msra.mxu0 0
  %3003 = vmatprep.subr.bf16.mxu0 0
  %3004 = vmatpush2.bf16.msra.mxu0 0
  %3005 = vmatprep.subr.bf16.mxu0 0
  %3006 = vmatpush2.bf16.msra.mxu0 0
  %3007 = vmatprep.subr.bf16.mxu0 0
  %3008 = vmatpush2.bf16.msra.mxu0 0
  %3009 = vmatprep.subr.bf16.mxu0 0
  %3010 = vmatpush2.bf16.msra.mxu0 0
  %3011 = vmatprep.subr.bf16.mxu0 0
  %3012 = vmatpush2.bf16.msra.mxu0 0
  %3013 = vmatprep.subr.bf16.mxu0 0
  %3014 = vmatpush2.bf16.msra.mxu0 0
  %3015 = vmatprep.mubr.bf16.mxu0 0
  %3016 = vmatmul.mubr.bf16.gmra.mxu0 %v2978
  %v3017 = vpop.f32.mrf.mxu0
  %v3018 = vadd.f32 %v2964, %v3017
  %v3019 = vpop.f32.mrf.mxu0
  %v3020 = vpop.f32.mrf.mxu0
  %v3021 = vadd.f32 %v2964, %v3020
  %v3022 = vpop.f32.mrf.mxu0
  %3023 = vmatprep.mubr.bf16.mxu0 0
  %3024 = vmatmul.mubr.bf16.gmra.mxu0 %v2981
  %v3025 = vpop.f32.mrf.mxu0
  %v3026 = vadd.f32 %v2964, %v3025
  %v3027 = vpop.f32.mrf.mxu0
  %v3028 = vpop.f32.mrf.mxu0
  %v3029 = vadd.f32 %v2964, %v3028
  %v3030 = vpop.f32.mrf.mxu0
  %3031 = vdwg.mxu0
  %v3032 = vmax.f32 %v3018, 0.0
  %v3033 = vmax.f32 %v3021, 0.0
  %v3034 = vmax.f32 %v3026, 0.0
  %v3035 = vmax.f32 %v3029, 0.0
  %v3036 = vpack.c.bf16 %v3033, %v3032
  %v3037 = vpack.c.bf16 %v3035, %v3034
  %v3038 = vlaneseq
  %v3039 = vshrl.u32 %v3038, 7
  %v3040 = vsub.s32 3, %v3039
  %v3041 = vrot.slane %v1676, %v3040
  %v3050 = vunpack.c.l.b16 %v1667
  %v3051 = vunpack.c.l.b16 %v1668
  %v3052 = vunpack.c.l.b16 %v1669
  %v3053 = vunpack.c.l.b16 %v1670
  %v3054 = vunpack.c.l.b16 %v1671
  %v3055 = vunpack.c.l.b16 %v1672
  %v3056 = vunpack.c.l.b16 %v1673
  %v3057 = vunpack.c.l.b16 %v1674
  %v3058 = vpack.c.b16 %v3051, %v3050
  %v3059 = vpack.c.b16 %v3053, %v3052
  %v3060 = vpack.c.b16 %v3055, %v3054
  %v3061 = vpack.c.b16 %v3057, %v3056
  %v3067 = vsel %vm1529, %v3036, 0
  %v3070 = vsel %vm1529, %v3037, 0
  %3072 = vmatprep.subr.bf16.mxu0 0
  %3073 = vmatpush1.bf16.msra.mxu0 0
  %3074 = vmatprep.subr.bf16.mxu0 0
  %3075 = vmatpush1.bf16.msra.mxu0 0
  %3076 = vmatprep.subr.bf16.mxu0 0
  %3077 = vmatpush1.bf16.msra.mxu0 0
  %3078 = vmatprep.subr.bf16.mxu0 0
  %3079 = vmatpush1.bf16.msra.mxu0 0
  %3080 = vmatprep.subr.bf16.mxu0 0
  %3081 = vmatpush1.bf16.msra.mxu0 %v3061
  %3082 = vmatprep.subr.bf16.mxu0 0
  %3083 = vmatpush1.bf16.msra.mxu0 %v3060
  %3084 = vmatprep.subr.bf16.mxu0 0
  %3085 = vmatpush1.bf16.msra.mxu0 %v3059
  %3086 = vmatprep.subr.bf16.mxu0 0
  %3087 = vmatpush1.bf16.msra.mxu0 %v3058
  %3088 = vmatprep.subr.bf16.mxu0 0
  %3089 = vmatpush2.bf16.msra.mxu0 0
  %3090 = vmatprep.subr.bf16.mxu0 0
  %3091 = vmatpush2.bf16.msra.mxu0 0
  %3092 = vmatprep.subr.bf16.mxu0 0
  %3093 = vmatpush2.bf16.msra.mxu0 0
  %3094 = vmatprep.subr.bf16.mxu0 0
  %3095 = vmatpush2.bf16.msra.mxu0 0
  %3096 = vmatprep.subr.bf16.mxu0 0
  %3097 = vmatpush2.bf16.msra.mxu0 0
  %3098 = vmatprep.subr.bf16.mxu0 0
  %3099 = vmatpush2.bf16.msra.mxu0 0
  %3100 = vmatprep.subr.bf16.mxu0 0
  %3101 = vmatpush2.bf16.msra.mxu0 0
  %3102 = vmatprep.subr.bf16.mxu0 0
  %3103 = vmatpush2.bf16.msra.mxu0 0
  %3104 = vmatprep.mubr.bf16.mxu0 0
  %3105 = vmatmul.mubr.bf16.gmra.mxu0 %v3067
  %v3106 = vpop.f32.mrf.mxu0
  %v3107 = vadd.f32 %v3041, %v3106
  %v3108 = vpop.f32.mrf.mxu0
  %v3109 = vpop.f32.mrf.mxu0
  %v3110 = vadd.f32 %v3041, %v3109
  %v3111 = vpop.f32.mrf.mxu0
  %3112 = vmatprep.mubr.bf16.mxu0 0
  %3113 = vmatmul.mubr.bf16.gmra.mxu0 %v3070
  %v3114 = vpop.f32.mrf.mxu0
  %v3115 = vadd.f32 %v3041, %v3114
  %v3116 = vpop.f32.mrf.mxu0
  %v3117 = vpop.f32.mrf.mxu0
  %v3118 = vadd.f32 %v3041, %v3117
  %v3119 = vpop.f32.mrf.mxu0
  %3120 = vdwg.mxu0
  %v3121 = vadd.f32 %v2955, %v3107
  %v3122 = vadd.f32 %v2956, %v3110
  %v3123 = vadd.f32 %v2957, %v3115
  %v3124 = vadd.f32 %v2958, %v3118
  %v3125 = vsel %vm50, %v3121, 0.0
  %3126 = vadd.xlane.f32.xlu0 %v3125
  %v3127 = vpop.xlane.xlu0 %3126
  %v3128 = vsel %vm50, %v3122, 0.0
  %3129 = vadd.xlane.f32.xlu0 %v3128
  %v3130 = vpop.xlane.xlu0 %3129
  %v3131 = vsel %vm50, %v3123, 0.0
  %3132 = vadd.xlane.f32.xlu0 %v3131
  %v3133 = vpop.xlane.xlu0 %3132
  %v3134 = vsel %vm50, %v3124, 0.0
  %3135 = vadd.xlane.f32.xlu0 %v3134
  %v3136 = vpop.xlane.xlu0 %3135
  %v3137 = vmul.f32 %v3127, %v63
  %v3138 = vmul.f32 %v3130, %v63
  %v3139 = vmul.f32 %v3133, %v63
  %v3140 = vmul.f32 %v3136, %v63
  %v3141 = vsub.f32 %v3121, %v3137
  %v3142 = vsub.f32 %v3122, %v3138
  %v3143 = vsub.f32 %v3123, %v3139
  %v3144 = vsub.f32 %v3124, %v3140
  %v3145 = vmul.f32 %v3141, %v3141
  %v3146 = vmul.f32 %v3142, %v3142
  %v3147 = vmul.f32 %v3143, %v3143
  %v3148 = vmul.f32 %v3144, %v3144
  %v3149 = vsel %vm50, %v3145, 0.0
  %3150 = vadd.xlane.f32.xlu0 %v3149
  %v3151 = vpop.xlane.xlu0 %3150
  %v3152 = vsel %vm50, %v3146, 0.0
  %3153 = vadd.xlane.f32.xlu0 %v3152
  %v3154 = vpop.xlane.xlu0 %3153
  %v3155 = vsel %vm50, %v3147, 0.0
  %3156 = vadd.xlane.f32.xlu0 %v3155
  %v3157 = vpop.xlane.xlu0 %3156
  %v3158 = vsel %vm50, %v3148, 0.0
  %3159 = vadd.xlane.f32.xlu0 %v3158
  %v3160 = vpop.xlane.xlu0 %3159
  %v3161 = vmul.f32 %v3151, %v63
  %v3162 = vmul.f32 %v3154, %v63
  %v3163 = vmul.f32 %v3157, %v63
  %v3164 = vmul.f32 %v3160, %v63
  %v3165 = vadd.f32 %v3161, 1e-05
  %v3166 = vadd.f32 %v3162, 1e-05
  %v3167 = vadd.f32 %v3163, 1e-05
  %v3168 = vadd.f32 %v3164, 1e-05
  %v3169 = vrsqrt.pop %v3165
  %v3170 = vrsqrt.pop %v3166
  %v3171 = vrsqrt.pop %v3167
  %v3172 = vrsqrt.pop %v3168
  %v3173 = vmul.f32 %v3141, %v3169
  %v3174 = vmul.f32 %v3142, %v3170
  %v3175 = vmul.f32 %v3143, %v3171
  %v3176 = vmul.f32 %v3144, %v3172
  %v3177 = vlaneseq
  %v3178 = vshrl.u32 %v3177, 7
  %v3179 = vsub.s32 6, %v3178
  %v3180 = vrot.slane %v1676, %v3179
  %v3181 = vmul.f32 %v3173, %v3180
  %v3182 = vmul.f32 %v3174, %v3180
  %v3183 = vmul.f32 %v3175, %v3180
  %v3184 = vmul.f32 %v3176, %v3180
  %v3185 = vlaneseq
  %v3186 = vshrl.u32 %v3185, 7
  %v3187 = vsub.s32 7, %v3186
  %v3188 = vrot.slane %v1676, %v3187
  %v3189 = vadd.f32 %v3181, %v3188
  %v3190 = vadd.f32 %v3182, %v3188
  %v3191 = vadd.f32 %v3183, %v3188
  %v3192 = vadd.f32 %v3184, %v3188
  %3193 = vst.msk [vmem:[%s7] sm:$0xff] %vm50, %v3189
  %3194 = vst.msk [vmem:[%s7 + $0x8] sm:$0xff] %vm50, %v3190
  %3195 = vst.msk [vmem:[%s7 + $0x10] sm:$0xff] %vm50, %v3191
  %3196 = vst.msk [vmem:[%s7 + $0x18] sm:$0xff] %vm50, %v3192
  %v3197 = vld [vmem:[%s6] sm:$0xf]
  %v3198 = vld [vmem:[%s6 + $0x4] sm:$0xf]
  %v3199 = vld [vmem:[%s6 + $0x8] sm:$0xf]
  %v3200 = vld [vmem:[%s6 + $0xc] sm:$0xf]
  %v3201 = vpack.c.bf16 %v3190, %v3189
  %v3202 = vpack.c.bf16 %v3192, %v3191
  %v3203 = vlaneseq
  %v3204 = vshrl.u32 %v3203, 7
  %v3205 = vsub.s32 2, %v3204
  %v3206 = vrot.slane %v33, %v3205
  %v3211 = vunpack.c.l.b16 %v3197
  %v3212 = vunpack.c.l.b16 %v3198
  %v3213 = vunpack.c.l.b16 %v3199
  %v3214 = vunpack.c.l.b16 %v3200
  %v3215 = vpack.c.b16 %v3212, %v3211
  %v3216 = vpack.c.b16 %v3214, %v3213
  %v3220 = vsel %vm50, %v3201, 0
  %v3223 = vsel %vm50, %v3202, 0
  %3225 = vmatprep.subr.bf16.mxu0 0
  %3226 = vmatpush1.bf16.msra.mxu0 0
  %3227 = vmatprep.subr.bf16.mxu0 0
  %3228 = vmatpush1.bf16.msra.mxu0 0
  %3229 = vmatprep.subr.bf16.mxu0 0
  %3230 = vmatpush1.bf16.msra.mxu0 0
  %3231 = vmatprep.subr.bf16.mxu0 0
  %3232 = vmatpush1.bf16.msra.mxu0 0
  %3233 = vmatprep.subr.bf16.mxu0 0
  %3234 = vmatpush1.bf16.msra.mxu0 0
  %3235 = vmatprep.subr.bf16.mxu0 0
  %3236 = vmatpush1.bf16.msra.mxu0 0
  %3237 = vmatprep.subr.bf16.mxu0 0
  %3238 = vmatpush1.bf16.msra.mxu0 %v3216
  %3239 = vmatprep.subr.bf16.mxu0 0
  %3240 = vmatpush1.bf16.msra.mxu0 %v3215
  %3241 = vmatprep.subr.bf16.mxu0 0
  %3242 = vmatpush2.bf16.msra.mxu0 0
  %3243 = vmatprep.subr.bf16.mxu0 0
  %3244 = vmatpush2.bf16.msra.mxu0 0
  %3245 = vmatprep.subr.bf16.mxu0 0
  %3246 = vmatpush2.bf16.msra.mxu0 0
  %3247 = vmatprep.subr.bf16.mxu0 0
  %3248 = vmatpush2.bf16.msra.mxu0 0
  %3249 = vmatprep.subr.bf16.mxu0 0
  %3250 = vmatpush2.bf16.msra.mxu0 0
  %3251 = vmatprep.subr.bf16.mxu0 0
  %3252 = vmatpush2.bf16.msra.mxu0 0
  %3253 = vmatprep.subr.bf16.mxu0 0
  %3254 = vmatpush2.bf16.msra.mxu0 0
  %3255 = vmatprep.subr.bf16.mxu0 0
  %3256 = vmatpush2.bf16.msra.mxu0 0
  %3257 = vmatprep.mubr.bf16.mxu0 0
  %3258 = vmatmul.mubr.bf16.gmra.mxu0 %v3220
  %v3259 = vpop.f32.mrf.mxu0
  %v3260 = vadd.f32 %v3206, %v3259
  %v3261 = vpop.f32.mrf.mxu0
  %v3262 = vpop.f32.mrf.mxu0
  %v3263 = vadd.f32 %v3206, %v3262
  %v3264 = vpop.f32.mrf.mxu0
  %3265 = vmatprep.mubr.bf16.mxu0 0
  %3266 = vmatmul.mubr.bf16.gmra.mxu0 %v3223
  %v3267 = vpop.f32.mrf.mxu0
  %v3268 = vadd.f32 %v3206, %v3267
  %v3269 = vpop.f32.mrf.mxu0
  %v3270 = vpop.f32.mrf.mxu0
  %v3271 = vadd.f32 %v3206, %v3270
  %v3272 = vpop.f32.mrf.mxu0
  %3273 = vdwg.mxu0
  %v3274 = vtanh.pop %v3260
  %v3275 = vtanh.pop %v3263
  %v3276 = vtanh.pop %v3268
  %v3277 = vtanh.pop %v3271
  %3278 = vst.msk [vmem:[%s8] sm:$0xff] %vm50, %v3274
  %3279 = vst.msk [vmem:[%s8 + $0x8] sm:$0xff] %vm50, %v3275
  %3280 = vst.msk [vmem:[%s8 + $0x10] sm:$0xff] %vm50, %v3276
  %3281 = vst.msk [vmem:[%s8 + $0x18] sm:$0xff] %vm50, %v3277
  // Predicated region
  $region30: #{coordi_summarizer_forward.1} parent=0 // pred_check
    _
  $region31: #{coordi_summarizer_forward.1} parent=0 // pred_check_branch
    %3283 = sbr.rel (0) target = $region33
  $region32: #{coordi_summarizer_forward.1} parent=0 // pred_region
    _
  $region33: #{coordi_summarizer_forward.1} parent=0 // pred_fallthru
    _
  // Predicated region
  $region34: #{coordi_summarizer_forward.1} parent=0 // pred_check
    _
  $region35: #{coordi_summarizer_forward.1} parent=0 // pred_check_branch
    %3285 = sbr.rel (0) target = $region37
  $region36: #{coordi_summarizer_forward.1} parent=0 // pred_region
    _
  $region37: #{coordi_summarizer_forward.1} parent=0 // pred_fallthru
    _
  // Predicated region
  $region38: #{coordi_summarizer_forward.1} parent=0 // pred_check
    _
  $region39: #{coordi_summarizer_forward.1} parent=0 // pred_check_branch
    %3287 = sbr.rel (0) target = $region41
  $region40: #{coordi_summarizer_forward.1} parent=0 // pred_region
    _
  $region41: #{coordi_summarizer_forward.1} parent=0 // pred_fallthru
    _
  // Predicated region
  $region42: #{coordi_summarizer_forward.1} parent=0 // pred_check
    _
  $region43: #{coordi_summarizer_forward.1} parent=0 // pred_check_branch
    %3289 = sbr.rel (0) target = $region45
  $region44: #{coordi_summarizer_forward.1} parent=0 // pred_region
    _
  $region45: #{coordi_summarizer_forward.1} parent=0 // pred_fallthru
    _

</llo_original>
